<compile_context>
chip_gen: v7x
topology: tpu7x:2x2x1
jax: 0.10.0
libtpu: 0.0.40
codegen_flags: <defaults>
</compile_context>

<pallas_src>
import functools
import math

import jax
import jax.numpy as jnp
from jax.experimental import pallas as pl
from jax.experimental.pallas import tpu as pltpu

_SQRT_HALF = 1.0 / math.sqrt(2.0)
_BN_EPS = 1e-5
_LN_EPS = 1e-5
_COS_EPS = 1e-8


def _gelu(x):
    # exact GELU (matches torch.nn.GELU default, erf-based)
    return 0.5 * x * (1.0 + jax.lax.erf(x * _SQRT_HALF))


def _layer_norm_f32(x, g, b, eps):
    mu = jnp.mean(x, axis=-1, keepdims=True)
    var = jnp.mean(jnp.square(x - mu), axis=-1, keepdims=True)
    return (x - mu) * jax.lax.rsqrt(var + eps) * g + b


def _bf16_dot(a, b):
    # MXU matmul with bf16 inputs, f32 accumulation.
    return jnp.dot(a.astype(jnp.bfloat16), b.astype(jnp.bfloat16),
                   preferred_element_type=jnp.float32)


# --------------------------- single fused kernel ---------------------------- #

def _lcter_kernel(*refs, B, T, D, heads, num_blocks, num_mlp,
                  has_det, has_mask, ln_eps, bn_scale):
    L = T - 1
    dh = D // heads

    it = iter(refs)
    seq_ref = next(it)                               # (B*L, D) f32
    pe_ref = next(it)                                # (L, D)   f32
    se_ref = next(it)                                # (1, D)   f32  ([SEQ] emb)
    mask_ref = next(it) if has_mask else None        # (B*T, 1) f32
    if has_det:
        det_ref, fcw_ref, fcb_ref = next(it), next(it), next(it)
        mlp_refs = [(next(it), next(it)) for _ in range(num_mlp)]
    blk_refs = [tuple(next(it) for _ in range(12)) for _ in range(num_blocks)]
    pw1_ref, pb1_ref, pw2_ref, pb2_ref = next(it), next(it), next(it), next(it)
    score_ref = next(it)
    sim_ref = next(it) if has_det else None

    # ---- [SEQ] token + (seq + PE); batch folded onto the sublane/M axis ----
    pe = pe_ref[...]
    se = se_ref[...]
    seq = seq_ref[...]
    parts = []
    for b in range(B):
        parts.append(se)                             # row b*T
        parts.append(seq[b * L:(b + 1) * L, :] + pe)  # rows b*T+1 .. b*T+L
    x = jnp.concatenate(parts, axis=0)               # (B*T, D) f32
    mask = mask_ref[...] if has_mask else None

    # ---- transformer blocks (post-LN), fully unrolled, batch-folded matmuls --
    for (wqkv_r, bqkv_r, wo_r, bo_r, ln1g_r, ln1b_r,
         ffw1_r, ffb1_r, ffw2_r, ffb2_r, ln2g_r, ln2b_r) in blk_refs:
        if mask is not None:
            x = x * mask                             # reference: x *= mask per layer

        # Fused QKV projection; 1/sqrt(dh) already folded into the Q columns.
        qkv = _bf16_dot(x, wqkv_r[...]) + bqkv_r[...]        # (B*T, 3D) f32

        # All (b, h) score tiles -> one stacked softmax over (B*H*T, T).
        sc = []
        for b in range(B):
            r0 = b * T
            for h in range(heads):
                qh = qkv[r0:r0 + T, h * dh:(h + 1) * dh].astype(jnp.bfloat16)
                kh = qkv[r0:r0 + T, D + h * dh:D + (h + 1) * dh].astype(jnp.bfloat16)
                sc.append(jax.lax.dot_general(
                    qh, kh, (((1,), (1,)), ((), ())),
                    preferred_element_type=jnp.float32))     # (T, T)
        s = jnp.concatenate(sc, axis=0)                      # (B*H*T, T) f32
        m = jnp.max(s, axis=-1, keepdims=True)
        p = jnp.exp(s - m)
        denom = jnp.sum(p, axis=-1, keepdims=True)
        p = p * pl.reciprocal(denom, approx=True)            # EUP divide

        # Per-head accumulation straight into the output projection
        # ((T,dh)@(dh,D) -> full 128-lane N; no head lane-concat).
        wo = wo_r[...]                                       # (D, D) bf16
        rows = []
        for b in range(B):
            r0 = b * T
            acc = None
            for h in range(heads):
                idx = b * heads + h
                p_bh = p[idx * T:(idx + 1) * T, :].astype(jnp.bfloat16)
                vh = qkv[r0:r0 + T, 2 * D + h * dh:2 * D + (h + 1) * dh]
                ctx = jnp.dot(p_bh, vh.astype(jnp.bfloat16),
                              preferred_element_type=jnp.float32)           # (T, dh)
                o_h = jnp.dot(ctx.astype(jnp.bfloat16), wo[h * dh:(h + 1) * dh, :],
                              preferred_element_type=jnp.float32)           # (T, D)
                acc = o_h if acc is None else acc + o_h
            rows.append(acc)
        a = jnp.concatenate(rows, axis=0) + bo_r[...]        # (B*T, D)

        h1 = _layer_norm_f32(x + a, ln1g_r[...], ln1b_r[...], ln_eps)
        ff = _gelu(_bf16_dot(h1, ffw1_r[...]) + ffb1_r[...])
        ff = _bf16_dot(ff, ffw2_r[...]) + ffb2_r[...]
        x = _layer_norm_f32(h1 + ff, ln2g_r[...], ln2b_r[...], ln_eps)

    # ---- x0 = x[:, 0, :] in the flattened layout ----
    x0 = jnp.concatenate([x[b * T:b * T + 1, :] for b in range(B)], axis=0)  # (B, D)

    # ---- detection MLP encoder + cosine similarity (stays in VMEM) ----
    if has_det:
        h = _gelu(_bf16_dot(det_ref[...], fcw_ref[...]) + fcb_ref[...])
        for w_r, b_r in mlp_refs:                            # Dropout = identity (eval)
            h = _gelu(_bf16_dot(h, w_r[...]) + b_r[...])
        det_emb = h                                          # (B, D)
        dot_xy = jnp.sum(x0 * det_emb, axis=-1, keepdims=True)
        nx = jnp.maximum(jnp.sqrt(jnp.sum(x0 * x0, axis=-1, keepdims=True)), _COS_EPS)
        ny = jnp.maximum(jnp.sqrt(jnp.sum(det_emb * det_emb, axis=-1, keepdims=True)),
                         _COS_EPS)
        cos = dot_xy / (nx * ny)                             # per-norm eps clamp
        sim_ref[...] = jnp.mean(cos, axis=0, keepdims=True)

    # ---- ProjLayer (+ eval BatchNorm scale) + GELU + sigmoid ----
    hp = (_bf16_dot(x0, pw1_ref[...]) + pb1_ref[...]) * bn_scale
    hp = _gelu(hp)                                           # Dropout = identity (eval)
    # (B,128)@(128,1) would waste the MXU -> VPU lane reduction instead.
    sco = (jnp.sum(hp * pw2_ref[...], axis=-1, keepdims=True) + pb2_ref[...]) * bn_scale
    score_ref[...] = jax.nn.sigmoid(sco).astype(score_ref.dtype)


# ------------------------------ wrapper ------------------------------------- #

def _full_spec(shape):
    zeros = (0,) * len(shape)
    return pl.BlockSpec(shape, lambda i: zeros)


def lcter_forward(pp, cfg, seq, detections=None, mask=None):
    """seq: (B, L, D) f32; detections: (B, LLM_size) f32 or None; mask: (B, L) or None."""
    B, L, D = seq.shape
    T = L + 1
    heads = cfg["heads"]
    has_det = detections is not None
    has_mask = mask is not None
    num_blocks = len(pp["blocks"])
    num_mlp = len(pp["mlp"])

    args = [seq.reshape(B * L, D), pp["pe"][:L], pp["seq_emb"]]
    if has_mask:
        m = jnp.concatenate([jnp.ones((B, 1), jnp.float32),
                             jnp.asarray(mask, jnp.float32)], axis=1)   # (B, T)
        args.append(m.reshape(B * T, 1))
    if has_det:
        args += [detections, pp["fc_w"], pp["fc_b"]]
        for w, b in pp["mlp"]:
            args += [w, b]
    for blk in pp["blocks"]:
        args += [blk["wqkv"], blk["bqkv"], blk["wo"], blk["bo"],
                 blk["ln1_g"], blk["ln1_b"], blk["ff_w1"], blk["ff_b1"],
                 blk["ff_w2"], blk["ff_b2"], blk["ln2_g"], blk["ln2_b"]]
    args += [pp["proj_w1"], pp["proj_b1"], pp["proj_w2"], pp["proj_b2"]]

    in_specs = [_full_spec(a.shape) for a in args]

    if has_det:
        out_shape = (jax.ShapeDtypeStruct((B, 1), jnp.float32),
                     jax.ShapeDtypeStruct((1, 1), jnp.float32))
        out_specs = (_full_spec((B, 1)), _full_spec((1, 1)))
    else:
        out_shape = jax.ShapeDtypeStruct((B, 1), jnp.float32)
        out_specs = _full_spec((B, 1))

    kernel = functools.partial(
        _lcter_kernel, B=B, T=T, D=D, heads=heads, num_blocks=num_blocks,
        num_mlp=num_mlp, has_det=has_det, has_mask=has_mask,
        ln_eps=_LN_EPS, bn_scale=1.0 / math.sqrt(1.0 + _BN_EPS))

    res = pl.pallas_call(
        kernel,
        out_shape=out_shape,
        grid=(1,),
        in_specs=in_specs,
        out_specs=out_specs,
        compiler_params=pltpu.CompilerParams(
            dimension_semantics=("arbitrary",)),
    )(*args)

    if has_det:
        score, sim = res
        return score, sim[0, 0]
    return res, None


# ------------------------------ params -------------------------------------- #

def xavier_normal(key, fan_in, fan_out, shape=None):
    std = math.sqrt(2.0 / (fan_in + fan_out))
    if shape is None:
        shape = (fan_in, fan_out)
    return std * jax.random.normal(key, shape, jnp.float32)


def sinusoidal_position_embedding(max_len, d):
    pos = jnp.arange(max_len, dtype=jnp.float32)[:, None]
    i = jnp.arange(0, d, 2, dtype=jnp.float32)[None, :]
    angle = pos / jnp.power(10000.0, i / d)
    pe = jnp.zeros((max_len, d), jnp.float32)
    pe = pe.at[:, 0::2].set(jnp.sin(angle))
    pe = pe.at[:, 1::2].set(jnp.cos(angle))
    return pe


def init_params(key, cfg):
    d = 2 * cfg["hidden_units"]
    keys = iter(jax.random.split(key, 64))
    p = {}
    # MLP_Layers (detection encoder): fc + GELU, then dnn_layer x (Linear+GELU)
    p["fc_w"] = xavier_normal(next(keys), cfg["LLM_size"], d)
    p["fc_b"] = jnp.zeros((d,), jnp.float32)
    p["mlp"] = []
    layers = [d] * (cfg["dnn_layer"] + 1)
    for in_s, out_s in zip(layers[:-1], layers[1:]):
        p["mlp"].append((xavier_normal(next(keys), in_s, out_s),
                         jnp.zeros((out_s,), jnp.float32)))
    # [SEQ] token embedding (nn.Embedding(1, d), xavier_normal)
    p["seq_emb"] = xavier_normal(next(keys), d, 1, shape=(1, d))
    # Transformer blocks (fused QKV weight)
    p["blocks"] = []
    for _ in range(cfg.get("block_num", 1)):
        blk = {}
        blk["wqkv"] = jnp.concatenate(
            [xavier_normal(next(keys), d, d) for _ in range(3)], axis=1)
        blk["bqkv"] = jnp.zeros((3 * d,), jnp.float32)
        blk["wo"] = xavier_normal(next(keys), d, d)
        blk["bo"] = jnp.zeros((d,), jnp.float32)
        blk["ff_w1"] = xavier_normal(next(keys), d, cfg["ffd_hidden"])
        blk["ff_b1"] = jnp.zeros((cfg["ffd_hidden"],), jnp.float32)
        blk["ff_w2"] = xavier_normal(next(keys), cfg["ffd_hidden"], d)
        blk["ff_b2"] = jnp.zeros((d,), jnp.float32)
        blk["ln1_g"] = jnp.ones((d,), jnp.float32)
        blk["ln1_b"] = jnp.zeros((d,), jnp.float32)
        blk["ln2_g"] = jnp.ones((d,), jnp.float32)
        blk["ln2_b"] = jnp.zeros((d,), jnp.float32)
        p["blocks"].append(blk)
    # ProjLayer
    p["proj_w1"] = xavier_normal(next(keys), d, 128)
    p["proj_b1"] = jnp.zeros((128,), jnp.float32)
    p["proj_w2"] = xavier_normal(next(keys), 128, 1)
    p["proj_b2"] = jnp.zeros((1,), jnp.float32)
    return p


def prepare_params(p, cfg):
    """One-time layout prep: bf16 weight casts, (1,N) biases, PE table, and the
    1/sqrt(dh) attention scale folded into the Q columns of wqkv/bqkv."""
    d = 2 * cfg["hidden_units"]
    dh = d // cfg["heads"]
    q_scale = 1.0 / math.sqrt(dh)

    pp = {}
    pp["pe"] = sinusoidal_position_embedding(cfg.get("max_len", 50), d)
    pp["seq_emb"] = p["seq_emb"].astype(jnp.float32)                    # (1, d)
    pp["fc_w"] = p["fc_w"].astype(jnp.bfloat16)
    pp["fc_b"] = p["fc_b"].reshape(1, -1)
    pp["mlp"] = [(w.astype(jnp.bfloat16), b.reshape(1, -1)) for w, b in p["mlp"]]
    pp["blocks"] = []
    for blk in p["blocks"]:
        wqkv = jnp.concatenate([blk["wqkv"][:, :d] * q_scale, blk["wqkv"][:, d:]],
                               axis=1)
        bqkv = jnp.concatenate([blk["bqkv"][:d] * q_scale, blk["bqkv"][d:]])
        pp["blocks"].append(dict(
            wqkv=wqkv.astype(jnp.bfloat16), bqkv=bqkv.reshape(1, -1),
            wo=blk["wo"].astype(jnp.bfloat16), bo=blk["bo"].reshape(1, -1),
            ln1_g=blk["ln1_g"].reshape(1, -1), ln1_b=blk["ln1_b"].reshape(1, -1),
            ff_w1=blk["ff_w1"].astype(jnp.bfloat16), ff_b1=blk["ff_b1"].reshape(1, -1),
            ff_w2=blk["ff_w2"].astype(jnp.bfloat16), ff_b2=blk["ff_b2"].reshape(1, -1),
            ln2_g=blk["ln2_g"].reshape(1, -1), ln2_b=blk["ln2_b"].reshape(1, -1)))
    pp["proj_w1"] = p["proj_w1"].astype(jnp.bfloat16)
    pp["proj_b1"] = p["proj_b1"].reshape(1, -1)
    pp["proj_w2"] = p["proj_w2"].reshape(1, -1)        # (1, 128) f32 (lane reduce)
    pp["proj_b2"] = p["proj_b2"].reshape(1, 1)
    return pp


if __name__ == "__main__":
    config = dict(LLM_size=256, hidden_units=64, dnn_layer=2, dropout_rate=0.1,
                  heads=4, ffd_hidden=256, block_num=1, max_len=50)
    key = jax.random.PRNGKey(0)
    k_param, k_seq, k_det = jax.random.split(key, 3)

    params = init_params(k_param, config)
    prepped = prepare_params(params, config)

    D = 2 * config["hidden_units"]
    seq = jax.random.normal(k_seq, (2, 8, D), jnp.float32)
    detections = jax.random.normal(k_det, (2, config["LLM_size"]), jnp.float32)

    score, similarity = lcter_forward(prepped, config, seq, detections, mask=None)
    jax.block_until_ready((score, similarity))
    assert score.shape == (2, 1)
    assert similarity.shape == ()
    print("KERNEL_OK")
</pallas_src>

<mosaic_0001>
module attributes {stable_mosaic.version = 11 : i64} {
  func.func @_lcter_kernel(%arg0: i32, %arg1: memref<16x128xf32, #tpu.memory_space<vmem>>, %arg2: memref<8x128xf32, #tpu.memory_space<vmem>>, %arg3: memref<1x128xf32, #tpu.memory_space<vmem>>, %arg4: memref<2x256xf32, #tpu.memory_space<vmem>>, %arg5: memref<256x128xbf16, #tpu.memory_space<vmem>>, %arg6: memref<1x128xf32, #tpu.memory_space<vmem>>, %arg7: memref<128x128xbf16, #tpu.memory_space<vmem>>, %arg8: memref<1x128xf32, #tpu.memory_space<vmem>>, %arg9: memref<128x128xbf16, #tpu.memory_space<vmem>>, %arg10: memref<1x128xf32, #tpu.memory_space<vmem>>, %arg11: memref<128x384xbf16, #tpu.memory_space<vmem>>, %arg12: memref<1x384xf32, #tpu.memory_space<vmem>>, %arg13: memref<128x128xbf16, #tpu.memory_space<vmem>>, %arg14: memref<1x128xf32, #tpu.memory_space<vmem>>, %arg15: memref<1x128xf32, #tpu.memory_space<vmem>>, %arg16: memref<1x128xf32, #tpu.memory_space<vmem>>, %arg17: memref<128x256xbf16, #tpu.memory_space<vmem>>, %arg18: memref<1x256xf32, #tpu.memory_space<vmem>>, %arg19: memref<256x128xbf16, #tpu.memory_space<vmem>>, %arg20: memref<1x128xf32, #tpu.memory_space<vmem>>, %arg21: memref<1x128xf32, #tpu.memory_space<vmem>>, %arg22: memref<1x128xf32, #tpu.memory_space<vmem>>, %arg23: memref<128x128xbf16, #tpu.memory_space<vmem>>, %arg24: memref<1x128xf32, #tpu.memory_space<vmem>>, %arg25: memref<1x128xf32, #tpu.memory_space<vmem>>, %arg26: memref<1x1xf32, #tpu.memory_space<vmem>>, %arg27: memref<2x1xf32, #tpu.memory_space<vmem>>, %arg28: memref<1x1xf32, #tpu.memory_space<vmem>>) attributes {dimension_semantics = [#tpu.dimension_semantics<arbitrary>], iteration_bounds = array<i64: 1>, scalar_prefetch = 0 : i64, scratch_operands = 0 : i64, tpu.core_type = #tpu.core_type<tc>, window_params = [{pipeline_mode = #tpu.pipeline_mode<synchronous>, transform_indices = @transform_0, window_bounds = array<i64: 16, 128>}, {pipeline_mode = #tpu.pipeline_mode<synchronous>, transform_indices = @transform_1, window_bounds = array<i64: 8, 128>}, {pipeline_mode = #tpu.pipeline_mode<synchronous>, transform_indices = @transform_2, window_bounds = array<i64: 1, 128>}, {pipeline_mode = #tpu.pipeline_mode<synchronous>, transform_indices = @transform_3, window_bounds = array<i64: 2, 256>}, {pipeline_mode = #tpu.pipeline_mode<synchronous>, transform_indices = @transform_4, window_bounds = array<i64: 256, 128>}, {pipeline_mode = #tpu.pipeline_mode<synchronous>, transform_indices = @transform_5, window_bounds = array<i64: 1, 128>}, {pipeline_mode = #tpu.pipeline_mode<synchronous>, transform_indices = @transform_6, window_bounds = array<i64: 128, 128>}, {pipeline_mode = #tpu.pipeline_mode<synchronous>, transform_indices = @transform_7, window_bounds = array<i64: 1, 128>}, {pipeline_mode = #tpu.pipeline_mode<synchronous>, transform_indices = @transform_8, window_bounds = array<i64: 128, 128>}, {pipeline_mode = #tpu.pipeline_mode<synchronous>, transform_indices = @transform_9, window_bounds = array<i64: 1, 128>}, {pipeline_mode = #tpu.pipeline_mode<synchronous>, transform_indices = @transform_10, window_bounds = array<i64: 128, 384>}, {pipeline_mode = #tpu.pipeline_mode<synchronous>, transform_indices = @transform_11, window_bounds = array<i64: 1, 384>}, {pipeline_mode = #tpu.pipeline_mode<synchronous>, transform_indices = @transform_12, window_bounds = array<i64: 128, 128>}, {pipeline_mode = #tpu.pipeline_mode<synchronous>, transform_indices = @transform_13, window_bounds = array<i64: 1, 128>}, {pipeline_mode = #tpu.pipeline_mode<synchronous>, transform_indices = @transform_14, window_bounds = array<i64: 1, 128>}, {pipeline_mode = #tpu.pipeline_mode<synchronous>, transform_indices = @transform_15, window_bounds = array<i64: 1, 128>}, {pipeline_mode = #tpu.pipeline_mode<synchronous>, transform_indices = @transform_16, window_bounds = array<i64: 128, 256>}, {pipeline_mode = #tpu.pipeline_mode<synchronous>, transform_indices = @transform_17, window_bounds = array<i64: 1, 256>}, {pipeline_mode = #tpu.pipeline_mode<synchronous>, transform_indices = @transform_18, window_bounds = array<i64: 256, 128>}, {pipeline_mode = #tpu.pipeline_mode<synchronous>, transform_indices = @transform_19, window_bounds = array<i64: 1, 128>}, {pipeline_mode = #tpu.pipeline_mode<synchronous>, transform_indices = @transform_20, window_bounds = array<i64: 1, 128>}, {pipeline_mode = #tpu.pipeline_mode<synchronous>, transform_indices = @transform_21, window_bounds = array<i64: 1, 128>}, {pipeline_mode = #tpu.pipeline_mode<synchronous>, transform_indices = @transform_22, window_bounds = array<i64: 128, 128>}, {pipeline_mode = #tpu.pipeline_mode<synchronous>, transform_indices = @transform_23, window_bounds = array<i64: 1, 128>}, {pipeline_mode = #tpu.pipeline_mode<synchronous>, transform_indices = @transform_24, window_bounds = array<i64: 1, 128>}, {pipeline_mode = #tpu.pipeline_mode<synchronous>, transform_indices = @transform_25, window_bounds = array<i64: 1, 1>}, {pipeline_mode = #tpu.pipeline_mode<synchronous>, transform_indices = @transform_26, window_bounds = array<i64: 2, 1>}, {pipeline_mode = #tpu.pipeline_mode<synchronous>, transform_indices = @transform_27, window_bounds = array<i64: 1, 1>}]} {
    %c0 = arith.constant 0 : index
    %c0_0 = arith.constant 0 : index
    %0 = vector.load %arg2[%c0, %c0_0] : memref<8x128xf32, #tpu.memory_space<vmem>>, vector<8x128xf32>
    %c0_1 = arith.constant 0 : index
    %c0_2 = arith.constant 0 : index
    %1 = vector.load %arg3[%c0_1, %c0_2] : memref<1x128xf32, #tpu.memory_space<vmem>>, vector<1x128xf32>
    %c0_3 = arith.constant 0 : index
    %c0_4 = arith.constant 0 : index
    %2 = vector.load %arg1[%c0_3, %c0_4] : memref<16x128xf32, #tpu.memory_space<vmem>>, vector<16x128xf32>
    %3 = vector.extract_strided_slice %2 {offsets = [0, 0], sizes = [8, 128], strides = [1, 1]} : vector<16x128xf32> to vector<8x128xf32>
    %4 = arith.addf %3, %0 : vector<8x128xf32>
    %5 = vector.extract_strided_slice %2 {offsets = [8, 0], sizes = [8, 128], strides = [1, 1]} : vector<16x128xf32> to vector<8x128xf32>
    %6 = arith.addf %5, %0 : vector<8x128xf32>
    %7 = tpu.concatenate %1, %4, %1, %6 in 0 : vector<1x128xf32>, vector<8x128xf32>, vector<1x128xf32>, vector<8x128xf32> -> vector<18x128xf32>
    %c0_5 = arith.constant 0 : index
    %c0_6 = arith.constant 0 : index
    %8 = vector.load %arg11[%c0_5, %c0_6] : memref<128x384xbf16, #tpu.memory_space<vmem>>, vector<128x384xbf16>
    %9 = arith.truncf %7 : vector<18x128xf32> to vector<18x128xbf16>
    %cst = arith.constant dense<0.000000e+00> : vector<18x384xf32>
    %10 = tpu.matmul %9, %8, %cst {dimension_numbers = #tpu.dot_dimension_numbers<[1], [0], [0], [1], [0, 0, 1, 1], [], []>} : vector<18x128xbf16>, vector<128x384xbf16>, vector<18x384xf32> -> vector<18x384xf32>
    %c0_7 = arith.constant 0 : index
    %c0_8 = arith.constant 0 : index
    %11 = vector.load %arg12[%c0_7, %c0_8] : memref<1x384xf32, #tpu.memory_space<vmem>>, vector<1x384xf32>
    %12 = vector.broadcast %11 : vector<1x384xf32> to vector<18x384xf32>
    %13 = arith.addf %10, %12 : vector<18x384xf32>
    %14 = vector.extract_strided_slice %13 {offsets = [0, 0], sizes = [9, 32], strides = [1, 1]} : vector<18x384xf32> to vector<9x32xf32>
    %15 = arith.truncf %14 : vector<9x32xf32> to vector<9x32xbf16>
    %16 = vector.extract_strided_slice %13 {offsets = [0, 128], sizes = [9, 32], strides = [1, 1]} : vector<18x384xf32> to vector<9x32xf32>
    %17 = arith.truncf %16 : vector<9x32xf32> to vector<9x32xbf16>
    %cst_9 = arith.constant dense<0.000000e+00> : vector<9x9xf32>
    %18 = tpu.matmul %15, %17, %cst_9 {dimension_numbers = #tpu.dot_dimension_numbers<[1], [1], [0], [0], [0, 0, 1, 0], [], []>} : vector<9x32xbf16>, vector<9x32xbf16>, vector<9x9xf32> -> vector<9x9xf32>
    %19 = vector.extract_strided_slice %13 {offsets = [0, 32], sizes = [9, 32], strides = [1, 1]} : vector<18x384xf32> to vector<9x32xf32>
    %20 = arith.truncf %19 : vector<9x32xf32> to vector<9x32xbf16>
    %21 = vector.extract_strided_slice %13 {offsets = [0, 160], sizes = [9, 32], strides = [1, 1]} : vector<18x384xf32> to vector<9x32xf32>
    %22 = arith.truncf %21 : vector<9x32xf32> to vector<9x32xbf16>
    %cst_10 = arith.constant dense<0.000000e+00> : vector<9x9xf32>
    %23 = tpu.matmul %20, %22, %cst_10 {dimension_numbers = #tpu.dot_dimension_numbers<[1], [1], [0], [0], [0, 0, 1, 0], [], []>} : vector<9x32xbf16>, vector<9x32xbf16>, vector<9x9xf32> -> vector<9x9xf32>
    %24 = vector.extract_strided_slice %13 {offsets = [0, 64], sizes = [9, 32], strides = [1, 1]} : vector<18x384xf32> to vector<9x32xf32>
    %25 = arith.truncf %24 : vector<9x32xf32> to vector<9x32xbf16>
    %26 = vector.extract_strided_slice %13 {offsets = [0, 192], sizes = [9, 32], strides = [1, 1]} : vector<18x384xf32> to vector<9x32xf32>
    %27 = arith.truncf %26 : vector<9x32xf32> to vector<9x32xbf16>
    %cst_11 = arith.constant dense<0.000000e+00> : vector<9x9xf32>
    %28 = tpu.matmul %25, %27, %cst_11 {dimension_numbers = #tpu.dot_dimension_numbers<[1], [1], [0], [0], [0, 0, 1, 0], [], []>} : vector<9x32xbf16>, vector<9x32xbf16>, vector<9x9xf32> -> vector<9x9xf32>
    %29 = vector.extract_strided_slice %13 {offsets = [0, 96], sizes = [9, 32], strides = [1, 1]} : vector<18x384xf32> to vector<9x32xf32>
    %30 = arith.truncf %29 : vector<9x32xf32> to vector<9x32xbf16>
    %31 = vector.extract_strided_slice %13 {offsets = [0, 224], sizes = [9, 32], strides = [1, 1]} : vector<18x384xf32> to vector<9x32xf32>
    %32 = arith.truncf %31 : vector<9x32xf32> to vector<9x32xbf16>
    %cst_12 = arith.constant dense<0.000000e+00> : vector<9x9xf32>
    %33 = tpu.matmul %30, %32, %cst_12 {dimension_numbers = #tpu.dot_dimension_numbers<[1], [1], [0], [0], [0, 0, 1, 0], [], []>} : vector<9x32xbf16>, vector<9x32xbf16>, vector<9x9xf32> -> vector<9x9xf32>
    %34 = vector.extract_strided_slice %13 {offsets = [9, 0], sizes = [9, 32], strides = [1, 1]} : vector<18x384xf32> to vector<9x32xf32>
    %35 = arith.truncf %34 : vector<9x32xf32> to vector<9x32xbf16>
    %36 = vector.extract_strided_slice %13 {offsets = [9, 128], sizes = [9, 32], strides = [1, 1]} : vector<18x384xf32> to vector<9x32xf32>
    %37 = arith.truncf %36 : vector<9x32xf32> to vector<9x32xbf16>
    %cst_13 = arith.constant dense<0.000000e+00> : vector<9x9xf32>
    %38 = tpu.matmul %35, %37, %cst_13 {dimension_numbers = #tpu.dot_dimension_numbers<[1], [1], [0], [0], [0, 0, 1, 0], [], []>} : vector<9x32xbf16>, vector<9x32xbf16>, vector<9x9xf32> -> vector<9x9xf32>
    %39 = vector.extract_strided_slice %13 {offsets = [9, 32], sizes = [9, 32], strides = [1, 1]} : vector<18x384xf32> to vector<9x32xf32>
    %40 = arith.truncf %39 : vector<9x32xf32> to vector<9x32xbf16>
    %41 = vector.extract_strided_slice %13 {offsets = [9, 160], sizes = [9, 32], strides = [1, 1]} : vector<18x384xf32> to vector<9x32xf32>
    %42 = arith.truncf %41 : vector<9x32xf32> to vector<9x32xbf16>
    %cst_14 = arith.constant dense<0.000000e+00> : vector<9x9xf32>
    %43 = tpu.matmul %40, %42, %cst_14 {dimension_numbers = #tpu.dot_dimension_numbers<[1], [1], [0], [0], [0, 0, 1, 0], [], []>} : vector<9x32xbf16>, vector<9x32xbf16>, vector<9x9xf32> -> vector<9x9xf32>
    %44 = vector.extract_strided_slice %13 {offsets = [9, 64], sizes = [9, 32], strides = [1, 1]} : vector<18x384xf32> to vector<9x32xf32>
    %45 = arith.truncf %44 : vector<9x32xf32> to vector<9x32xbf16>
    %46 = vector.extract_strided_slice %13 {offsets = [9, 192], sizes = [9, 32], strides = [1, 1]} : vector<18x384xf32> to vector<9x32xf32>
    %47 = arith.truncf %46 : vector<9x32xf32> to vector<9x32xbf16>
    %cst_15 = arith.constant dense<0.000000e+00> : vector<9x9xf32>
    %48 = tpu.matmul %45, %47, %cst_15 {dimension_numbers = #tpu.dot_dimension_numbers<[1], [1], [0], [0], [0, 0, 1, 0], [], []>} : vector<9x32xbf16>, vector<9x32xbf16>, vector<9x9xf32> -> vector<9x9xf32>
    %49 = vector.extract_strided_slice %13 {offsets = [9, 96], sizes = [9, 32], strides = [1, 1]} : vector<18x384xf32> to vector<9x32xf32>
    %50 = arith.truncf %49 : vector<9x32xf32> to vector<9x32xbf16>
    %51 = vector.extract_strided_slice %13 {offsets = [9, 224], sizes = [9, 32], strides = [1, 1]} : vector<18x384xf32> to vector<9x32xf32>
    %52 = arith.truncf %51 : vector<9x32xf32> to vector<9x32xbf16>
    %cst_16 = arith.constant dense<0.000000e+00> : vector<9x9xf32>
    %53 = tpu.matmul %50, %52, %cst_16 {dimension_numbers = #tpu.dot_dimension_numbers<[1], [1], [0], [0], [0, 0, 1, 0], [], []>} : vector<9x32xbf16>, vector<9x32xbf16>, vector<9x9xf32> -> vector<9x9xf32>
    %54 = tpu.concatenate %18, %23, %28, %33, %38, %43, %48, %53 in 0 : vector<9x9xf32>, vector<9x9xf32>, vector<9x9xf32>, vector<9x9xf32>, vector<9x9xf32>, vector<9x9xf32>, vector<9x9xf32>, vector<9x9xf32> -> vector<72x9xf32>
    %cst_17 = arith.constant dense<0xFF800000> : vector<72xf32>
    %55 = vector.multi_reduction <maximumf>, %54, %cst_17 [1] : vector<72x9xf32> to vector<72xf32>
    %56 = vector.shape_cast %55 : vector<72xf32> to vector<72x1xf32>
    %57 = vector.broadcast %56 : vector<72x1xf32> to vector<72x9xf32>
    %58 = arith.subf %54, %57 : vector<72x9xf32>
    %59 = math.exp %58 : vector<72x9xf32>
    %cst_18 = arith.constant dense<0.000000e+00> : vector<72xf32>
    %60 = vector.multi_reduction <add>, %59, %cst_18 [1] : vector<72x9xf32> to vector<72xf32>
    %61 = vector.shape_cast %60 : vector<72xf32> to vector<72x1xf32>
    %62 = tpu.reciprocal %61 {approx = true} : vector<72x1xf32> -> vector<72x1xf32>
    %63 = vector.broadcast %62 : vector<72x1xf32> to vector<72x9xf32>
    %64 = arith.mulf %59, %63 : vector<72x9xf32>
    %c0_19 = arith.constant 0 : index
    %c0_20 = arith.constant 0 : index
    %65 = vector.load %arg13[%c0_19, %c0_20] : memref<128x128xbf16, #tpu.memory_space<vmem>>, vector<128x128xbf16>
    %66 = vector.extract_strided_slice %64 {offsets = [0, 0], sizes = [9, 9], strides = [1, 1]} : vector<72x9xf32> to vector<9x9xf32>
    %67 = arith.truncf %66 : vector<9x9xf32> to vector<9x9xbf16>
    %68 = vector.extract_strided_slice %13 {offsets = [0, 256], sizes = [9, 32], strides = [1, 1]} : vector<18x384xf32> to vector<9x32xf32>
    %69 = arith.truncf %68 : vector<9x32xf32> to vector<9x32xbf16>
    %cst_21 = arith.constant dense<0.000000e+00> : vector<9x32xf32>
    %70 = tpu.matmul %67, %69, %cst_21 {dimension_numbers = #tpu.dot_dimension_numbers<[1], [0], [0], [1], [0, 0, 1, 1], [], []>} : vector<9x9xbf16>, vector<9x32xbf16>, vector<9x32xf32> -> vector<9x32xf32>
    %71 = arith.truncf %70 : vector<9x32xf32> to vector<9x32xbf16>
    %72 = vector.extract_strided_slice %65 {offsets = [0, 0], sizes = [32, 128], strides = [1, 1]} : vector<128x128xbf16> to vector<32x128xbf16>
    %cst_22 = arith.constant dense<0.000000e+00> : vector<9x128xf32>
    %73 = tpu.matmul %71, %72, %cst_22 {dimension_numbers = #tpu.dot_dimension_numbers<[1], [0], [0], [1], [0, 0, 1, 1], [], []>} : vector<9x32xbf16>, vector<32x128xbf16>, vector<9x128xf32> -> vector<9x128xf32>
    %74 = vector.extract_strided_slice %64 {offsets = [9, 0], sizes = [9, 9], strides = [1, 1]} : vector<72x9xf32> to vector<9x9xf32>
    %75 = arith.truncf %74 : vector<9x9xf32> to vector<9x9xbf16>
    %76 = vector.extract_strided_slice %13 {offsets = [0, 288], sizes = [9, 32], strides = [1, 1]} : vector<18x384xf32> to vector<9x32xf32>
    %77 = arith.truncf %76 : vector<9x32xf32> to vector<9x32xbf16>
    %cst_23 = arith.constant dense<0.000000e+00> : vector<9x32xf32>
    %78 = tpu.matmul %75, %77, %cst_23 {dimension_numbers = #tpu.dot_dimension_numbers<[1], [0], [0], [1], [0, 0, 1, 1], [], []>} : vector<9x9xbf16>, vector<9x32xbf16>, vector<9x32xf32> -> vector<9x32xf32>
    %79 = arith.truncf %78 : vector<9x32xf32> to vector<9x32xbf16>
    %80 = vector.extract_strided_slice %65 {offsets = [32, 0], sizes = [32, 128], strides = [1, 1]} : vector<128x128xbf16> to vector<32x128xbf16>
    %cst_24 = arith.constant dense<0.000000e+00> : vector<9x128xf32>
    %81 = tpu.matmul %79, %80, %cst_24 {dimension_numbers = #tpu.dot_dimension_numbers<[1], [0], [0], [1], [0, 0, 1, 1], [], []>} : vector<9x32xbf16>, vector<32x128xbf16>, vector<9x128xf32> -> vector<9x128xf32>
    %82 = arith.addf %73, %81 : vector<9x128xf32>
    %83 = vector.extract_strided_slice %64 {offsets = [18, 0], sizes = [9, 9], strides = [1, 1]} : vector<72x9xf32> to vector<9x9xf32>
    %84 = arith.truncf %83 : vector<9x9xf32> to vector<9x9xbf16>
    %85 = vector.extract_strided_slice %13 {offsets = [0, 320], sizes = [9, 32], strides = [1, 1]} : vector<18x384xf32> to vector<9x32xf32>
    %86 = arith.truncf %85 : vector<9x32xf32> to vector<9x32xbf16>
    %cst_25 = arith.constant dense<0.000000e+00> : vector<9x32xf32>
    %87 = tpu.matmul %84, %86, %cst_25 {dimension_numbers = #tpu.dot_dimension_numbers<[1], [0], [0], [1], [0, 0, 1, 1], [], []>} : vector<9x9xbf16>, vector<9x32xbf16>, vector<9x32xf32> -> vector<9x32xf32>
    %88 = arith.truncf %87 : vector<9x32xf32> to vector<9x32xbf16>
    %89 = vector.extract_strided_slice %65 {offsets = [64, 0], sizes = [32, 128], strides = [1, 1]} : vector<128x128xbf16> to vector<32x128xbf16>
    %cst_26 = arith.constant dense<0.000000e+00> : vector<9x128xf32>
    %90 = tpu.matmul %88, %89, %cst_26 {dimension_numbers = #tpu.dot_dimension_numbers<[1], [0], [0], [1], [0, 0, 1, 1], [], []>} : vector<9x32xbf16>, vector<32x128xbf16>, vector<9x128xf32> -> vector<9x128xf32>
    %91 = arith.addf %82, %90 : vector<9x128xf32>
    %92 = vector.extract_strided_slice %64 {offsets = [27, 0], sizes = [9, 9], strides = [1, 1]} : vector<72x9xf32> to vector<9x9xf32>
    %93 = arith.truncf %92 : vector<9x9xf32> to vector<9x9xbf16>
    %94 = vector.extract_strided_slice %13 {offsets = [0, 352], sizes = [9, 32], strides = [1, 1]} : vector<18x384xf32> to vector<9x32xf32>
    %95 = arith.truncf %94 : vector<9x32xf32> to vector<9x32xbf16>
    %cst_27 = arith.constant dense<0.000000e+00> : vector<9x32xf32>
    %96 = tpu.matmul %93, %95, %cst_27 {dimension_numbers = #tpu.dot_dimension_numbers<[1], [0], [0], [1], [0, 0, 1, 1], [], []>} : vector<9x9xbf16>, vector<9x32xbf16>, vector<9x32xf32> -> vector<9x32xf32>
    %97 = arith.truncf %96 : vector<9x32xf32> to vector<9x32xbf16>
    %98 = vector.extract_strided_slice %65 {offsets = [96, 0], sizes = [32, 128], strides = [1, 1]} : vector<128x128xbf16> to vector<32x128xbf16>
    %cst_28 = arith.constant dense<0.000000e+00> : vector<9x128xf32>
    %99 = tpu.matmul %97, %98, %cst_28 {dimension_numbers = #tpu.dot_dimension_numbers<[1], [0], [0], [1], [0, 0, 1, 1], [], []>} : vector<9x32xbf16>, vector<32x128xbf16>, vector<9x128xf32> -> vector<9x128xf32>
    %100 = arith.addf %91, %99 : vector<9x128xf32>
    %101 = vector.extract_strided_slice %64 {offsets = [36, 0], sizes = [9, 9], strides = [1, 1]} : vector<72x9xf32> to vector<9x9xf32>
    %102 = arith.truncf %101 : vector<9x9xf32> to vector<9x9xbf16>
    %103 = vector.extract_strided_slice %13 {offsets = [9, 256], sizes = [9, 32], strides = [1, 1]} : vector<18x384xf32> to vector<9x32xf32>
    %104 = arith.truncf %103 : vector<9x32xf32> to vector<9x32xbf16>
    %cst_29 = arith.constant dense<0.000000e+00> : vector<9x32xf32>
    %105 = tpu.matmul %102, %104, %cst_29 {dimension_numbers = #tpu.dot_dimension_numbers<[1], [0], [0], [1], [0, 0, 1, 1], [], []>} : vector<9x9xbf16>, vector<9x32xbf16>, vector<9x32xf32> -> vector<9x32xf32>
    %106 = arith.truncf %105 : vector<9x32xf32> to vector<9x32xbf16>
    %107 = vector.extract_strided_slice %65 {offsets = [0, 0], sizes = [32, 128], strides = [1, 1]} : vector<128x128xbf16> to vector<32x128xbf16>
    %cst_30 = arith.constant dense<0.000000e+00> : vector<9x128xf32>
    %108 = tpu.matmul %106, %107, %cst_30 {dimension_numbers = #tpu.dot_dimension_numbers<[1], [0], [0], [1], [0, 0, 1, 1], [], []>} : vector<9x32xbf16>, vector<32x128xbf16>, vector<9x128xf32> -> vector<9x128xf32>
    %109 = vector.extract_strided_slice %64 {offsets = [45, 0], sizes = [9, 9], strides = [1, 1]} : vector<72x9xf32> to vector<9x9xf32>
    %110 = arith.truncf %109 : vector<9x9xf32> to vector<9x9xbf16>
    %111 = vector.extract_strided_slice %13 {offsets = [9, 288], sizes = [9, 32], strides = [1, 1]} : vector<18x384xf32> to vector<9x32xf32>
    %112 = arith.truncf %111 : vector<9x32xf32> to vector<9x32xbf16>
    %cst_31 = arith.constant dense<0.000000e+00> : vector<9x32xf32>
    %113 = tpu.matmul %110, %112, %cst_31 {dimension_numbers = #tpu.dot_dimension_numbers<[1], [0], [0], [1], [0, 0, 1, 1], [], []>} : vector<9x9xbf16>, vector<9x32xbf16>, vector<9x32xf32> -> vector<9x32xf32>
    %114 = arith.truncf %113 : vector<9x32xf32> to vector<9x32xbf16>
    %115 = vector.extract_strided_slice %65 {offsets = [32, 0], sizes = [32, 128], strides = [1, 1]} : vector<128x128xbf16> to vector<32x128xbf16>
    %cst_32 = arith.constant dense<0.000000e+00> : vector<9x128xf32>
    %116 = tpu.matmul %114, %115, %cst_32 {dimension_numbers = #tpu.dot_dimension_numbers<[1], [0], [0], [1], [0, 0, 1, 1], [], []>} : vector<9x32xbf16>, vector<32x128xbf16>, vector<9x128xf32> -> vector<9x128xf32>
    %117 = arith.addf %108, %116 : vector<9x128xf32>
    %118 = vector.extract_strided_slice %64 {offsets = [54, 0], sizes = [9, 9], strides = [1, 1]} : vector<72x9xf32> to vector<9x9xf32>
    %119 = arith.truncf %118 : vector<9x9xf32> to vector<9x9xbf16>
    %120 = vector.extract_strided_slice %13 {offsets = [9, 320], sizes = [9, 32], strides = [1, 1]} : vector<18x384xf32> to vector<9x32xf32>
    %121 = arith.truncf %120 : vector<9x32xf32> to vector<9x32xbf16>
    %cst_33 = arith.constant dense<0.000000e+00> : vector<9x32xf32>
    %122 = tpu.matmul %119, %121, %cst_33 {dimension_numbers = #tpu.dot_dimension_numbers<[1], [0], [0], [1], [0, 0, 1, 1], [], []>} : vector<9x9xbf16>, vector<9x32xbf16>, vector<9x32xf32> -> vector<9x32xf32>
    %123 = arith.truncf %122 : vector<9x32xf32> to vector<9x32xbf16>
    %124 = vector.extract_strided_slice %65 {offsets = [64, 0], sizes = [32, 128], strides = [1, 1]} : vector<128x128xbf16> to vector<32x128xbf16>
    %cst_34 = arith.constant dense<0.000000e+00> : vector<9x128xf32>
    %125 = tpu.matmul %123, %124, %cst_34 {dimension_numbers = #tpu.dot_dimension_numbers<[1], [0], [0], [1], [0, 0, 1, 1], [], []>} : vector<9x32xbf16>, vector<32x128xbf16>, vector<9x128xf32> -> vector<9x128xf32>
    %126 = arith.addf %117, %125 : vector<9x128xf32>
    %127 = vector.extract_strided_slice %64 {offsets = [63, 0], sizes = [9, 9], strides = [1, 1]} : vector<72x9xf32> to vector<9x9xf32>
    %128 = arith.truncf %127 : vector<9x9xf32> to vector<9x9xbf16>
    %129 = vector.extract_strided_slice %13 {offsets = [9, 352], sizes = [9, 32], strides = [1, 1]} : vector<18x384xf32> to vector<9x32xf32>
    %130 = arith.truncf %129 : vector<9x32xf32> to vector<9x32xbf16>
    %cst_35 = arith.constant dense<0.000000e+00> : vector<9x32xf32>
    %131 = tpu.matmul %128, %130, %cst_35 {dimension_numbers = #tpu.dot_dimension_numbers<[1], [0], [0], [1], [0, 0, 1, 1], [], []>} : vector<9x9xbf16>, vector<9x32xbf16>, vector<9x32xf32> -> vector<9x32xf32>
    %132 = arith.truncf %131 : vector<9x32xf32> to vector<9x32xbf16>
    %133 = vector.extract_strided_slice %65 {offsets = [96, 0], sizes = [32, 128], strides = [1, 1]} : vector<128x128xbf16> to vector<32x128xbf16>
    %cst_36 = arith.constant dense<0.000000e+00> : vector<9x128xf32>
    %134 = tpu.matmul %132, %133, %cst_36 {dimension_numbers = #tpu.dot_dimension_numbers<[1], [0], [0], [1], [0, 0, 1, 1], [], []>} : vector<9x32xbf16>, vector<32x128xbf16>, vector<9x128xf32> -> vector<9x128xf32>
    %135 = arith.addf %126, %134 : vector<9x128xf32>
    %136 = tpu.concatenate %100, %135 in 0 : vector<9x128xf32>, vector<9x128xf32> -> vector<18x128xf32>
    %c0_37 = arith.constant 0 : index
    %c0_38 = arith.constant 0 : index
    %137 = vector.load %arg14[%c0_37, %c0_38] : memref<1x128xf32, #tpu.memory_space<vmem>>, vector<1x128xf32>
    %138 = vector.broadcast %137 : vector<1x128xf32> to vector<18x128xf32>
    %139 = arith.addf %136, %138 : vector<18x128xf32>
    %140 = arith.addf %7, %139 : vector<18x128xf32>
    %c0_39 = arith.constant 0 : index
    %c0_40 = arith.constant 0 : index
    %141 = vector.load %arg15[%c0_39, %c0_40] : memref<1x128xf32, #tpu.memory_space<vmem>>, vector<1x128xf32>
    %c0_41 = arith.constant 0 : index
    %c0_42 = arith.constant 0 : index
    %142 = vector.load %arg16[%c0_41, %c0_42] : memref<1x128xf32, #tpu.memory_space<vmem>>, vector<1x128xf32>
    %cst_43 = arith.constant dense<0.000000e+00> : vector<18xf32>
    %143 = vector.multi_reduction <add>, %140, %cst_43 [1] : vector<18x128xf32> to vector<18xf32>
    %144 = vector.shape_cast %143 : vector<18xf32> to vector<18x1xf32>
    %cst_44 = arith.constant 1.280000e+02 : f32
    %145 = vector.broadcast %cst_44 : f32 to vector<18x1xf32>
    %146 = arith.divf %144, %145 : vector<18x1xf32>
    %147 = vector.broadcast %146 : vector<18x1xf32> to vector<18x128xf32>
    %148 = arith.subf %140, %147 : vector<18x128xf32>
    %149 = arith.mulf %148, %148 : vector<18x128xf32>
    %cst_45 = arith.constant dense<0.000000e+00> : vector<18xf32>
    %150 = vector.multi_reduction <add>, %149, %cst_45 [1] : vector<18x128xf32> to vector<18xf32>
    %151 = vector.shape_cast %150 : vector<18xf32> to vector<18x1xf32>
    %cst_46 = arith.constant 1.280000e+02 : f32
    %152 = vector.broadcast %cst_46 : f32 to vector<18x1xf32>
    %153 = arith.divf %151, %152 : vector<18x1xf32>
    %154 = vector.broadcast %146 : vector<18x1xf32> to vector<18x128xf32>
    %155 = arith.subf %140, %154 : vector<18x128xf32>
    %cst_47 = arith.constant 9.99999974E-6 : f32
    %156 = vector.broadcast %cst_47 : f32 to vector<18x1xf32>
    %157 = arith.addf %153, %156 : vector<18x1xf32>
    %158 = math.rsqrt %157 : vector<18x1xf32>
    %159 = vector.broadcast %158 : vector<18x1xf32> to vector<18x128xf32>
    %160 = arith.mulf %155, %159 : vector<18x128xf32>
    %161 = vector.broadcast %141 : vector<1x128xf32> to vector<18x128xf32>
    %162 = arith.mulf %160, %161 : vector<18x128xf32>
    %163 = vector.broadcast %142 : vector<1x128xf32> to vector<18x128xf32>
    %164 = arith.addf %162, %163 : vector<18x128xf32>
    %c0_48 = arith.constant 0 : index
    %c0_49 = arith.constant 0 : index
    %165 = vector.load %arg17[%c0_48, %c0_49] : memref<128x256xbf16, #tpu.memory_space<vmem>>, vector<128x256xbf16>
    %166 = arith.truncf %164 : vector<18x128xf32> to vector<18x128xbf16>
    %cst_50 = arith.constant dense<0.000000e+00> : vector<18x256xf32>
    %167 = tpu.matmul %166, %165, %cst_50 {dimension_numbers = #tpu.dot_dimension_numbers<[1], [0], [0], [1], [0, 0, 1, 1], [], []>} : vector<18x128xbf16>, vector<128x256xbf16>, vector<18x256xf32> -> vector<18x256xf32>
    %c0_51 = arith.constant 0 : index
    %c0_52 = arith.constant 0 : index
    %168 = vector.load %arg18[%c0_51, %c0_52] : memref<1x256xf32, #tpu.memory_space<vmem>>, vector<1x256xf32>
    %169 = vector.broadcast %168 : vector<1x256xf32> to vector<18x256xf32>
    %170 = arith.addf %167, %169 : vector<18x256xf32>
    %cst_53 = arith.constant 5.000000e-01 : f32
    %171 = vector.broadcast %cst_53 : f32 to vector<18x256xf32>
    %172 = arith.mulf %171, %170 : vector<18x256xf32>
    %cst_54 = arith.constant 0.707106769 : f32
    %173 = vector.broadcast %cst_54 : f32 to vector<18x256xf32>
    %174 = arith.mulf %170, %173 : vector<18x256xf32>
    %175 = math.erf %174 : vector<18x256xf32>
    %cst_55 = arith.constant 1.000000e+00 : f32
    %176 = vector.broadcast %cst_55 : f32 to vector<18x256xf32>
    %177 = arith.addf %176, %175 : vector<18x256xf32>
    %178 = arith.mulf %172, %177 : vector<18x256xf32>
    %c0_56 = arith.constant 0 : index
    %c0_57 = arith.constant 0 : index
    %179 = vector.load %arg19[%c0_56, %c0_57] : memref<256x128xbf16, #tpu.memory_space<vmem>>, vector<256x128xbf16>
    %180 = arith.truncf %178 : vector<18x256xf32> to vector<18x256xbf16>
    %cst_58 = arith.constant dense<0.000000e+00> : vector<18x128xf32>
    %181 = tpu.matmul %180, %179, %cst_58 {dimension_numbers = #tpu.dot_dimension_numbers<[1], [0], [0], [1], [0, 0, 1, 1], [], []>} : vector<18x256xbf16>, vector<256x128xbf16>, vector<18x128xf32> -> vector<18x128xf32>
    %c0_59 = arith.constant 0 : index
    %c0_60 = arith.constant 0 : index
    %182 = vector.load %arg20[%c0_59, %c0_60] : memref<1x128xf32, #tpu.memory_space<vmem>>, vector<1x128xf32>
    %183 = vector.broadcast %182 : vector<1x128xf32> to vector<18x128xf32>
    %184 = arith.addf %181, %183 : vector<18x128xf32>
    %185 = arith.addf %164, %184 : vector<18x128xf32>
    %c0_61 = arith.constant 0 : index
    %c0_62 = arith.constant 0 : index
    %186 = vector.load %arg21[%c0_61, %c0_62] : memref<1x128xf32, #tpu.memory_space<vmem>>, vector<1x128xf32>
    %c0_63 = arith.constant 0 : index
    %c0_64 = arith.constant 0 : index
    %187 = vector.load %arg22[%c0_63, %c0_64] : memref<1x128xf32, #tpu.memory_space<vmem>>, vector<1x128xf32>
    %cst_65 = arith.constant dense<0.000000e+00> : vector<18xf32>
    %188 = vector.multi_reduction <add>, %185, %cst_65 [1] : vector<18x128xf32> to vector<18xf32>
    %189 = vector.shape_cast %188 : vector<18xf32> to vector<18x1xf32>
    %cst_66 = arith.constant 1.280000e+02 : f32
    %190 = vector.broadcast %cst_66 : f32 to vector<18x1xf32>
    %191 = arith.divf %189, %190 : vector<18x1xf32>
    %192 = vector.broadcast %191 : vector<18x1xf32> to vector<18x128xf32>
    %193 = arith.subf %185, %192 : vector<18x128xf32>
    %194 = arith.mulf %193, %193 : vector<18x128xf32>
    %cst_67 = arith.constant dense<0.000000e+00> : vector<18xf32>
    %195 = vector.multi_reduction <add>, %194, %cst_67 [1] : vector<18x128xf32> to vector<18xf32>
    %196 = vector.shape_cast %195 : vector<18xf32> to vector<18x1xf32>
    %cst_68 = arith.constant 1.280000e+02 : f32
    %197 = vector.broadcast %cst_68 : f32 to vector<18x1xf32>
    %198 = arith.divf %196, %197 : vector<18x1xf32>
    %199 = vector.broadcast %191 : vector<18x1xf32> to vector<18x128xf32>
    %200 = arith.subf %185, %199 : vector<18x128xf32>
    %cst_69 = arith.constant 9.99999974E-6 : f32
    %201 = vector.broadcast %cst_69 : f32 to vector<18x1xf32>
    %202 = arith.addf %198, %201 : vector<18x1xf32>
    %203 = math.rsqrt %202 : vector<18x1xf32>
    %204 = vector.broadcast %203 : vector<18x1xf32> to vector<18x128xf32>
    %205 = arith.mulf %200, %204 : vector<18x128xf32>
    %206 = vector.broadcast %186 : vector<1x128xf32> to vector<18x128xf32>
    %207 = arith.mulf %205, %206 : vector<18x128xf32>
    %208 = vector.broadcast %187 : vector<1x128xf32> to vector<18x128xf32>
    %209 = arith.addf %207, %208 : vector<18x128xf32>
    %210 = vector.extract_strided_slice %209 {offsets = [0, 0], sizes = [1, 128], strides = [1, 1]} : vector<18x128xf32> to vector<1x128xf32>
    %211 = vector.extract_strided_slice %209 {offsets = [9, 0], sizes = [1, 128], strides = [1, 1]} : vector<18x128xf32> to vector<1x128xf32>
    %212 = tpu.concatenate %210, %211 in 0 : vector<1x128xf32>, vector<1x128xf32> -> vector<2x128xf32>
    %c0_70 = arith.constant 0 : index
    %c0_71 = arith.constant 0 : index
    %213 = vector.load %arg4[%c0_70, %c0_71] : memref<2x256xf32, #tpu.memory_space<vmem>>, vector<2x256xf32>
    %c0_72 = arith.constant 0 : index
    %c0_73 = arith.constant 0 : index
    %214 = vector.load %arg5[%c0_72, %c0_73] : memref<256x128xbf16, #tpu.memory_space<vmem>>, vector<256x128xbf16>
    %215 = arith.truncf %213 : vector<2x256xf32> to vector<2x256xbf16>
    %cst_74 = arith.constant dense<0.000000e+00> : vector<2x128xf32>
    %216 = tpu.matmul %215, %214, %cst_74 {dimension_numbers = #tpu.dot_dimension_numbers<[1], [0], [0], [1], [0, 0, 1, 1], [], []>} : vector<2x256xbf16>, vector<256x128xbf16>, vector<2x128xf32> -> vector<2x128xf32>
    %c0_75 = arith.constant 0 : index
    %c0_76 = arith.constant 0 : index
    %217 = vector.load %arg6[%c0_75, %c0_76] : memref<1x128xf32, #tpu.memory_space<vmem>>, vector<1x128xf32>
    %218 = vector.broadcast %217 : vector<1x128xf32> to vector<2x128xf32>
    %219 = arith.addf %216, %218 : vector<2x128xf32>
    %cst_77 = arith.constant 5.000000e-01 : f32
    %220 = vector.broadcast %cst_77 : f32 to vector<2x128xf32>
    %221 = arith.mulf %220, %219 : vector<2x128xf32>
    %cst_78 = arith.constant 0.707106769 : f32
    %222 = vector.broadcast %cst_78 : f32 to vector<2x128xf32>
    %223 = arith.mulf %219, %222 : vector<2x128xf32>
    %224 = math.erf %223 : vector<2x128xf32>
    %cst_79 = arith.constant 1.000000e+00 : f32
    %225 = vector.broadcast %cst_79 : f32 to vector<2x128xf32>
    %226 = arith.addf %225, %224 : vector<2x128xf32>
    %227 = arith.mulf %221, %226 : vector<2x128xf32>
    %c0_80 = arith.constant 0 : index
    %c0_81 = arith.constant 0 : index
    %228 = vector.load %arg7[%c0_80, %c0_81] : memref<128x128xbf16, #tpu.memory_space<vmem>>, vector<128x128xbf16>
    %229 = arith.truncf %227 : vector<2x128xf32> to vector<2x128xbf16>
    %cst_82 = arith.constant dense<0.000000e+00> : vector<2x128xf32>
    %230 = tpu.matmul %229, %228, %cst_82 {dimension_numbers = #tpu.dot_dimension_numbers<[1], [0], [0], [1], [0, 0, 1, 1], [], []>} : vector<2x128xbf16>, vector<128x128xbf16>, vector<2x128xf32> -> vector<2x128xf32>
    %c0_83 = arith.constant 0 : index
    %c0_84 = arith.constant 0 : index
    %231 = vector.load %arg8[%c0_83, %c0_84] : memref<1x128xf32, #tpu.memory_space<vmem>>, vector<1x128xf32>
    %232 = vector.broadcast %231 : vector<1x128xf32> to vector<2x128xf32>
    %233 = arith.addf %230, %232 : vector<2x128xf32>
    %cst_85 = arith.constant 5.000000e-01 : f32
    %234 = vector.broadcast %cst_85 : f32 to vector<2x128xf32>
    %235 = arith.mulf %234, %233 : vector<2x128xf32>
    %cst_86 = arith.constant 0.707106769 : f32
    %236 = vector.broadcast %cst_86 : f32 to vector<2x128xf32>
    %237 = arith.mulf %233, %236 : vector<2x128xf32>
    %238 = math.erf %237 : vector<2x128xf32>
    %cst_87 = arith.constant 1.000000e+00 : f32
    %239 = vector.broadcast %cst_87 : f32 to vector<2x128xf32>
    %240 = arith.addf %239, %238 : vector<2x128xf32>
    %241 = arith.mulf %235, %240 : vector<2x128xf32>
    %c0_88 = arith.constant 0 : index
    %c0_89 = arith.constant 0 : index
    %242 = vector.load %arg9[%c0_88, %c0_89] : memref<128x128xbf16, #tpu.memory_space<vmem>>, vector<128x128xbf16>
    %243 = arith.truncf %241 : vector<2x128xf32> to vector<2x128xbf16>
    %cst_90 = arith.constant dense<0.000000e+00> : vector<2x128xf32>
    %244 = tpu.matmul %243, %242, %cst_90 {dimension_numbers = #tpu.dot_dimension_numbers<[1], [0], [0], [1], [0, 0, 1, 1], [], []>} : vector<2x128xbf16>, vector<128x128xbf16>, vector<2x128xf32> -> vector<2x128xf32>
    %c0_91 = arith.constant 0 : index
    %c0_92 = arith.constant 0 : index
    %245 = vector.load %arg10[%c0_91, %c0_92] : memref<1x128xf32, #tpu.memory_space<vmem>>, vector<1x128xf32>
    %246 = vector.broadcast %245 : vector<1x128xf32> to vector<2x128xf32>
    %247 = arith.addf %244, %246 : vector<2x128xf32>
    %cst_93 = arith.constant 5.000000e-01 : f32
    %248 = vector.broadcast %cst_93 : f32 to vector<2x128xf32>
    %249 = arith.mulf %248, %247 : vector<2x128xf32>
    %cst_94 = arith.constant 0.707106769 : f32
    %250 = vector.broadcast %cst_94 : f32 to vector<2x128xf32>
    %251 = arith.mulf %247, %250 : vector<2x128xf32>
    %252 = math.erf %251 : vector<2x128xf32>
    %cst_95 = arith.constant 1.000000e+00 : f32
    %253 = vector.broadcast %cst_95 : f32 to vector<2x128xf32>
    %254 = arith.addf %253, %252 : vector<2x128xf32>
    %255 = arith.mulf %249, %254 : vector<2x128xf32>
    %256 = arith.mulf %212, %255 : vector<2x128xf32>
    %cst_96 = arith.constant dense<0.000000e+00> : vector<2xf32>
    %257 = vector.multi_reduction <add>, %256, %cst_96 [1] : vector<2x128xf32> to vector<2xf32>
    %258 = vector.shape_cast %257 : vector<2xf32> to vector<2x1xf32>
    %259 = arith.mulf %212, %212 : vector<2x128xf32>
    %cst_97 = arith.constant dense<0.000000e+00> : vector<2xf32>
    %260 = vector.multi_reduction <add>, %259, %cst_97 [1] : vector<2x128xf32> to vector<2xf32>
    %261 = vector.shape_cast %260 : vector<2xf32> to vector<2x1xf32>
    %262 = math.sqrt %261 : vector<2x1xf32>
    %cst_98 = arith.constant 9.99999993E-9 : f32
    %263 = vector.broadcast %cst_98 : f32 to vector<2x1xf32>
    %264 = arith.maximumf %262, %263 : vector<2x1xf32>
    %265 = arith.mulf %255, %255 : vector<2x128xf32>
    %cst_99 = arith.constant dense<0.000000e+00> : vector<2xf32>
    %266 = vector.multi_reduction <add>, %265, %cst_99 [1] : vector<2x128xf32> to vector<2xf32>
    %267 = vector.shape_cast %266 : vector<2xf32> to vector<2x1xf32>
    %268 = math.sqrt %267 : vector<2x1xf32>
    %cst_100 = arith.constant 9.99999993E-9 : f32
    %269 = vector.broadcast %cst_100 : f32 to vector<2x1xf32>
    %270 = arith.maximumf %268, %269 : vector<2x1xf32>
    %271 = arith.mulf %264, %270 : vector<2x1xf32>
    %272 = arith.divf %258, %271 : vector<2x1xf32>
    %cst_101 = arith.constant dense<0.000000e+00> : vector<1xf32>
    %273 = vector.multi_reduction <add>, %272, %cst_101 [0] : vector<2x1xf32> to vector<1xf32>
    %274 = vector.shape_cast %273 : vector<1xf32> to vector<1x1xf32>
    %cst_102 = arith.constant 2.000000e+00 : f32
    %275 = vector.broadcast %cst_102 : f32 to vector<1x1xf32>
    %276 = arith.divf %274, %275 : vector<1x1xf32>
    %c0_103 = arith.constant 0 : index
    %c0_104 = arith.constant 0 : index
    %277 = vector.load %arg28[%c0_103, %c0_104] : memref<1x1xf32, #tpu.memory_space<vmem>>, vector<1x1xf32>
    tpu.vector_store %arg28[%c0_103, %c0_104], %276 {strides = array<i32>} : memref<1x1xf32, #tpu.memory_space<vmem>>, vector<1x1xf32>,
    %c0_105 = arith.constant 0 : index
    %c0_106 = arith.constant 0 : index
    %278 = vector.load %arg23[%c0_105, %c0_106] : memref<128x128xbf16, #tpu.memory_space<vmem>>, vector<128x128xbf16>
    %279 = arith.truncf %212 : vector<2x128xf32> to vector<2x128xbf16>
    %cst_107 = arith.constant dense<0.000000e+00> : vector<2x128xf32>
    %280 = tpu.matmul %279, %278, %cst_107 {dimension_numbers = #tpu.dot_dimension_numbers<[1], [0], [0], [1], [0, 0, 1, 1], [], []>} : vector<2x128xbf16>, vector<128x128xbf16>, vector<2x128xf32> -> vector<2x128xf32>
    %c0_108 = arith.constant 0 : index
    %c0_109 = arith.constant 0 : index
    %281 = vector.load %arg24[%c0_108, %c0_109] : memref<1x128xf32, #tpu.memory_space<vmem>>, vector<1x128xf32>
    %282 = vector.broadcast %281 : vector<1x128xf32> to vector<2x128xf32>
    %283 = arith.addf %280, %282 : vector<2x128xf32>
    %cst_110 = arith.constant 0.999994993 : f32
    %284 = vector.broadcast %cst_110 : f32 to vector<2x128xf32>
    %285 = arith.mulf %283, %284 : vector<2x128xf32>
    %cst_111 = arith.constant 5.000000e-01 : f32
    %286 = vector.broadcast %cst_111 : f32 to vector<2x128xf32>
    %287 = arith.mulf %286, %285 : vector<2x128xf32>
    %cst_112 = arith.constant 0.707106769 : f32
    %288 = vector.broadcast %cst_112 : f32 to vector<2x128xf32>
    %289 = arith.mulf %285, %288 : vector<2x128xf32>
    %290 = math.erf %289 : vector<2x128xf32>
    %cst_113 = arith.constant 1.000000e+00 : f32
    %291 = vector.broadcast %cst_113 : f32 to vector<2x128xf32>
    %292 = arith.addf %291, %290 : vector<2x128xf32>
    %293 = arith.mulf %287, %292 : vector<2x128xf32>
    %c0_114 = arith.constant 0 : index
    %c0_115 = arith.constant 0 : index
    %294 = vector.load %arg25[%c0_114, %c0_115] : memref<1x128xf32, #tpu.memory_space<vmem>>, vector<1x128xf32>
    %295 = vector.broadcast %294 : vector<1x128xf32> to vector<2x128xf32>
    %296 = arith.mulf %293, %295 : vector<2x128xf32>
    %cst_116 = arith.constant dense<0.000000e+00> : vector<2xf32>
    %297 = vector.multi_reduction <add>, %296, %cst_116 [1] : vector<2x128xf32> to vector<2xf32>
    %298 = vector.shape_cast %297 : vector<2xf32> to vector<2x1xf32>
    %c0_117 = arith.constant 0 : index
    %c0_118 = arith.constant 0 : index
    %299 = vector.load %arg26[%c0_117, %c0_118] : memref<1x1xf32, #tpu.memory_space<vmem>>, vector<1x1xf32>
    %300 = vector.broadcast %299 : vector<1x1xf32> to vector<2x1xf32>
    %301 = arith.addf %298, %300 : vector<2x1xf32>
    %cst_119 = arith.constant 0.999994993 : f32
    %302 = vector.broadcast %cst_119 : f32 to vector<2x1xf32>
    %303 = arith.mulf %301, %302 : vector<2x1xf32>
    %304 = arith.negf %303 : vector<2x1xf32>
    %305 = math.exp %304 : vector<2x1xf32>
    %cst_120 = arith.constant 1.000000e+00 : f32
    %306 = vector.broadcast %cst_120 : f32 to vector<2x1xf32>
    %307 = arith.addf %306, %305 : vector<2x1xf32>
    %308 = arith.divf %306, %307 : vector<2x1xf32>
    %c0_121 = arith.constant 0 : index
    %c0_122 = arith.constant 0 : index
    %309 = vector.load %arg27[%c0_121, %c0_122] : memref<2x1xf32, #tpu.memory_space<vmem>>, vector<2x1xf32>
    tpu.vector_store %arg27[%c0_121, %c0_122], %308 {strides = array<i32>} : memref<2x1xf32, #tpu.memory_space<vmem>>, vector<2x1xf32>,
    return
  }
  func.func @transform_0(%arg0: i32) -> (i32, i32) {
    %c0_i32 = arith.constant 0 : i32
    %c0_i32_0 = arith.constant 0 : i32
    %c0_i32_1 = arith.constant 0 : i32
    return %c0_i32, %c0_i32_0 : i32, i32
  }
  func.func @transform_1(%arg0: i32) -> (i32, i32) {
    %c0_i32 = arith.constant 0 : i32
    %c0_i32_0 = arith.constant 0 : i32
    %c0_i32_1 = arith.constant 0 : i32
    return %c0_i32, %c0_i32_0 : i32, i32
  }
  func.func @transform_2(%arg0: i32) -> (i32, i32) {
    %c0_i32 = arith.constant 0 : i32
    %c0_i32_0 = arith.constant 0 : i32
    %c0_i32_1 = arith.constant 0 : i32
    return %c0_i32, %c0_i32_0 : i32, i32
  }
  func.func @transform_3(%arg0: i32) -> (i32, i32) {
    %c0_i32 = arith.constant 0 : i32
    %c0_i32_0 = arith.constant 0 : i32
    %c0_i32_1 = arith.constant 0 : i32
    return %c0_i32, %c0_i32_0 : i32, i32
  }
  func.func @transform_4(%arg0: i32) -> (i32, i32) {
    %c0_i32 = arith.constant 0 : i32
    %c0_i32_0 = arith.constant 0 : i32
    %c0_i32_1 = arith.constant 0 : i32
    return %c0_i32, %c0_i32_0 : i32, i32
  }
  func.func @transform_5(%arg0: i32) -> (i32, i32) {
    %c0_i32 = arith.constant 0 : i32
    %c0_i32_0 = arith.constant 0 : i32
    %c0_i32_1 = arith.constant 0 : i32
    return %c0_i32, %c0_i32_0 : i32, i32
  }
  func.func @transform_6(%arg0: i32) -> (i32, i32) {
    %c0_i32 = arith.constant 0 : i32
    %c0_i32_0 = arith.constant 0 : i32
    %c0_i32_1 = arith.constant 0 : i32
    return %c0_i32, %c0_i32_0 : i32, i32
  }
  func.func @transform_7(%arg0: i32) -> (i32, i32) {
    %c0_i32 = arith.constant 0 : i32
    %c0_i32_0 = arith.constant 0 : i32
    %c0_i32_1 = arith.constant 0 : i32
    return %c0_i32, %c0_i32_0 : i32, i32
  }
  func.func @transform_8(%arg0: i32) -> (i32, i32) {
    %c0_i32 = arith.constant 0 : i32
    %c0_i32_0 = arith.constant 0 : i32
    %c0_i32_1 = arith.constant 0 : i32
    return %c0_i32, %c0_i32_0 : i32, i32
  }
  func.func @transform_9(%arg0: i32) -> (i32, i32) {
    %c0_i32 = arith.constant 0 : i32
    %c0_i32_0 = arith.constant 0 : i32
    %c0_i32_1 = arith.constant 0 : i32
    return %c0_i32, %c0_i32_0 : i32, i32
  }
  func.func @transform_10(%arg0: i32) -> (i32, i32) {
    %c0_i32 = arith.constant 0 : i32
    %c0_i32_0 = arith.constant 0 : i32
    %c0_i32_1 = arith.constant 0 : i32
    return %c0_i32, %c0_i32_0 : i32, i32
  }
  func.func @transform_11(%arg0: i32) -> (i32, i32) {
    %c0_i32 = arith.constant 0 : i32
    %c0_i32_0 = arith.constant 0 : i32
    %c0_i32_1 = arith.constant 0 : i32
    return %c0_i32, %c0_i32_0 : i32, i32
  }
  func.func @transform_12(%arg0: i32) -> (i32, i32) {
    %c0_i32 = arith.constant 0 : i32
    %c0_i32_0 = arith.constant 0 : i32
    %c0_i32_1 = arith.constant 0 : i32
    return %c0_i32, %c0_i32_0 : i32, i32
  }
  func.func @transform_13(%arg0: i32) -> (i32, i32) {
    %c0_i32 = arith.constant 0 : i32
    %c0_i32_0 = arith.constant 0 : i32
    %c0_i32_1 = arith.constant 0 : i32
    return %c0_i32, %c0_i32_0 : i32, i32
  }
  func.func @transform_14(%arg0: i32) -> (i32, i32) {
    %c0_i32 = arith.constant 0 : i32
    %c0_i32_0 = arith.constant 0 : i32
    %c0_i32_1 = arith.constant 0 : i32
    return %c0_i32, %c0_i32_0 : i32, i32
  }
  func.func @transform_15(%arg0: i32) -> (i32, i32) {
    %c0_i32 = arith.constant 0 : i32
    %c0_i32_0 = arith.constant 0 : i32
    %c0_i32_1 = arith.constant 0 : i32
    return %c0_i32, %c0_i32_0 : i32, i32
  }
  func.func @transform_16(%arg0: i32) -> (i32, i32) {
    %c0_i32 = arith.constant 0 : i32
    %c0_i32_0 = arith.constant 0 : i32
    %c0_i32_1 = arith.constant 0 : i32
    return %c0_i32, %c0_i32_0 : i32, i32
  }
  func.func @transform_17(%arg0: i32) -> (i32, i32) {
    %c0_i32 = arith.constant 0 : i32
    %c0_i32_0 = arith.constant 0 : i32
    %c0_i32_1 = arith.constant 0 : i32
    return %c0_i32, %c0_i32_0 : i32, i32
  }
  func.func @transform_18(%arg0: i32) -> (i32, i32) {
    %c0_i32 = arith.constant 0 : i32
    %c0_i32_0 = arith.constant 0 : i32
    %c0_i32_1 = arith.constant 0 : i32
    return %c0_i32, %c0_i32_0 : i32, i32
  }
  func.func @transform_19(%arg0: i32) -> (i32, i32) {
    %c0_i32 = arith.constant 0 : i32
    %c0_i32_0 = arith.constant 0 : i32
    %c0_i32_1 = arith.constant 0 : i32
    return %c0_i32, %c0_i32_0 : i32, i32
  }
  func.func @transform_20(%arg0: i32) -> (i32, i32) {
    %c0_i32 = arith.constant 0 : i32
    %c0_i32_0 = arith.constant 0 : i32
    %c0_i32_1 = arith.constant 0 : i32
    return %c0_i32, %c0_i32_0 : i32, i32
  }
  func.func @transform_21(%arg0: i32) -> (i32, i32) {
    %c0_i32 = arith.constant 0 : i32
    %c0_i32_0 = arith.constant 0 : i32
    %c0_i32_1 = arith.constant 0 : i32
    return %c0_i32, %c0_i32_0 : i32, i32
  }
  func.func @transform_22(%arg0: i32) -> (i32, i32) {
    %c0_i32 = arith.constant 0 : i32
    %c0_i32_0 = arith.constant 0 : i32
    %c0_i32_1 = arith.constant 0 : i32
    return %c0_i32, %c0_i32_0 : i32, i32
  }
  func.func @transform_23(%arg0: i32) -> (i32, i32) {
    %c0_i32 = arith.constant 0 : i32
    %c0_i32_0 = arith.constant 0 : i32
    %c0_i32_1 = arith.constant 0 : i32
    return %c0_i32, %c0_i32_0 : i32, i32
  }
  func.func @transform_24(%arg0: i32) -> (i32, i32) {
    %c0_i32 = arith.constant 0 : i32
    %c0_i32_0 = arith.constant 0 : i32
    %c0_i32_1 = arith.constant 0 : i32
    return %c0_i32, %c0_i32_0 : i32, i32
  }
  func.func @transform_25(%arg0: i32) -> (i32, i32) {
    %c0_i32 = arith.constant 0 : i32
    %c0_i32_0 = arith.constant 0 : i32
    %c0_i32_1 = arith.constant 0 : i32
    return %c0_i32, %c0_i32_0 : i32, i32
  }
  func.func @transform_26(%arg0: i32) -> (i32, i32) {
    %c0_i32 = arith.constant 0 : i32
    %c0_i32_0 = arith.constant 0 : i32
    %c0_i32_1 = arith.constant 0 : i32
    return %c0_i32, %c0_i32_0 : i32, i32
  }
  func.func @transform_27(%arg0: i32) -> (i32, i32) {
    %c0_i32 = arith.constant 0 : i32
    %c0_i32_0 = arith.constant 0 : i32
    %c0_i32_1 = arith.constant 0 : i32
    return %c0_i32, %c0_i32_0 : i32, i32
  }
}

</mosaic_0001>

<llo_original>
// kernel: tpu_custom_call.1
$region0: #{tpu_custom_call.1}
  #allocation0 [shape = 'u32[]', space=smem, size = 0x4, offset = 0x4, fixed_abs, tag = 'smem constant byte address 0x4 - core index']
  #allocation1 [shape = 'u32[144,128]{1,0:T(1,128)}', space=vmem, size = 0x12000, scoped, tag = 'internal scratch']
  #allocation2 [shape = 'f32[1,1]{1,0:T(1,128)S(1)}', space=vmem, size = 0x200, scoped, tag = 'scoped memory for tpu_custom_call.1']
  %s0 = inlined_call_operand.hbm [shape: f32[16,128], index: 0, kind: input, shape index: {}]
  %s1 = inlined_call_operand.hbm [shape: f32[8,128], index: 1, kind: input, shape index: {}]
  %s2 = inlined_call_operand.vmem [shape: f32[1,128], index: 2, kind: input, shape index: {}]
  %s3 = inlined_call_operand.vmem [shape: f32[2,256], index: 3, kind: input, shape index: {}]
  %s4 = inlined_call_operand.hbm [shape: bf16[256,128], index: 4, kind: input, shape index: {}]
  %s5 = inlined_call_operand.vmem [shape: f32[1,128], index: 5, kind: input, shape index: {}]
  %s6 = inlined_call_operand.hbm [shape: bf16[128,128], index: 6, kind: input, shape index: {}]
  %s7 = inlined_call_operand.vmem [shape: f32[1,128], index: 7, kind: input, shape index: {}]
  %s8 = inlined_call_operand.hbm [shape: bf16[128,128], index: 8, kind: input, shape index: {}]
  %s9 = inlined_call_operand.vmem [shape: f32[1,128], index: 9, kind: input, shape index: {}]
  %s10 = inlined_call_operand.hbm [shape: bf16[128,384], index: 10, kind: input, shape index: {}]
  %s11 = inlined_call_operand.vmem [shape: f32[1,384], index: 11, kind: input, shape index: {}]
  %s12 = inlined_call_operand.hbm [shape: bf16[128,128], index: 12, kind: input, shape index: {}]
  %s13 = inlined_call_operand.vmem [shape: f32[1,128], index: 13, kind: input, shape index: {}]
  %s14 = inlined_call_operand.vmem [shape: f32[1,128], index: 14, kind: input, shape index: {}]
  %s15 = inlined_call_operand.vmem [shape: f32[1,128], index: 15, kind: input, shape index: {}]
  %s16 = inlined_call_operand.hbm [shape: bf16[128,256], index: 16, kind: input, shape index: {}]
  %s17 = inlined_call_operand.vmem [shape: f32[1,256], index: 17, kind: input, shape index: {}]
  %s18 = inlined_call_operand.hbm [shape: bf16[256,128], index: 18, kind: input, shape index: {}]
  %s19 = inlined_call_operand.vmem [shape: f32[1,128], index: 19, kind: input, shape index: {}]
  %s20 = inlined_call_operand.vmem [shape: f32[1,128], index: 20, kind: input, shape index: {}]
  %s21 = inlined_call_operand.vmem [shape: f32[1,128], index: 21, kind: input, shape index: {}]
  %s22 = inlined_call_operand.vmem [shape: bf16[128,128], index: 22, kind: input, shape index: {}]
  %s23 = inlined_call_operand.vmem [shape: f32[1,128], index: 23, kind: input, shape index: {}]
  %s24 = inlined_call_operand.vmem [shape: f32[1,128], index: 24, kind: input, shape index: {}]
  %s25 = inlined_call_operand.<no memory space> [shape: f32[1,1], index: 25, kind: input, shape index: {}]
  %s26 = inlined_call_operand.vmem [shape: f32[2,1], index: 26, kind: output, shape index: {0}]
  %s27 = inlined_call_operand.hbm [shape: f32[1,1], index: 27, kind: output, shape index: {1}]
  %28 = xla_tuple %s26, %s27
  %s29 = sld [smem:[#allocation0]]
  $region158: #{tpu_custom_call.1} parent=0
    _
  %s31 = ssub.s32 1, %s29
  %s32 = scalar_select 0, %s31, %s29
  %v33 = vstv %s25
  %34 = vst [vmem:[#allocation2] sm:$0x1] %v33
  $region1: #{tpu_custom_call.1} parent=0
    #allocation3 [shape = 'u8[8192]{0}', space=vmem, size = 0x2000, scoped, tag = 'input window, operand 0, single buffered']
    #allocation4 [shape = 's32[1]{0}', space=sflag, size = 0x4, scoped, tag = 'scoped memory for tpu_custom_call.1']
    #allocation5 [shape = 's32[1]{0}', space=sflag, size = 0x4, scoped, tag = 'scoped memory for tpu_custom_call.1']
    #allocation6 [shape = 'u8[4096]{0}', space=vmem, size = 0x1000, scoped, tag = 'input window, operand 1, single buffered']
    #allocation7 [shape = 's32[1]{0}', space=sflag, size = 0x4, scoped, tag = 'scoped memory for tpu_custom_call.1']
    #allocation8 [shape = 'u8[65536]{0}', space=vmem, size = 0x10000, scoped, tag = 'input window, operand 4, single buffered']
    #allocation9 [shape = 'u8[32768]{0}', space=vmem, size = 0x8000, scoped, tag = 'input window, operand 6, single buffered']
    #allocation10 [shape = 's32[1]{0}', space=sflag, size = 0x4, scoped, tag = 'scoped memory for tpu_custom_call.1']
    #allocation11 [shape = 'u8[32768]{0}', space=vmem, size = 0x8000, scoped, tag = 'input window, operand 8, single buffered']
    #allocation12 [shape = 'u8[98304]{0}', space=vmem, size = 0x18000, scoped, tag = 'input window, operand 10, single buffered']
    #allocation13 [shape = 's32[1]{0}', space=sflag, size = 0x4, scoped, tag = 'scoped memory for tpu_custom_call.1']
    #allocation14 [shape = 'u8[32768]{0}', space=vmem, size = 0x8000, scoped, tag = 'input window, operand 12, single buffered']
    #allocation15 [shape = 'u8[65536]{0}', space=vmem, size = 0x10000, scoped, tag = 'input window, operand 16, single buffered']
    #allocation16 [shape = 's32[1]{0}', space=sflag, size = 0x4, scoped, tag = 'scoped memory for tpu_custom_call.1']
    #allocation17 [shape = 'u8[65536]{0}', space=vmem, size = 0x10000, scoped, tag = 'input window, operand 18, single buffered']
    #allocation18 [shape = 'u8[512]{0}', space=vmem, size = 0x400, scoped, tag = 'output window, operand 1, single buffered']
    %35 = vsyncpa [#allocation4], 0
    %36 = vsyncpa [#allocation7], 0
    %37 = vsyncpa [#allocation10], 0
    %38 = vsyncpa [#allocation13], 0
    %39 = vsyncpa [#allocation16], 0
    %40 = vsyncpa [#allocation5], 0
    // Predicated region
    $region2: #{tpu_custom_call.1} parent=1 // pred_check
      _
    $region3: #{tpu_custom_call.1} parent=1 // pred_check_branch
      %42 = sbr.rel (0) target = $region5
    $region4: #{tpu_custom_call.1} parent=1 // pred_region
      %s44 = ssub.s32 256, 256
      %45 = vsyncadd [#allocation4], %s44
      %s46 = sshll.u32 [#allocation3], 4
      %s47 = int_to_ptr.vmem [resolvable:$true] %s46
      %52 = dma.hbm_to_vmem [thread:$0]  %s0, 256, %s47, [#allocation4], 128, 128, 8
    $region5: #{tpu_custom_call.1} parent=1 // pred_fallthru
      _
    // Predicated region
    $region6: #{tpu_custom_call.1} parent=1 // pred_check
      _
    $region7: #{tpu_custom_call.1} parent=1 // pred_check_branch
      %54 = sbr.rel (0) target = $region9
    $region8: #{tpu_custom_call.1} parent=1 // pred_region
      %s56 = ssub.s32 128, 128
      %57 = vsyncadd [#allocation7], %s56
      %s59 = sshll.u32 [#allocation6], 4
      %s60 = int_to_ptr.vmem [resolvable:$true] %s59
      %62 = dma.hbm_to_vmem [thread:$0]  %s1, 128, %s60, [#allocation7]
    $region9: #{tpu_custom_call.1} parent=1 // pred_fallthru
      _
    // Predicated region
    $region10: #{tpu_custom_call.1} parent=1 // pred_check
      _
    $region11: #{tpu_custom_call.1} parent=1 // pred_check_branch
      %64 = sbr.rel (0) target = $region13
    $region12: #{tpu_custom_call.1} parent=1 // pred_region
      _
    $region13: #{tpu_custom_call.1} parent=1 // pred_fallthru
      _
    // Predicated region
    $region14: #{tpu_custom_call.1} parent=1 // pred_check
      _
    $region15: #{tpu_custom_call.1} parent=1 // pred_check_branch
      %66 = sbr.rel (0) target = $region17
    $region16: #{tpu_custom_call.1} parent=1 // pred_region
      _
    $region17: #{tpu_custom_call.1} parent=1 // pred_fallthru
      _
    // Predicated region
    $region18: #{tpu_custom_call.1} parent=1 // pred_check
      _
    $region19: #{tpu_custom_call.1} parent=1 // pred_check_branch
      %68 = sbr.rel (0) target = $region21
    $region20: #{tpu_custom_call.1} parent=1 // pred_region
      %s70 = ssub.s32 2048, 2048
      %71 = vsyncadd [#allocation7], %s70
      %s72 = sshll.u32 [#allocation8], 4
      %s73 = int_to_ptr.vmem [resolvable:$true] %s72
      %78 = dma.hbm_to_vmem [thread:$0]  %s4, 2048, %s73, [#allocation7], 64, 64, 4
    $region21: #{tpu_custom_call.1} parent=1 // pred_fallthru
      _
    // Predicated region
    $region22: #{tpu_custom_call.1} parent=1 // pred_check
      _
    $region23: #{tpu_custom_call.1} parent=1 // pred_check_branch
      %80 = sbr.rel (0) target = $region25
    $region24: #{tpu_custom_call.1} parent=1 // pred_region
      _
    $region25: #{tpu_custom_call.1} parent=1 // pred_fallthru
      _
    // Predicated region
    $region26: #{tpu_custom_call.1} parent=1 // pred_check
      _
    $region27: #{tpu_custom_call.1} parent=1 // pred_check_branch
      %82 = sbr.rel (0) target = $region29
    $region28: #{tpu_custom_call.1} parent=1 // pred_region
      %s84 = ssub.s32 1024, 1024
      %85 = vsyncadd [#allocation10], %s84
      %s86 = sshll.u32 [#allocation9], 4
      %s87 = int_to_ptr.vmem [resolvable:$true] %s86
      %92 = dma.hbm_to_vmem [thread:$0]  %s6, 1024, %s87, [#allocation10], 64, 64, 4
    $region29: #{tpu_custom_call.1} parent=1 // pred_fallthru
      _
    // Predicated region
    $region30: #{tpu_custom_call.1} parent=1 // pred_check
      _
    $region31: #{tpu_custom_call.1} parent=1 // pred_check_branch
      %94 = sbr.rel (0) target = $region33
    $region32: #{tpu_custom_call.1} parent=1 // pred_region
      _
    $region33: #{tpu_custom_call.1} parent=1 // pred_fallthru
      _
    // Predicated region
    $region34: #{tpu_custom_call.1} parent=1 // pred_check
      _
    $region35: #{tpu_custom_call.1} parent=1 // pred_check_branch
      %96 = sbr.rel (0) target = $region37
    $region36: #{tpu_custom_call.1} parent=1 // pred_region
      %s98 = ssub.s32 1024, 1024
      %99 = vsyncadd [#allocation10], %s98
      %s100 = sshll.u32 [#allocation11], 4
      %s101 = int_to_ptr.vmem [resolvable:$true] %s100
      %106 = dma.hbm_to_vmem [thread:$0]  %s8, 1024, %s101, [#allocation10], 64, 64, 4
    $region37: #{tpu_custom_call.1} parent=1 // pred_fallthru
      _
    // Predicated region
    $region38: #{tpu_custom_call.1} parent=1 // pred_check
      _
    $region39: #{tpu_custom_call.1} parent=1 // pred_check_branch
      %108 = sbr.rel (0) target = $region41
    $region40: #{tpu_custom_call.1} parent=1 // pred_region
      _
    $region41: #{tpu_custom_call.1} parent=1 // pred_fallthru
      _
    // Predicated region
    $region42: #{tpu_custom_call.1} parent=1 // pred_check
      _
    $region43: #{tpu_custom_call.1} parent=1 // pred_check_branch
      %110 = sbr.rel (0) target = $region45
    $region44: #{tpu_custom_call.1} parent=1 // pred_region
      %s112 = ssub.s32 3072, 3072
      %113 = vsyncadd [#allocation13], %s112
      %s114 = sshll.u32 [#allocation12], 4
      %s115 = int_to_ptr.vmem [resolvable:$true] %s114
      %120 = dma.hbm_to_vmem [thread:$0]  %s10, 3072, %s115, [#allocation13], 192, 192, 12
    $region45: #{tpu_custom_call.1} parent=1 // pred_fallthru
      _
    // Predicated region
    $region46: #{tpu_custom_call.1} parent=1 // pred_check
      _
    $region47: #{tpu_custom_call.1} parent=1 // pred_check_branch
      %122 = sbr.rel (0) target = $region49
    $region48: #{tpu_custom_call.1} parent=1 // pred_region
      _
    $region49: #{tpu_custom_call.1} parent=1 // pred_fallthru
      _
    // Predicated region
    $region50: #{tpu_custom_call.1} parent=1 // pred_check
      _
    $region51: #{tpu_custom_call.1} parent=1 // pred_check_branch
      %124 = sbr.rel (0) target = $region53
    $region52: #{tpu_custom_call.1} parent=1 // pred_region
      %s126 = ssub.s32 1024, 1024
      %127 = vsyncadd [#allocation13], %s126
      %s128 = sshll.u32 [#allocation14], 4
      %s129 = int_to_ptr.vmem [resolvable:$true] %s128
      %134 = dma.hbm_to_vmem [thread:$0]  %s12, 1024, %s129, [#allocation13], 64, 64, 4
    $region53: #{tpu_custom_call.1} parent=1 // pred_fallthru
      _
    // Predicated region
    $region54: #{tpu_custom_call.1} parent=1 // pred_check
      _
    $region55: #{tpu_custom_call.1} parent=1 // pred_check_branch
      %136 = sbr.rel (0) target = $region57
    $region56: #{tpu_custom_call.1} parent=1 // pred_region
      _
    $region57: #{tpu_custom_call.1} parent=1 // pred_fallthru
      _
    // Predicated region
    $region58: #{tpu_custom_call.1} parent=1 // pred_check
      _
    $region59: #{tpu_custom_call.1} parent=1 // pred_check_branch
      %138 = sbr.rel (0) target = $region61
    $region60: #{tpu_custom_call.1} parent=1 // pred_region
      _
    $region61: #{tpu_custom_call.1} parent=1 // pred_fallthru
      _
    // Predicated region
    $region62: #{tpu_custom_call.1} parent=1 // pred_check
      _
    $region63: #{tpu_custom_call.1} parent=1 // pred_check_branch
      %140 = sbr.rel (0) target = $region65
    $region64: #{tpu_custom_call.1} parent=1 // pred_region
      _
    $region65: #{tpu_custom_call.1} parent=1 // pred_fallthru
      _
    // Predicated region
    $region66: #{tpu_custom_call.1} parent=1 // pred_check
      _
    $region67: #{tpu_custom_call.1} parent=1 // pred_check_branch
      %142 = sbr.rel (0) target = $region69
    $region68: #{tpu_custom_call.1} parent=1 // pred_region
      %s144 = ssub.s32 2048, 2048
      %145 = vsyncadd [#allocation16], %s144
      %s146 = sshll.u32 [#allocation15], 4
      %s147 = int_to_ptr.vmem [resolvable:$true] %s146
      %152 = dma.hbm_to_vmem [thread:$0]  %s16, 2048, %s147, [#allocation16], 128, 128, 8
    $region69: #{tpu_custom_call.1} parent=1 // pred_fallthru
      _
    // Predicated region
    $region70: #{tpu_custom_call.1} parent=1 // pred_check
      _
    $region71: #{tpu_custom_call.1} parent=1 // pred_check_branch
      %154 = sbr.rel (0) target = $region73
    $region72: #{tpu_custom_call.1} parent=1 // pred_region
      _
    $region73: #{tpu_custom_call.1} parent=1 // pred_fallthru
      _
    // Predicated region
    $region74: #{tpu_custom_call.1} parent=1 // pred_check
      _
    $region75: #{tpu_custom_call.1} parent=1 // pred_check_branch
      %156 = sbr.rel (0) target = $region77
    $region76: #{tpu_custom_call.1} parent=1 // pred_region
      %s158 = ssub.s32 2048, 2048
      %159 = vsyncadd [#allocation16], %s158
      %s160 = sshll.u32 [#allocation17], 4
      %s161 = int_to_ptr.vmem [resolvable:$true] %s160
      %166 = dma.hbm_to_vmem [thread:$0]  %s18, 2048, %s161, [#allocation16], 64, 64, 4
    $region77: #{tpu_custom_call.1} parent=1 // pred_fallthru
      _
    // Predicated region
    $region78: #{tpu_custom_call.1} parent=1 // pred_check
      _
    $region79: #{tpu_custom_call.1} parent=1 // pred_check_branch
      %168 = sbr.rel (0) target = $region81
    $region80: #{tpu_custom_call.1} parent=1 // pred_region
      _
    $region81: #{tpu_custom_call.1} parent=1 // pred_fallthru
      _
    // Predicated region
    $region82: #{tpu_custom_call.1} parent=1 // pred_check
      _
    $region83: #{tpu_custom_call.1} parent=1 // pred_check_branch
      %170 = sbr.rel (0) target = $region85
    $region84: #{tpu_custom_call.1} parent=1 // pred_region
      _
    $region85: #{tpu_custom_call.1} parent=1 // pred_fallthru
      _
    // Predicated region
    $region86: #{tpu_custom_call.1} parent=1 // pred_check
      _
    $region87: #{tpu_custom_call.1} parent=1 // pred_check_branch
      %172 = sbr.rel (0) target = $region89
    $region88: #{tpu_custom_call.1} parent=1 // pred_region
      _
    $region89: #{tpu_custom_call.1} parent=1 // pred_fallthru
      _
    // Predicated region
    $region90: #{tpu_custom_call.1} parent=1 // pred_check
      _
    $region91: #{tpu_custom_call.1} parent=1 // pred_check_branch
      %174 = sbr.rel (0) target = $region93
    $region92: #{tpu_custom_call.1} parent=1 // pred_region
      _
    $region93: #{tpu_custom_call.1} parent=1 // pred_fallthru
      _
    // Predicated region
    $region94: #{tpu_custom_call.1} parent=1 // pred_check
      _
    $region95: #{tpu_custom_call.1} parent=1 // pred_check_branch
      %176 = sbr.rel (0) target = $region97
    $region96: #{tpu_custom_call.1} parent=1 // pred_region
      _
    $region97: #{tpu_custom_call.1} parent=1 // pred_fallthru
      _
    // Predicated region
    $region98: #{tpu_custom_call.1} parent=1 // pred_check
      _
    $region99: #{tpu_custom_call.1} parent=1 // pred_check_branch
      %178 = sbr.rel (0) target = $region101
    $region100: #{tpu_custom_call.1} parent=1 // pred_region
      _
    $region101: #{tpu_custom_call.1} parent=1 // pred_fallthru
      _
    // Predicated region
    $region102: #{tpu_custom_call.1} parent=1 // pred_check
      _
    $region103: #{tpu_custom_call.1} parent=1 // pred_check_branch
      %180 = sbr.rel (0) target = $region105
    $region104: #{tpu_custom_call.1} parent=1 // pred_region
      _
    $region105: #{tpu_custom_call.1} parent=1 // pred_fallthru
      _
    // Predicated region
    $region106: #{tpu_custom_call.1} parent=1 // pred_check
      _
    $region107: #{tpu_custom_call.1} parent=1 // pred_check_branch
      %182 = sbr.rel (0) target = $region109
    $region108: #{tpu_custom_call.1} parent=1 // pred_region
      %183 = dma.done [#allocation4], 256
    $region109: #{tpu_custom_call.1} parent=1 // pred_fallthru
      _
    // Predicated region
    $region110: #{tpu_custom_call.1} parent=1 // pred_check
      _
    $region111: #{tpu_custom_call.1} parent=1 // pred_check_branch
      %185 = sbr.rel (0) target = $region113
    $region112: #{tpu_custom_call.1} parent=1 // pred_region
      %186 = dma.done [#allocation7], 128
    $region113: #{tpu_custom_call.1} parent=1 // pred_fallthru
      _
    // Predicated region
    $region114: #{tpu_custom_call.1} parent=1 // pred_check
      _
    $region115: #{tpu_custom_call.1} parent=1 // pred_check_branch
      %188 = sbr.rel (0) target = $region117
    $region116: #{tpu_custom_call.1} parent=1 // pred_region
      %189 = dma.done [#allocation7], 2048
    $region117: #{tpu_custom_call.1} parent=1 // pred_fallthru
      _
    // Predicated region
    $region118: #{tpu_custom_call.1} parent=1 // pred_check
      _
    $region119: #{tpu_custom_call.1} parent=1 // pred_check_branch
      %191 = sbr.rel (0) target = $region121
    $region120: #{tpu_custom_call.1} parent=1 // pred_region
      %192 = dma.done [#allocation10], 1024
    $region121: #{tpu_custom_call.1} parent=1 // pred_fallthru
      _
    // Predicated region
    $region122: #{tpu_custom_call.1} parent=1 // pred_check
      _
    $region123: #{tpu_custom_call.1} parent=1 // pred_check_branch
      %194 = sbr.rel (0) target = $region125
    $region124: #{tpu_custom_call.1} parent=1 // pred_region
      %195 = dma.done [#allocation10], 1024
    $region125: #{tpu_custom_call.1} parent=1 // pred_fallthru
      _
    // Predicated region
    $region126: #{tpu_custom_call.1} parent=1 // pred_check
      _
    $region127: #{tpu_custom_call.1} parent=1 // pred_check_branch
      %197 = sbr.rel (0) target = $region129
    $region128: #{tpu_custom_call.1} parent=1 // pred_region
      %198 = dma.done [#allocation13], 3072
    $region129: #{tpu_custom_call.1} parent=1 // pred_fallthru
      _
    // Predicated region
    $region130: #{tpu_custom_call.1} parent=1 // pred_check
      _
    $region131: #{tpu_custom_call.1} parent=1 // pred_check_branch
      %200 = sbr.rel (0) target = $region133
    $region132: #{tpu_custom_call.1} parent=1 // pred_region
      %201 = dma.done [#allocation13], 1024
    $region133: #{tpu_custom_call.1} parent=1 // pred_fallthru
      _
    // Predicated region
    $region134: #{tpu_custom_call.1} parent=1 // pred_check
      _
    $region135: #{tpu_custom_call.1} parent=1 // pred_check_branch
      %203 = sbr.rel (0) target = $region137
    $region136: #{tpu_custom_call.1} parent=1 // pred_region
      %204 = dma.done [#allocation16], 2048
    $region137: #{tpu_custom_call.1} parent=1 // pred_fallthru
      _
    // Predicated region
    $region138: #{tpu_custom_call.1} parent=1 // pred_check
      _
    $region139: #{tpu_custom_call.1} parent=1 // pred_check_branch
      %206 = sbr.rel (0) target = $region141
    $region140: #{tpu_custom_call.1} parent=1 // pred_region
      %207 = dma.done [#allocation16], 2048
    $region141: #{tpu_custom_call.1} parent=1 // pred_fallthru
      _
    %v209 = vld [vmem:[#allocation6] sm:$0xff]
    %v210 = vld [vmem:[%s2] sm:$0x1]
    %v211 = vld [vmem:[#allocation3] sm:$0xff]
    %v212 = vld [vmem:[#allocation3 + $0x8] sm:$0xff]
    %v213 = vadd.f32 %v211, %v209
    %v214 = vadd.f32 %v212, %v209
    %v216 = vrot.slane %v213, 7
    %v219 = vlaneseq
    %v220 = vshrl.u32 %v219, 7
    %v221 = vsub.s32 0, %v220
    %v222 = vrot.slane %v210, %v221
    %v225 = vrot.slane %v214, 6
    %vm227 = vcmask 1040384
    %v228 = vsel %vm227, %v210, %v216
    %v229 = vsel %vm227, %v216, %v222
    %vm230 = vcmask 1041408
    %v231 = vsel %vm230, %v229, %v225
    %v232 = vld [vmem:[#allocation12] sm:$0xff]
    %v233 = vld [vmem:[#allocation12 + $0x8] sm:$0xf]
    %v234 = vld [vmem:[#allocation12 + $0xc] sm:$0xff]
    %v235 = vld [vmem:[#allocation12 + $0x14] sm:$0xf]
    %v236 = vld [vmem:[#allocation12 + $0x18] sm:$0xff]
    %v237 = vld [vmem:[#allocation12 + $0x20] sm:$0xf]
    %v238 = vld [vmem:[#allocation12 + $0x24] sm:$0xff]
    %v239 = vld [vmem:[#allocation12 + $0x2c] sm:$0xf]
    %v240 = vld [vmem:[#allocation12 + $0x30] sm:$0xff]
    %v241 = vld [vmem:[#allocation12 + $0x38] sm:$0xf]
    %v242 = vld [vmem:[#allocation12 + $0x3c] sm:$0xff]
    %v243 = vld [vmem:[#allocation12 + $0x44] sm:$0xf]
    %v244 = vld [vmem:[#allocation12 + $0x48] sm:$0xff]
    %v245 = vld [vmem:[#allocation12 + $0x50] sm:$0xf]
    %v246 = vld [vmem:[#allocation12 + $0x54] sm:$0xff]
    %v247 = vld [vmem:[#allocation12 + $0x5c] sm:$0xf]
    %v248 = vld [vmem:[#allocation12 + $0x60] sm:$0xff]
    %v249 = vld [vmem:[#allocation12 + $0x68] sm:$0xf]
    %v250 = vld [vmem:[#allocation12 + $0x6c] sm:$0xff]
    %v251 = vld [vmem:[#allocation12 + $0x74] sm:$0xf]
    %v252 = vld [vmem:[#allocation12 + $0x78] sm:$0xff]
    %v253 = vld [vmem:[#allocation12 + $0x80] sm:$0xf]
    %v254 = vld [vmem:[#allocation12 + $0x84] sm:$0xff]
    %v255 = vld [vmem:[#allocation12 + $0x8c] sm:$0xf]
    %v256 = vld [vmem:[#allocation12 + $0x90] sm:$0xff]
    %v257 = vld [vmem:[#allocation12 + $0x98] sm:$0xf]
    %v258 = vld [vmem:[#allocation12 + $0x9c] sm:$0xff]
    %v259 = vld [vmem:[#allocation12 + $0xa4] sm:$0xf]
    %v260 = vld [vmem:[#allocation12 + $0xa8] sm:$0xff]
    %v261 = vld [vmem:[#allocation12 + $0xb0] sm:$0xf]
    %v262 = vld [vmem:[#allocation12 + $0xb4] sm:$0xff]
    %v263 = vld [vmem:[#allocation12 + $0xbc] sm:$0xf]
    %v264 = vpack.c.bf16 %v231, %v228
    %v265 = vpack.c.bf16 %v225, %v225
    %v266 = vld [vmem:[%s11] sm:$0x7]
    %v268 = vlaneseq
    %v269 = vshrl.u32 %v268, 7
    %v270 = vsub.s32 0, %v269
    %v271 = vrot.slane %v266, %v270
    %v272 = vlaneseq
    %v273 = vshrl.u32 %v272, 7
    %v274 = vsub.s32 1, %v273
    %v275 = vrot.slane %v266, %v274
    %v276 = vlaneseq
    %v277 = vshrl.u32 %v276, 7
    %v278 = vsub.s32 2, %v277
    %v279 = vrot.slane %v266, %v278
    %v315 = vunpack.c.l.b16 %v232
    %v316 = vunpack.c.h.b16 %v232
    %v317 = vunpack.c.l.b16 %v233
    %v318 = vunpack.c.l.b16 %v234
    %v319 = vunpack.c.h.b16 %v234
    %v320 = vunpack.c.l.b16 %v235
    %v321 = vunpack.c.l.b16 %v236
    %v322 = vunpack.c.h.b16 %v236
    %v323 = vunpack.c.l.b16 %v237
    %v324 = vunpack.c.l.b16 %v238
    %v325 = vunpack.c.h.b16 %v238
    %v326 = vunpack.c.l.b16 %v239
    %v327 = vunpack.c.l.b16 %v240
    %v328 = vunpack.c.h.b16 %v240
    %v329 = vunpack.c.l.b16 %v241
    %v330 = vunpack.c.l.b16 %v242
    %v331 = vunpack.c.h.b16 %v242
    %v332 = vunpack.c.l.b16 %v243
    %v333 = vunpack.c.l.b16 %v244
    %v334 = vunpack.c.h.b16 %v244
    %v335 = vunpack.c.l.b16 %v245
    %v336 = vunpack.c.l.b16 %v246
    %v337 = vunpack.c.h.b16 %v246
    %v338 = vunpack.c.l.b16 %v247
    %v339 = vunpack.c.l.b16 %v248
    %v340 = vunpack.c.h.b16 %v248
    %v341 = vunpack.c.l.b16 %v249
    %v342 = vunpack.c.l.b16 %v250
    %v343 = vunpack.c.h.b16 %v250
    %v344 = vunpack.c.l.b16 %v251
    %v345 = vunpack.c.l.b16 %v252
    %v346 = vunpack.c.h.b16 %v252
    %v347 = vunpack.c.l.b16 %v253
    %v348 = vunpack.c.l.b16 %v254
    %v349 = vunpack.c.h.b16 %v254
    %v350 = vunpack.c.l.b16 %v255
    %v351 = vunpack.c.l.b16 %v256
    %v352 = vunpack.c.h.b16 %v256
    %v353 = vunpack.c.l.b16 %v257
    %v354 = vunpack.c.l.b16 %v258
    %v355 = vunpack.c.h.b16 %v258
    %v356 = vunpack.c.l.b16 %v259
    %v357 = vunpack.c.l.b16 %v260
    %v358 = vunpack.c.h.b16 %v260
    %v359 = vunpack.c.l.b16 %v261
    %v360 = vunpack.c.l.b16 %v262
    %v361 = vunpack.c.h.b16 %v262
    %v362 = vunpack.c.l.b16 %v263
    %v363 = vpack.c.b16 %v318, %v315
    %v364 = vpack.c.b16 %v319, %v316
    %v365 = vpack.c.b16 %v320, %v317
    %v366 = vpack.c.b16 %v324, %v321
    %v367 = vpack.c.b16 %v325, %v322
    %v368 = vpack.c.b16 %v326, %v323
    %v369 = vpack.c.b16 %v330, %v327
    %v370 = vpack.c.b16 %v331, %v328
    %v371 = vpack.c.b16 %v332, %v329
    %v372 = vpack.c.b16 %v336, %v333
    %v373 = vpack.c.b16 %v337, %v334
    %v374 = vpack.c.b16 %v338, %v335
    %v375 = vpack.c.b16 %v342, %v339
    %v376 = vpack.c.b16 %v343, %v340
    %v377 = vpack.c.b16 %v344, %v341
    %v378 = vpack.c.b16 %v348, %v345
    %v379 = vpack.c.b16 %v349, %v346
    %v380 = vpack.c.b16 %v350, %v347
    %v381 = vpack.c.b16 %v354, %v351
    %v382 = vpack.c.b16 %v355, %v352
    %v383 = vpack.c.b16 %v356, %v353
    %v384 = vpack.c.b16 %v360, %v357
    %v385 = vpack.c.b16 %v361, %v358
    %v386 = vpack.c.b16 %v362, %v359
    %411 = vmatprep.subr.bf16.mxu0 %v364
    %412 = vmatpush1.bf16.msra.mxu0 %v363
    %413 = vmatprep.subr.bf16.mxu0 %v367
    %414 = vmatpush1.bf16.msra.mxu0 %v366
    %415 = vmatprep.subr.bf16.mxu0 %v370
    %416 = vmatpush1.bf16.msra.mxu0 %v369
    %417 = vmatprep.subr.bf16.mxu0 %v373
    %418 = vmatpush1.bf16.msra.mxu0 %v372
    %419 = vmatprep.subr.bf16.mxu0 %v376
    %420 = vmatpush1.bf16.msra.mxu0 %v375
    %421 = vmatprep.subr.bf16.mxu0 %v379
    %422 = vmatpush1.bf16.msra.mxu0 %v378
    %423 = vmatprep.subr.bf16.mxu0 %v382
    %424 = vmatpush1.bf16.msra.mxu0 %v381
    %425 = vmatprep.subr.bf16.mxu0 %v385
    %426 = vmatpush1.bf16.msra.mxu0 %v384
    %427 = vmatprep.subr.bf16.mxu0 0
    %428 = vmatpush1.bf16.msra.mxu0 0
    %429 = vmatprep.subr.bf16.mxu0 0
    %430 = vmatpush1.bf16.msra.mxu0 0
    %431 = vmatprep.subr.bf16.mxu0 0
    %432 = vmatpush1.bf16.msra.mxu0 0
    %433 = vmatprep.subr.bf16.mxu0 0
    %434 = vmatpush1.bf16.msra.mxu0 0
    %435 = vmatprep.subr.bf16.mxu0 0
    %436 = vmatpush1.bf16.msra.mxu0 0
    %437 = vmatprep.subr.bf16.mxu0 0
    %438 = vmatpush1.bf16.msra.mxu0 0
    %439 = vmatprep.subr.bf16.mxu0 0
    %440 = vmatpush1.bf16.msra.mxu0 0
    %441 = vmatprep.subr.bf16.mxu0 0
    %442 = vmatpush1.bf16.msra.mxu0 0
    %443 = vmatprep.mubr.bf16.mxu0 0
    %444 = vmatmul.mubr.bf16.gmra.mrb[0].mxu0 %v264
    %v445 = vpop.f32.mrb[0].mxu0
    %v446 = vadd.f32 %v271, %v445
    %v447 = vpop.f32.mrb[0].mxu0
    %v448 = vadd.f32 %v275, %v447
    %v449 = vpop.f32.mrb[0].mxu0
    %v450 = vadd.f32 %v271, %v449
    %v451 = vpop.f32.mrb[0].mxu0
    %v452 = vadd.f32 %v275, %v451
    %453 = vmatprep.mubr.bf16.mxu0 0
    %454 = vmatmul.mubr.bf16.gmra.mrb[0].mxu0 %v265
    %v455 = vpop.f32.mrb[0].mxu0
    %v456 = vadd.f32 %v271, %v455
    %v457 = vpop.f32.mrb[0].mxu0
    %v458 = vadd.f32 %v275, %v457
    %v459 = vpop.f32.mrb[0].mxu0
    %v460 = vpop.f32.mrb[0].mxu0
    %461 = vdwg.mxu0
    %462 = vmatprep.subr.bf16.mxu0 0
    %463 = vmatpush1.bf16.msra.mxu0 %v365
    %464 = vmatprep.subr.bf16.mxu0 0
    %465 = vmatpush1.bf16.msra.mxu0 %v368
    %466 = vmatprep.subr.bf16.mxu0 0
    %467 = vmatpush1.bf16.msra.mxu0 %v371
    %468 = vmatprep.subr.bf16.mxu0 0
    %469 = vmatpush1.bf16.msra.mxu0 %v374
    %470 = vmatprep.subr.bf16.mxu0 0
    %471 = vmatpush1.bf16.msra.mxu0 %v377
    %472 = vmatprep.subr.bf16.mxu0 0
    %473 = vmatpush1.bf16.msra.mxu0 %v380
    %474 = vmatprep.subr.bf16.mxu0 0
    %475 = vmatpush1.bf16.msra.mxu0 %v383
    %476 = vmatprep.subr.bf16.mxu0 0
    %477 = vmatpush1.bf16.msra.mxu0 %v386
    %478 = vmatprep.subr.bf16.mxu0 0
    %479 = vmatpush1.bf16.msra.mxu0 0
    %480 = vmatprep.subr.bf16.mxu0 0
    %481 = vmatpush1.bf16.msra.mxu0 0
    %482 = vmatprep.subr.bf16.mxu0 0
    %483 = vmatpush1.bf16.msra.mxu0 0
    %484 = vmatprep.subr.bf16.mxu0 0
    %485 = vmatpush1.bf16.msra.mxu0 0
    %486 = vmatprep.subr.bf16.mxu0 0
    %487 = vmatpush1.bf16.msra.mxu0 0
    %488 = vmatprep.subr.bf16.mxu0 0
    %489 = vmatpush1.bf16.msra.mxu0 0
    %490 = vmatprep.subr.bf16.mxu0 0
    %491 = vmatpush1.bf16.msra.mxu0 0
    %492 = vmatprep.subr.bf16.mxu0 0
    %493 = vmatpush1.bf16.msra.mxu0 0
    %494 = vmatprep.mubr.bf16.mxu0 0
    %495 = vmatmul.mubr.bf16.gmra.mrb[0].mxu0 %v264
    %v496 = vpop.f32.mrb[0].mxu0
    %v497 = vadd.f32 %v279, %v496
    %v498 = vpop.f32.mrb[0].mxu0
    %v499 = vpop.f32.mrb[0].mxu0
    %v500 = vadd.f32 %v279, %v499
    %v501 = vpop.f32.mrb[0].mxu0
    %502 = vmatprep.mubr.bf16.mxu0 0
    %503 = vmatmul.mubr.bf16.gmra.mrb[0].mxu0 %v265
    %v504 = vpop.f32.mrb[0].mxu0
    %v505 = vadd.f32 %v279, %v504
    %v506 = vpop.f32.mrb[0].mxu0
    %v507 = vpop.f32.mrb[0].mxu0
    %v508 = vpop.f32.mrb[0].mxu0
    %509 = vdwg.mxu0
    %v510 = vpack.c.bf16 %v450, %v446
    %v511 = vpack.c.bf16 %v452, %v448
    %vm512 = vcmask 261120
    %v514 = vsel %vm512, %v510, 0
    %v517 = vsel %vm512, %v511, 0
    %519 = vmatprep.subr.bf16.mxu0 0
    %520 = vmatpush1.bf16.xpose.msra.mxu0 %v517
    %521 = vmatprep.subr.bf16.mxu0 0
    %522 = vmatpush1.bf16.xpose.msra.mxu0 0
    %523 = vmatprep.subr.bf16.mxu0 0
    %524 = vmatpush1.bf16.xpose.msra.mxu0 0
    %525 = vmatprep.subr.bf16.mxu0 0
    %526 = vmatpush1.bf16.xpose.msra.mxu0 0
    %527 = vmatprep.subr.bf16.mxu0 0
    %528 = vmatpush1.bf16.xpose.msra.mxu0 0
    %529 = vmatprep.subr.bf16.mxu0 0
    %530 = vmatpush1.bf16.xpose.msra.mxu0 0
    %531 = vmatprep.subr.bf16.mxu0 0
    %532 = vmatpush1.bf16.xpose.msra.mxu0 0
    %533 = vmatprep.subr.bf16.mxu0 0
    %534 = vmatpush1.bf16.xpose.msra.mxu0 0
    %535 = vmatprep.subr.bf16.mxu0 0
    %536 = vmatpush1.bf16.xpose.msra.mxu0 0
    %537 = vmatprep.subr.bf16.mxu0 0
    %538 = vmatpush1.bf16.xpose.msra.mxu0 0
    %539 = vmatprep.subr.bf16.mxu0 0
    %540 = vmatpush1.bf16.xpose.msra.mxu0 0
    %541 = vmatprep.subr.bf16.mxu0 0
    %542 = vmatpush1.bf16.xpose.msra.mxu0 0
    %543 = vmatprep.subr.bf16.mxu0 0
    %544 = vmatpush1.bf16.xpose.msra.mxu0 0
    %545 = vmatprep.subr.bf16.mxu0 0
    %546 = vmatpush1.bf16.xpose.msra.mxu0 0
    %547 = vmatprep.subr.bf16.mxu0 0
    %548 = vmatpush1.bf16.xpose.msra.mxu0 0
    %549 = vmatprep.subr.bf16.mxu0 0
    %550 = vmatpush1.bf16.xpose.msra.mxu0 0
    %551 = vmatprep.mubr.bf16.mxu0 0
    %552 = vmatmul.mubr.bf16.gmra.mrb[0].mxu0 %v514
    %v553 = vpop.f32.mrb[0].mxu0
    %v554 = vadd.f32 0.0, %v553
    %v555 = vpop.f32.mrb[0].mxu0
    %v556 = vpop.f32.mrb[0].mxu0
    %v557 = vadd.f32 0.0, %v556
    %v558 = vpop.f32.mrb[0].mxu0
    %559 = vdwg.mxu0
    %561 = vrot.lane.b32.xlu0 %v510, 96
    %v562 = vpop.permute.xlu0 %561
    %564 = vrot.lane.b32.xlu0 %v511, 96
    %v565 = vpop.permute.xlu0 %564
    %v567 = vsel %vm512, %v562, 0
    %v570 = vsel %vm512, %v565, 0
    %572 = vmatprep.subr.bf16.mxu0 0
    %573 = vmatpush1.bf16.xpose.msra.mxu0 %v570
    %574 = vmatprep.subr.bf16.mxu0 0
    %575 = vmatpush1.bf16.xpose.msra.mxu0 0
    %576 = vmatprep.subr.bf16.mxu0 0
    %577 = vmatpush1.bf16.xpose.msra.mxu0 0
    %578 = vmatprep.subr.bf16.mxu0 0
    %579 = vmatpush1.bf16.xpose.msra.mxu0 0
    %580 = vmatprep.subr.bf16.mxu0 0
    %581 = vmatpush1.bf16.xpose.msra.mxu0 0
    %582 = vmatprep.subr.bf16.mxu0 0
    %583 = vmatpush1.bf16.xpose.msra.mxu0 0
    %584 = vmatprep.subr.bf16.mxu0 0
    %585 = vmatpush1.bf16.xpose.msra.mxu0 0
    %586 = vmatprep.subr.bf16.mxu0 0
    %587 = vmatpush1.bf16.xpose.msra.mxu0 0
    %588 = vmatprep.subr.bf16.mxu0 0
    %589 = vmatpush1.bf16.xpose.msra.mxu0 0
    %590 = vmatprep.subr.bf16.mxu0 0
    %591 = vmatpush1.bf16.xpose.msra.mxu0 0
    %592 = vmatprep.subr.bf16.mxu0 0
    %593 = vmatpush1.bf16.xpose.msra.mxu0 0
    %594 = vmatprep.subr.bf16.mxu0 0
    %595 = vmatpush1.bf16.xpose.msra.mxu0 0
    %596 = vmatprep.subr.bf16.mxu0 0
    %597 = vmatpush1.bf16.xpose.msra.mxu0 0
    %598 = vmatprep.subr.bf16.mxu0 0
    %599 = vmatpush1.bf16.xpose.msra.mxu0 0
    %600 = vmatprep.subr.bf16.mxu0 0
    %601 = vmatpush1.bf16.xpose.msra.mxu0 0
    %602 = vmatprep.subr.bf16.mxu0 0
    %603 = vmatpush1.bf16.xpose.msra.mxu0 0
    %604 = vmatprep.mubr.bf16.mxu0 0
    %605 = vmatmul.mubr.bf16.gmra.mrb[0].mxu0 %v567
    %v606 = vpop.f32.mrb[0].mxu0
    %v607 = vadd.f32 0.0, %v606
    %v608 = vpop.f32.mrb[0].mxu0
    %v609 = vpop.f32.mrb[0].mxu0
    %v610 = vadd.f32 0.0, %v609
    %v611 = vpop.f32.mrb[0].mxu0
    %612 = vdwg.mxu0
    %613 = vrot.lane.b32.xlu0 %v510, 64
    %v614 = vpop.permute.xlu0 %613
    %615 = vrot.lane.b32.xlu0 %v511, 64
    %v616 = vpop.permute.xlu0 %615
    %v618 = vsel %vm512, %v614, 0
    %v621 = vsel %vm512, %v616, 0
    %623 = vmatprep.subr.bf16.mxu0 0
    %624 = vmatpush1.bf16.xpose.msra.mxu0 %v621
    %625 = vmatprep.subr.bf16.mxu0 0
    %626 = vmatpush1.bf16.xpose.msra.mxu0 0
    %627 = vmatprep.subr.bf16.mxu0 0
    %628 = vmatpush1.bf16.xpose.msra.mxu0 0
    %629 = vmatprep.subr.bf16.mxu0 0
    %630 = vmatpush1.bf16.xpose.msra.mxu0 0
    %631 = vmatprep.subr.bf16.mxu0 0
    %632 = vmatpush1.bf16.xpose.msra.mxu0 0
    %633 = vmatprep.subr.bf16.mxu0 0
    %634 = vmatpush1.bf16.xpose.msra.mxu0 0
    %635 = vmatprep.subr.bf16.mxu0 0
    %636 = vmatpush1.bf16.xpose.msra.mxu0 0
    %637 = vmatprep.subr.bf16.mxu0 0
    %638 = vmatpush1.bf16.xpose.msra.mxu0 0
    %639 = vmatprep.subr.bf16.mxu0 0
    %640 = vmatpush1.bf16.xpose.msra.mxu0 0
    %641 = vmatprep.subr.bf16.mxu0 0
    %642 = vmatpush1.bf16.xpose.msra.mxu0 0
    %643 = vmatprep.subr.bf16.mxu0 0
    %644 = vmatpush1.bf16.xpose.msra.mxu0 0
    %645 = vmatprep.subr.bf16.mxu0 0
    %646 = vmatpush1.bf16.xpose.msra.mxu0 0
    %647 = vmatprep.subr.bf16.mxu0 0
    %648 = vmatpush1.bf16.xpose.msra.mxu0 0
    %649 = vmatprep.subr.bf16.mxu0 0
    %650 = vmatpush1.bf16.xpose.msra.mxu0 0
    %651 = vmatprep.subr.bf16.mxu0 0
    %652 = vmatpush1.bf16.xpose.msra.mxu0 0
    %653 = vmatprep.subr.bf16.mxu0 0
    %654 = vmatpush1.bf16.xpose.msra.mxu0 0
    %655 = vmatprep.mubr.bf16.mxu0 0
    %656 = vmatmul.mubr.bf16.gmra.mrb[0].mxu0 %v618
    %v657 = vpop.f32.mrb[0].mxu0
    %v658 = vadd.f32 0.0, %v657
    %v659 = vpop.f32.mrb[0].mxu0
    %v660 = vpop.f32.mrb[0].mxu0
    %v661 = vadd.f32 0.0, %v660
    %v662 = vpop.f32.mrb[0].mxu0
    %663 = vdwg.mxu0
    %664 = vrot.lane.b32.xlu0 %v510, 32
    %v665 = vpop.permute.xlu0 %664
    %666 = vrot.lane.b32.xlu0 %v511, 32
    %v667 = vpop.permute.xlu0 %666
    %v669 = vsel %vm512, %v665, 0
    %v672 = vsel %vm512, %v667, 0
    %674 = vmatprep.subr.bf16.mxu0 0
    %675 = vmatpush1.bf16.xpose.msra.mxu0 %v672
    %676 = vmatprep.subr.bf16.mxu0 0
    %677 = vmatpush1.bf16.xpose.msra.mxu0 0
    %678 = vmatprep.subr.bf16.mxu0 0
    %679 = vmatpush1.bf16.xpose.msra.mxu0 0
    %680 = vmatprep.subr.bf16.mxu0 0
    %681 = vmatpush1.bf16.xpose.msra.mxu0 0
    %682 = vmatprep.subr.bf16.mxu0 0
    %683 = vmatpush1.bf16.xpose.msra.mxu0 0
    %684 = vmatprep.subr.bf16.mxu0 0
    %685 = vmatpush1.bf16.xpose.msra.mxu0 0
    %686 = vmatprep.subr.bf16.mxu0 0
    %687 = vmatpush1.bf16.xpose.msra.mxu0 0
    %688 = vmatprep.subr.bf16.mxu0 0
    %689 = vmatpush1.bf16.xpose.msra.mxu0 0
    %690 = vmatprep.subr.bf16.mxu0 0
    %691 = vmatpush1.bf16.xpose.msra.mxu0 0
    %692 = vmatprep.subr.bf16.mxu0 0
    %693 = vmatpush1.bf16.xpose.msra.mxu0 0
    %694 = vmatprep.subr.bf16.mxu0 0
    %695 = vmatpush1.bf16.xpose.msra.mxu0 0
    %696 = vmatprep.subr.bf16.mxu0 0
    %697 = vmatpush1.bf16.xpose.msra.mxu0 0
    %698 = vmatprep.subr.bf16.mxu0 0
    %699 = vmatpush1.bf16.xpose.msra.mxu0 0
    %700 = vmatprep.subr.bf16.mxu0 0
    %701 = vmatpush1.bf16.xpose.msra.mxu0 0
    %702 = vmatprep.subr.bf16.mxu0 0
    %703 = vmatpush1.bf16.xpose.msra.mxu0 0
    %704 = vmatprep.subr.bf16.mxu0 0
    %705 = vmatpush1.bf16.xpose.msra.mxu0 0
    %706 = vmatprep.mubr.bf16.mxu0 0
    %707 = vmatmul.mubr.bf16.gmra.mrb[0].mxu0 %v669
    %v708 = vpop.f32.mrb[0].mxu0
    %v709 = vadd.f32 0.0, %v708
    %v710 = vpop.f32.mrb[0].mxu0
    %v711 = vpop.f32.mrb[0].mxu0
    %v712 = vadd.f32 0.0, %v711
    %v713 = vpop.f32.mrb[0].mxu0
    %714 = vdwg.mxu0
    %v715 = vpack.c.bf16 %v456, %v450
    %v716 = vpack.c.bf16 %v458, %v452
    %v718 = vshrl.u32 %v715, 16
    %v720 = vshll.u32 %v715, 16
    %v722 = vrot.slane %v720, 1
    %v723 = vor.u32 %v718, %v722
    %v725 = vshrl.u32 %v716, 16
    %v727 = vshll.u32 %v716, 16
    %v729 = vrot.slane %v727, 1
    %v730 = vor.u32 %v725, %v729
    %v732 = vsel %vm512, %v723, 0
    %v735 = vsel %vm512, %v730, 0
    %737 = vmatprep.subr.bf16.mxu0 0
    %738 = vmatpush1.bf16.xpose.msra.mxu0 %v735
    %739 = vmatprep.subr.bf16.mxu0 0
    %740 = vmatpush1.bf16.xpose.msra.mxu0 0
    %741 = vmatprep.subr.bf16.mxu0 0
    %742 = vmatpush1.bf16.xpose.msra.mxu0 0
    %743 = vmatprep.subr.bf16.mxu0 0
    %744 = vmatpush1.bf16.xpose.msra.mxu0 0
    %745 = vmatprep.subr.bf16.mxu0 0
    %746 = vmatpush1.bf16.xpose.msra.mxu0 0
    %747 = vmatprep.subr.bf16.mxu0 0
    %748 = vmatpush1.bf16.xpose.msra.mxu0 0
    %749 = vmatprep.subr.bf16.mxu0 0
    %750 = vmatpush1.bf16.xpose.msra.mxu0 0
    %751 = vmatprep.subr.bf16.mxu0 0
    %752 = vmatpush1.bf16.xpose.msra.mxu0 0
    %753 = vmatprep.subr.bf16.mxu0 0
    %754 = vmatpush1.bf16.xpose.msra.mxu0 0
    %755 = vmatprep.subr.bf16.mxu0 0
    %756 = vmatpush1.bf16.xpose.msra.mxu0 0
    %757 = vmatprep.subr.bf16.mxu0 0
    %758 = vmatpush1.bf16.xpose.msra.mxu0 0
    %759 = vmatprep.subr.bf16.mxu0 0
    %760 = vmatpush1.bf16.xpose.msra.mxu0 0
    %761 = vmatprep.subr.bf16.mxu0 0
    %762 = vmatpush1.bf16.xpose.msra.mxu0 0
    %763 = vmatprep.subr.bf16.mxu0 0
    %764 = vmatpush1.bf16.xpose.msra.mxu0 0
    %765 = vmatprep.subr.bf16.mxu0 0
    %766 = vmatpush1.bf16.xpose.msra.mxu0 0
    %767 = vmatprep.subr.bf16.mxu0 0
    %768 = vmatpush1.bf16.xpose.msra.mxu0 0
    %769 = vmatprep.mubr.bf16.mxu0 0
    %770 = vmatmul.mubr.bf16.gmra.mrb[0].mxu0 %v732
    %v771 = vpop.f32.mrb[0].mxu0
    %v772 = vadd.f32 0.0, %v771
    %v773 = vpop.f32.mrb[0].mxu0
    %v774 = vpop.f32.mrb[0].mxu0
    %v775 = vadd.f32 0.0, %v774
    %v776 = vpop.f32.mrb[0].mxu0
    %777 = vdwg.mxu0
    %778 = vrot.lane.b32.xlu0 %v723, 96
    %v779 = vpop.permute.xlu0 %778
    %780 = vrot.lane.b32.xlu0 %v730, 96
    %v781 = vpop.permute.xlu0 %780
    %v783 = vsel %vm512, %v779, 0
    %v786 = vsel %vm512, %v781, 0
    %788 = vmatprep.subr.bf16.mxu0 0
    %789 = vmatpush1.bf16.xpose.msra.mxu0 %v786
    %790 = vmatprep.subr.bf16.mxu0 0
    %791 = vmatpush1.bf16.xpose.msra.mxu0 0
    %792 = vmatprep.subr.bf16.mxu0 0
    %793 = vmatpush1.bf16.xpose.msra.mxu0 0
    %794 = vmatprep.subr.bf16.mxu0 0
    %795 = vmatpush1.bf16.xpose.msra.mxu0 0
    %796 = vmatprep.subr.bf16.mxu0 0
    %797 = vmatpush1.bf16.xpose.msra.mxu0 0
    %798 = vmatprep.subr.bf16.mxu0 0
    %799 = vmatpush1.bf16.xpose.msra.mxu0 0
    %800 = vmatprep.subr.bf16.mxu0 0
    %801 = vmatpush1.bf16.xpose.msra.mxu0 0
    %802 = vmatprep.subr.bf16.mxu0 0
    %803 = vmatpush1.bf16.xpose.msra.mxu0 0
    %804 = vmatprep.subr.bf16.mxu0 0
    %805 = vmatpush1.bf16.xpose.msra.mxu0 0
    %806 = vmatprep.subr.bf16.mxu0 0
    %807 = vmatpush1.bf16.xpose.msra.mxu0 0
    %808 = vmatprep.subr.bf16.mxu0 0
    %809 = vmatpush1.bf16.xpose.msra.mxu0 0
    %810 = vmatprep.subr.bf16.mxu0 0
    %811 = vmatpush1.bf16.xpose.msra.mxu0 0
    %812 = vmatprep.subr.bf16.mxu0 0
    %813 = vmatpush1.bf16.xpose.msra.mxu0 0
    %814 = vmatprep.subr.bf16.mxu0 0
    %815 = vmatpush1.bf16.xpose.msra.mxu0 0
    %816 = vmatprep.subr.bf16.mxu0 0
    %817 = vmatpush1.bf16.xpose.msra.mxu0 0
    %818 = vmatprep.subr.bf16.mxu0 0
    %819 = vmatpush1.bf16.xpose.msra.mxu0 0
    %820 = vmatprep.mubr.bf16.mxu0 0
    %821 = vmatmul.mubr.bf16.gmra.mrb[0].mxu0 %v783
    %v822 = vpop.f32.mrb[0].mxu0
    %v823 = vadd.f32 0.0, %v822
    %v824 = vpop.f32.mrb[0].mxu0
    %v825 = vpop.f32.mrb[0].mxu0
    %v826 = vadd.f32 0.0, %v825
    %v827 = vpop.f32.mrb[0].mxu0
    %828 = vdwg.mxu0
    %829 = vrot.lane.b32.xlu0 %v723, 64
    %v830 = vpop.permute.xlu0 %829
    %831 = vrot.lane.b32.xlu0 %v730, 64
    %v832 = vpop.permute.xlu0 %831
    %v834 = vsel %vm512, %v830, 0
    %v837 = vsel %vm512, %v832, 0
    %839 = vmatprep.subr.bf16.mxu0 0
    %840 = vmatpush1.bf16.xpose.msra.mxu0 %v837
    %841 = vmatprep.subr.bf16.mxu0 0
    %842 = vmatpush1.bf16.xpose.msra.mxu0 0
    %843 = vmatprep.subr.bf16.mxu0 0
    %844 = vmatpush1.bf16.xpose.msra.mxu0 0
    %845 = vmatprep.subr.bf16.mxu0 0
    %846 = vmatpush1.bf16.xpose.msra.mxu0 0
    %847 = vmatprep.subr.bf16.mxu0 0
    %848 = vmatpush1.bf16.xpose.msra.mxu0 0
    %849 = vmatprep.subr.bf16.mxu0 0
    %850 = vmatpush1.bf16.xpose.msra.mxu0 0
    %851 = vmatprep.subr.bf16.mxu0 0
    %852 = vmatpush1.bf16.xpose.msra.mxu0 0
    %853 = vmatprep.subr.bf16.mxu0 0
    %854 = vmatpush1.bf16.xpose.msra.mxu0 0
    %855 = vmatprep.subr.bf16.mxu0 0
    %856 = vmatpush1.bf16.xpose.msra.mxu0 0
    %857 = vmatprep.subr.bf16.mxu0 0
    %858 = vmatpush1.bf16.xpose.msra.mxu0 0
    %859 = vmatprep.subr.bf16.mxu0 0
    %860 = vmatpush1.bf16.xpose.msra.mxu0 0
    %861 = vmatprep.subr.bf16.mxu0 0
    %862 = vmatpush1.bf16.xpose.msra.mxu0 0
    %863 = vmatprep.subr.bf16.mxu0 0
    %864 = vmatpush1.bf16.xpose.msra.mxu0 0
    %865 = vmatprep.subr.bf16.mxu0 0
    %866 = vmatpush1.bf16.xpose.msra.mxu0 0
    %867 = vmatprep.subr.bf16.mxu0 0
    %868 = vmatpush1.bf16.xpose.msra.mxu0 0
    %869 = vmatprep.subr.bf16.mxu0 0
    %870 = vmatpush1.bf16.xpose.msra.mxu0 0
    %871 = vmatprep.mubr.bf16.mxu0 0
    %872 = vmatmul.mubr.bf16.gmra.mrb[0].mxu0 %v834
    %v873 = vpop.f32.mrb[0].mxu0
    %v874 = vadd.f32 0.0, %v873
    %v875 = vpop.f32.mrb[0].mxu0
    %v876 = vpop.f32.mrb[0].mxu0
    %v877 = vadd.f32 0.0, %v876
    %v878 = vpop.f32.mrb[0].mxu0
    %879 = vdwg.mxu0
    %880 = vrot.lane.b32.xlu0 %v723, 32
    %v881 = vpop.permute.xlu0 %880
    %882 = vrot.lane.b32.xlu0 %v730, 32
    %v883 = vpop.permute.xlu0 %882
    %v885 = vsel %vm512, %v881, 0
    %v888 = vsel %vm512, %v883, 0
    %890 = vmatprep.subr.bf16.mxu0 0
    %891 = vmatpush1.bf16.xpose.msra.mxu0 %v888
    %892 = vmatprep.subr.bf16.mxu0 0
    %893 = vmatpush1.bf16.xpose.msra.mxu0 0
    %894 = vmatprep.subr.bf16.mxu0 0
    %895 = vmatpush1.bf16.xpose.msra.mxu0 0
    %896 = vmatprep.subr.bf16.mxu0 0
    %897 = vmatpush1.bf16.xpose.msra.mxu0 0
    %898 = vmatprep.subr.bf16.mxu0 0
    %899 = vmatpush1.bf16.xpose.msra.mxu0 0
    %900 = vmatprep.subr.bf16.mxu0 0
    %901 = vmatpush1.bf16.xpose.msra.mxu0 0
    %902 = vmatprep.subr.bf16.mxu0 0
    %903 = vmatpush1.bf16.xpose.msra.mxu0 0
    %904 = vmatprep.subr.bf16.mxu0 0
    %905 = vmatpush1.bf16.xpose.msra.mxu0 0
    %906 = vmatprep.subr.bf16.mxu0 0
    %907 = vmatpush1.bf16.xpose.msra.mxu0 0
    %908 = vmatprep.subr.bf16.mxu0 0
    %909 = vmatpush1.bf16.xpose.msra.mxu0 0
    %910 = vmatprep.subr.bf16.mxu0 0
    %911 = vmatpush1.bf16.xpose.msra.mxu0 0
    %912 = vmatprep.subr.bf16.mxu0 0
    %913 = vmatpush1.bf16.xpose.msra.mxu0 0
    %914 = vmatprep.subr.bf16.mxu0 0
    %915 = vmatpush1.bf16.xpose.msra.mxu0 0
    %916 = vmatprep.subr.bf16.mxu0 0
    %917 = vmatpush1.bf16.xpose.msra.mxu0 0
    %918 = vmatprep.subr.bf16.mxu0 0
    %919 = vmatpush1.bf16.xpose.msra.mxu0 0
    %920 = vmatprep.subr.bf16.mxu0 0
    %921 = vmatpush1.bf16.xpose.msra.mxu0 0
    %922 = vmatprep.mubr.bf16.mxu0 0
    %923 = vmatmul.mubr.bf16.gmra.mrb[0].mxu0 %v885
    %v924 = vpop.f32.mrb[0].mxu0
    %v925 = vadd.f32 0.0, %v924
    %v926 = vpop.f32.mrb[0].mxu0
    %v927 = vpop.f32.mrb[0].mxu0
    %v928 = vadd.f32 0.0, %v927
    %v929 = vpop.f32.mrb[0].mxu0
    %930 = vdwg.mxu0
    %v933 = vrot.slane %v607, 7
    %v934 = vrot.slane %v610, 7
    %v935 = vsel %vm227, %v933, %v934
    %v940 = vrot.slane %v658, 6
    %v941 = vrot.slane %v661, 6
    %v942 = vsel %vm230, %v940, %v941
    %vm947 = vcmask 1042432
    %v948 = vrot.slane %v709, 5
    %v949 = vrot.slane %v712, 5
    %v950 = vsel %vm947, %v948, %v949
    %vm955 = vcmask 1043456
    %v956 = vrot.slane %v772, 4
    %v957 = vrot.slane %v775, 4
    %v958 = vsel %vm955, %v956, %v957
    %vm963 = vcmask 1044480
    %v964 = vrot.slane %v823, 3
    %v965 = vrot.slane %v826, 3
    %v966 = vsel %vm963, %v964, %v965
    %vm971 = vcmask 1045504
    %v972 = vrot.slane %v874, 2
    %v973 = vrot.slane %v877, 2
    %v974 = vsel %vm971, %v972, %v973
    %vm979 = vcmask 1046528
    %v980 = vrot.slane %v925, 1
    %v981 = vrot.slane %v928, 1
    %v982 = vsel %vm979, %v980, %v981
    %v985 = vsel %vm227, %v557, %v933
    %v986 = vsel %vm230, %v935, %v940
    %v987 = vsel %vm947, %v942, %v948
    %v988 = vsel %vm955, %v950, %v956
    %v989 = vsel %vm963, %v958, %v964
    %v990 = vsel %vm971, %v966, %v972
    %v991 = vsel %vm979, %v974, %v980
    %vm992 = vcmask 72704
    %v993 = vsel %vm992, %v554, -inf
    %994 = vmax.xlane.f32.xlu0 %v993
    %v995 = vpop.xlane.xlu0 %994
    %v996 = vsel %vm992, %v985, -inf
    %997 = vmax.xlane.f32.xlu0 %v996
    %v998 = vpop.xlane.xlu0 %997
    %v999 = vsel %vm992, %v986, -inf
    %1000 = vmax.xlane.f32.xlu0 %v999
    %v1001 = vpop.xlane.xlu0 %1000
    %v1002 = vsel %vm992, %v987, -inf
    %1003 = vmax.xlane.f32.xlu0 %v1002
    %v1004 = vpop.xlane.xlu0 %1003
    %v1005 = vsel %vm992, %v988, -inf
    %1006 = vmax.xlane.f32.xlu0 %v1005
    %v1007 = vpop.xlane.xlu0 %1006
    %v1008 = vsel %vm992, %v989, -inf
    %1009 = vmax.xlane.f32.xlu0 %v1008
    %v1010 = vpop.xlane.xlu0 %1009
    %v1011 = vsel %vm992, %v990, -inf
    %1012 = vmax.xlane.f32.xlu0 %v1011
    %v1013 = vpop.xlane.xlu0 %1012
    %v1014 = vsel %vm992, %v991, -inf
    %1015 = vmax.xlane.f32.xlu0 %v1014
    %v1016 = vpop.xlane.xlu0 %1015
    %v1017 = vsel %vm992, %v982, -inf
    %1018 = vmax.xlane.f32.xlu0 %v1017
    %v1019 = vpop.xlane.xlu0 %1018
    %v1020 = vsub.f32 %v554, %v995
    %v1021 = vsub.f32 %v985, %v998
    %v1022 = vsub.f32 %v986, %v1001
    %v1023 = vsub.f32 %v987, %v1004
    %v1024 = vsub.f32 %v988, %v1007
    %v1025 = vsub.f32 %v989, %v1010
    %v1026 = vsub.f32 %v990, %v1013
    %v1027 = vsub.f32 %v991, %v1016
    %v1028 = vsub.f32 %v982, %v1019
    %v1029 = vmul.f32 %v1020, 1.442695
    %v1030 = vpow.pop %v1029
    %v1031 = vmul.f32 %v1021, 1.442695
    %v1032 = vpow.pop %v1031
    %v1033 = vmul.f32 %v1022, 1.442695
    %v1034 = vpow.pop %v1033
    %v1035 = vmul.f32 %v1023, 1.442695
    %v1036 = vpow.pop %v1035
    %v1037 = vmul.f32 %v1024, 1.442695
    %v1038 = vpow.pop %v1037
    %v1039 = vmul.f32 %v1025, 1.442695
    %v1040 = vpow.pop %v1039
    %v1041 = vmul.f32 %v1026, 1.442695
    %v1042 = vpow.pop %v1041
    %v1043 = vmul.f32 %v1027, 1.442695
    %v1044 = vpow.pop %v1043
    %v1045 = vmul.f32 %v1028, 1.442695
    %v1046 = vpow.pop %v1045
    %v1047 = vsel %vm992, %v1030, 0.0
    %1048 = vadd.xlane.f32.xlu0 %v1047
    %v1049 = vpop.xlane.xlu0 %1048
    %v1050 = vsel %vm992, %v1032, 0.0
    %1051 = vadd.xlane.f32.xlu0 %v1050
    %v1052 = vpop.xlane.xlu0 %1051
    %v1053 = vsel %vm992, %v1034, 0.0
    %1054 = vadd.xlane.f32.xlu0 %v1053
    %v1055 = vpop.xlane.xlu0 %1054
    %v1056 = vsel %vm992, %v1036, 0.0
    %1057 = vadd.xlane.f32.xlu0 %v1056
    %v1058 = vpop.xlane.xlu0 %1057
    %v1059 = vsel %vm992, %v1038, 0.0
    %1060 = vadd.xlane.f32.xlu0 %v1059
    %v1061 = vpop.xlane.xlu0 %1060
    %v1062 = vsel %vm992, %v1040, 0.0
    %1063 = vadd.xlane.f32.xlu0 %v1062
    %v1064 = vpop.xlane.xlu0 %1063
    %v1065 = vsel %vm992, %v1042, 0.0
    %1066 = vadd.xlane.f32.xlu0 %v1065
    %v1067 = vpop.xlane.xlu0 %1066
    %v1068 = vsel %vm992, %v1044, 0.0
    %1069 = vadd.xlane.f32.xlu0 %v1068
    %v1070 = vpop.xlane.xlu0 %1069
    %v1071 = vsel %vm992, %v1046, 0.0
    %1072 = vadd.xlane.f32.xlu0 %v1071
    %v1073 = vpop.xlane.xlu0 %1072
    %v1074 = vrcp.pop %v1049
    %v1075 = vrcp.pop %v1052
    %v1076 = vrcp.pop %v1055
    %v1077 = vrcp.pop %v1058
    %v1078 = vrcp.pop %v1061
    %v1079 = vrcp.pop %v1064
    %v1080 = vrcp.pop %v1067
    %v1081 = vrcp.pop %v1070
    %v1082 = vrcp.pop %v1073
    %v1083 = vmul.f32 %v1030, %v1074
    %v1084 = vmul.f32 %v1032, %v1075
    %v1085 = vmul.f32 %v1034, %v1076
    %v1086 = vmul.f32 %v1036, %v1077
    %v1087 = vmul.f32 %v1038, %v1078
    %v1088 = vmul.f32 %v1040, %v1079
    %v1089 = vmul.f32 %v1042, %v1080
    %v1090 = vmul.f32 %v1044, %v1081
    %v1091 = vmul.f32 %v1046, %v1082
    %v1092 = vld [vmem:[#allocation14] sm:$0xf]
    %v1093 = vld [vmem:[#allocation14 + $0x4] sm:$0xf]
    %v1094 = vld [vmem:[#allocation14 + $0x8] sm:$0xf]
    %v1095 = vld [vmem:[#allocation14 + $0xc] sm:$0xf]
    %v1096 = vld [vmem:[#allocation14 + $0x10] sm:$0xf]
    %v1097 = vld [vmem:[#allocation14 + $0x14] sm:$0xf]
    %v1098 = vld [vmem:[#allocation14 + $0x18] sm:$0xf]
    %v1099 = vld [vmem:[#allocation14 + $0x1c] sm:$0xf]
    %v1100 = vld [vmem:[#allocation14 + $0x20] sm:$0xf]
    %v1101 = vld [vmem:[#allocation14 + $0x24] sm:$0xf]
    %v1102 = vld [vmem:[#allocation14 + $0x28] sm:$0xf]
    %v1103 = vld [vmem:[#allocation14 + $0x2c] sm:$0xf]
    %v1104 = vld [vmem:[#allocation14 + $0x30] sm:$0xf]
    %v1105 = vld [vmem:[#allocation14 + $0x34] sm:$0xf]
    %v1106 = vld [vmem:[#allocation14 + $0x38] sm:$0xf]
    %v1107 = vld [vmem:[#allocation14 + $0x3c] sm:$0xf]
    %v1108 = vpack.c.bf16 %v1084, %v1083
    %v1109 = vpack.c.bf16 %v500, %v497
    %v1111 = vsel %vm992, %v1108, 0
    %v1113 = vsel %vm955, 4294967295, 65535
    %v1114 = vsel %vm963, %v1113, 0
    %v1116 = vand.u32 %v1109, %v1114
    %1118 = vmatprep.subr.bf16.mxu0 0
    %1119 = vmatpush1.bf16.msra.mxu0 %v1116
    %1120 = vmatprep.subr.bf16.mxu0 0
    %1121 = vmatpush1.bf16.msra.mxu0 0
    %1122 = vmatprep.subr.bf16.mxu0 0
    %1123 = vmatpush1.bf16.msra.mxu0 0
    %1124 = vmatprep.subr.bf16.mxu0 0
    %1125 = vmatpush1.bf16.msra.mxu0 0
    %1126 = vmatprep.subr.bf16.mxu0 0
    %1127 = vmatpush1.bf16.msra.mxu0 0
    %1128 = vmatprep.subr.bf16.mxu0 0
    %1129 = vmatpush1.bf16.msra.mxu0 0
    %1130 = vmatprep.subr.bf16.mxu0 0
    %1131 = vmatpush1.bf16.msra.mxu0 0
    %1132 = vmatprep.subr.bf16.mxu0 0
    %1133 = vmatpush1.bf16.msra.mxu0 0
    %1134 = vmatprep.subr.bf16.mxu0 0
    %1135 = vmatpush1.bf16.msra.mxu0 0
    %1136 = vmatprep.subr.bf16.mxu0 0
    %1137 = vmatpush1.bf16.msra.mxu0 0
    %1138 = vmatprep.subr.bf16.mxu0 0
    %1139 = vmatpush1.bf16.msra.mxu0 0
    %1140 = vmatprep.subr.bf16.mxu0 0
    %1141 = vmatpush1.bf16.msra.mxu0 0
    %1142 = vmatprep.subr.bf16.mxu0 0
    %1143 = vmatpush1.bf16.msra.mxu0 0
    %1144 = vmatprep.subr.bf16.mxu0 0
    %1145 = vmatpush1.bf16.msra.mxu0 0
    %1146 = vmatprep.subr.bf16.mxu0 0
    %1147 = vmatpush1.bf16.msra.mxu0 0
    %1148 = vmatprep.subr.bf16.mxu0 0
    %1149 = vmatpush1.bf16.msra.mxu0 0
    %1150 = vmatprep.mubr.bf16.mxu0 0
    %1151 = vmatmul.mubr.bf16.gmra.mrb[0].mxu0 %v1111
    %v1152 = vpop.f32.mrb[0].mxu0
    %v1153 = vadd.f32 0.0, %v1152
    %v1154 = vpop.f32.mrb[0].mxu0
    %v1155 = vpop.f32.mrb[0].mxu0
    %v1156 = vadd.f32 0.0, %v1155
    %v1157 = vpop.f32.mrb[0].mxu0
    %1158 = vdwg.mxu0
    %v1159 = vpack.c.bf16 %v1156, %v1153
    %v1160 = vpack.c.bf16 %v1085, %v1084
    %v1162 = vshrl.u32 %v1160, 16
    %v1164 = vshll.u32 %v1160, 16
    %v1166 = vrot.slane %v1164, 1
    %v1167 = vor.u32 %v1162, %v1166
    %1169 = vrot.lane.b32.xlu0 %v1109, 96
    %v1170 = vpop.permute.xlu0 %1169
    %v1172 = vsel %vm992, %v1167, 0
    %v1175 = vand.u32 %v1170, %v1114
    %1177 = vmatprep.subr.bf16.mxu0 0
    %1178 = vmatpush1.bf16.msra.mxu0 %v1175
    %1179 = vmatprep.subr.bf16.mxu0 0
    %1180 = vmatpush1.bf16.msra.mxu0 0
    %1181 = vmatprep.subr.bf16.mxu0 0
    %1182 = vmatpush1.bf16.msra.mxu0 0
    %1183 = vmatprep.subr.bf16.mxu0 0
    %1184 = vmatpush1.bf16.msra.mxu0 0
    %1185 = vmatprep.subr.bf16.mxu0 0
    %1186 = vmatpush1.bf16.msra.mxu0 0
    %1187 = vmatprep.subr.bf16.mxu0 0
    %1188 = vmatpush1.bf16.msra.mxu0 0
    %1189 = vmatprep.subr.bf16.mxu0 0
    %1190 = vmatpush1.bf16.msra.mxu0 0
    %1191 = vmatprep.subr.bf16.mxu0 0
    %1192 = vmatpush1.bf16.msra.mxu0 0
    %1193 = vmatprep.subr.bf16.mxu0 0
    %1194 = vmatpush1.bf16.msra.mxu0 0
    %1195 = vmatprep.subr.bf16.mxu0 0
    %1196 = vmatpush1.bf16.msra.mxu0 0
    %1197 = vmatprep.subr.bf16.mxu0 0
    %1198 = vmatpush1.bf16.msra.mxu0 0
    %1199 = vmatprep.subr.bf16.mxu0 0
    %1200 = vmatpush1.bf16.msra.mxu0 0
    %1201 = vmatprep.subr.bf16.mxu0 0
    %1202 = vmatpush1.bf16.msra.mxu0 0
    %1203 = vmatprep.subr.bf16.mxu0 0
    %1204 = vmatpush1.bf16.msra.mxu0 0
    %1205 = vmatprep.subr.bf16.mxu0 0
    %1206 = vmatpush1.bf16.msra.mxu0 0
    %1207 = vmatprep.subr.bf16.mxu0 0
    %1208 = vmatpush1.bf16.msra.mxu0 0
    %1209 = vmatprep.mubr.bf16.mxu0 0
    %1210 = vmatmul.mubr.bf16.gmra.mrb[0].mxu0 %v1172
    %v1211 = vpop.f32.mrb[0].mxu0
    %v1212 = vadd.f32 0.0, %v1211
    %v1213 = vpop.f32.mrb[0].mxu0
    %v1214 = vpop.f32.mrb[0].mxu0
    %v1215 = vadd.f32 0.0, %v1214
    %v1216 = vpop.f32.mrb[0].mxu0
    %1217 = vdwg.mxu0
    %v1218 = vpack.c.bf16 %v1215, %v1212
    %v1223 = vunpack.c.l.b16 %v1096
    %v1224 = vunpack.c.l.b16 %v1097
    %v1225 = vunpack.c.l.b16 %v1098
    %v1226 = vunpack.c.l.b16 %v1099
    %v1227 = vpack.c.b16 %v1224, %v1223
    %v1228 = vpack.c.b16 %v1226, %v1225
    %v1232 = vsel %vm512, %v1218, 0
    %1234 = vmatprep.subr.bf16.mxu0 0
    %1235 = vmatpush1.bf16.msra.mxu0 %v1227
    %1236 = vmatprep.subr.bf16.mxu0 0
    %1237 = vmatpush1.bf16.msra.mxu0 %v1228
    %1238 = vmatprep.subr.bf16.mxu0 0
    %1239 = vmatpush1.bf16.msra.mxu0 0
    %1240 = vmatprep.subr.bf16.mxu0 0
    %1241 = vmatpush1.bf16.msra.mxu0 0
    %1242 = vmatprep.subr.bf16.mxu0 0
    %1243 = vmatpush1.bf16.msra.mxu0 0
    %1244 = vmatprep.subr.bf16.mxu0 0
    %1245 = vmatpush1.bf16.msra.mxu0 0
    %1246 = vmatprep.subr.bf16.mxu0 0
    %1247 = vmatpush1.bf16.msra.mxu0 0
    %1248 = vmatprep.subr.bf16.mxu0 0
    %1249 = vmatpush1.bf16.msra.mxu0 0
    %1250 = vmatprep.subr.bf16.mxu0 0
    %1251 = vmatpush1.bf16.msra.mxu0 0
    %1252 = vmatprep.subr.bf16.mxu0 0
    %1253 = vmatpush1.bf16.msra.mxu0 0
    %1254 = vmatprep.subr.bf16.mxu0 0
    %1255 = vmatpush1.bf16.msra.mxu0 0
    %1256 = vmatprep.subr.bf16.mxu0 0
    %1257 = vmatpush1.bf16.msra.mxu0 0
    %1258 = vmatprep.subr.bf16.mxu0 0
    %1259 = vmatpush1.bf16.msra.mxu0 0
    %1260 = vmatprep.subr.bf16.mxu0 0
    %1261 = vmatpush1.bf16.msra.mxu0 0
    %1262 = vmatprep.subr.bf16.mxu0 0
    %1263 = vmatpush1.bf16.msra.mxu0 0
    %1264 = vmatprep.subr.bf16.mxu0 0
    %1265 = vmatpush1.bf16.msra.mxu0 0
    %1266 = vmatprep.mubr.bf16.mxu0 0
    %1267 = vmatmul.mubr.bf16.gmra.mrb[0].mxu0 %v1232
    %v1268 = vpop.f32.mrb[0].mxu0
    %v1269 = vadd.f32 0.0, %v1268
    %v1270 = vpop.f32.mrb[0].mxu0
    %v1271 = vpop.f32.mrb[0].mxu0
    %v1272 = vadd.f32 0.0, %v1271
    %v1273 = vpop.f32.mrb[0].mxu0
    %1274 = vdwg.mxu0
    %v1279 = vunpack.c.l.b16 %v1092
    %v1280 = vunpack.c.l.b16 %v1093
    %v1281 = vunpack.c.l.b16 %v1094
    %v1282 = vunpack.c.l.b16 %v1095
    %v1283 = vpack.c.b16 %v1280, %v1279
    %v1284 = vpack.c.b16 %v1282, %v1281
    %v1288 = vsel %vm512, %v1159, 0
    %1290 = vmatprep.subr.bf16.mxu0 0
    %1291 = vmatpush1.bf16.msra.mxu0 %v1283
    %1292 = vmatprep.subr.bf16.mxu0 0
    %1293 = vmatpush1.bf16.msra.mxu0 %v1284
    %1294 = vmatprep.subr.bf16.mxu0 0
    %1295 = vmatpush1.bf16.msra.mxu0 0
    %1296 = vmatprep.subr.bf16.mxu0 0
    %1297 = vmatpush1.bf16.msra.mxu0 0
    %1298 = vmatprep.subr.bf16.mxu0 0
    %1299 = vmatpush1.bf16.msra.mxu0 0
    %1300 = vmatprep.subr.bf16.mxu0 0
    %1301 = vmatpush1.bf16.msra.mxu0 0
    %1302 = vmatprep.subr.bf16.mxu0 0
    %1303 = vmatpush1.bf16.msra.mxu0 0
    %1304 = vmatprep.subr.bf16.mxu0 0
    %1305 = vmatpush1.bf16.msra.mxu0 0
    %1306 = vmatprep.subr.bf16.mxu0 0
    %1307 = vmatpush1.bf16.msra.mxu0 0
    %1308 = vmatprep.subr.bf16.mxu0 0
    %1309 = vmatpush1.bf16.msra.mxu0 0
    %1310 = vmatprep.subr.bf16.mxu0 0
    %1311 = vmatpush1.bf16.msra.mxu0 0
    %1312 = vmatprep.subr.bf16.mxu0 0
    %1313 = vmatpush1.bf16.msra.mxu0 0
    %1314 = vmatprep.subr.bf16.mxu0 0
    %1315 = vmatpush1.bf16.msra.mxu0 0
    %1316 = vmatprep.subr.bf16.mxu0 0
    %1317 = vmatpush1.bf16.msra.mxu0 0
    %1318 = vmatprep.subr.bf16.mxu0 0
    %1319 = vmatpush1.bf16.msra.mxu0 0
    %1320 = vmatprep.subr.bf16.mxu0 0
    %1321 = vmatpush1.bf16.msra.mxu0 0
    %1322 = vmatprep.mubr.bf16.mxu0 0
    %1323 = vmatmul.mubr.bf16.gmra.mrb[0].mxu0 %v1288
    %v1324 = vpop.f32.mrb[0].mxu0
    %v1325 = vadd.f32 %v1269, %v1324
    %v1326 = vpop.f32.mrb[0].mxu0
    %v1327 = vpop.f32.mrb[0].mxu0
    %v1328 = vadd.f32 %v1272, %v1327
    %v1329 = vpop.f32.mrb[0].mxu0
    %1330 = vdwg.mxu0
    %v1331 = vpack.c.bf16 %v1086, %v1085
    %v1333 = vrot.slane %v1331, 1
    %1334 = vrot.lane.b32.xlu0 %v1109, 64
    %v1335 = vpop.permute.xlu0 %1334
    %v1337 = vsel %vm992, %v1333, 0
    %v1340 = vand.u32 %v1335, %v1114
    %1342 = vmatprep.subr.bf16.mxu0 0
    %1343 = vmatpush1.bf16.msra.mxu0 %v1340
    %1344 = vmatprep.subr.bf16.mxu0 0
    %1345 = vmatpush1.bf16.msra.mxu0 0
    %1346 = vmatprep.subr.bf16.mxu0 0
    %1347 = vmatpush1.bf16.msra.mxu0 0
    %1348 = vmatprep.subr.bf16.mxu0 0
    %1349 = vmatpush1.bf16.msra.mxu0 0
    %1350 = vmatprep.subr.bf16.mxu0 0
    %1351 = vmatpush1.bf16.msra.mxu0 0
    %1352 = vmatprep.subr.bf16.mxu0 0
    %1353 = vmatpush1.bf16.msra.mxu0 0
    %1354 = vmatprep.subr.bf16.mxu0 0
    %1355 = vmatpush1.bf16.msra.mxu0 0
    %1356 = vmatprep.subr.bf16.mxu0 0
    %1357 = vmatpush1.bf16.msra.mxu0 0
    %1358 = vmatprep.subr.bf16.mxu0 0
    %1359 = vmatpush1.bf16.msra.mxu0 0
    %1360 = vmatprep.subr.bf16.mxu0 0
    %1361 = vmatpush1.bf16.msra.mxu0 0
    %1362 = vmatprep.subr.bf16.mxu0 0
    %1363 = vmatpush1.bf16.msra.mxu0 0
    %1364 = vmatprep.subr.bf16.mxu0 0
    %1365 = vmatpush1.bf16.msra.mxu0 0
    %1366 = vmatprep.subr.bf16.mxu0 0
    %1367 = vmatpush1.bf16.msra.mxu0 0
    %1368 = vmatprep.subr.bf16.mxu0 0
    %1369 = vmatpush1.bf16.msra.mxu0 0
    %1370 = vmatprep.subr.bf16.mxu0 0
    %1371 = vmatpush1.bf16.msra.mxu0 0
    %1372 = vmatprep.subr.bf16.mxu0 0
    %1373 = vmatpush1.bf16.msra.mxu0 0
    %1374 = vmatprep.mubr.bf16.mxu0 0
    %1375 = vmatmul.mubr.bf16.gmra.mrb[0].mxu0 %v1337
    %v1376 = vpop.f32.mrb[0].mxu0
    %v1377 = vadd.f32 0.0, %v1376
    %v1378 = vpop.f32.mrb[0].mxu0
    %v1379 = vpop.f32.mrb[0].mxu0
    %v1380 = vadd.f32 0.0, %v1379
    %v1381 = vpop.f32.mrb[0].mxu0
    %1382 = vdwg.mxu0
    %v1383 = vpack.c.bf16 %v1380, %v1377
    %v1388 = vunpack.c.l.b16 %v1100
    %v1389 = vunpack.c.l.b16 %v1101
    %v1390 = vunpack.c.l.b16 %v1102
    %v1391 = vunpack.c.l.b16 %v1103
    %v1392 = vpack.c.b16 %v1389, %v1388
    %v1393 = vpack.c.b16 %v1391, %v1390
    %v1397 = vsel %vm512, %v1383, 0
    %1399 = vmatprep.subr.bf16.mxu0 0
    %1400 = vmatpush1.bf16.msra.mxu0 %v1392
    %1401 = vmatprep.subr.bf16.mxu0 0
    %1402 = vmatpush1.bf16.msra.mxu0 %v1393
    %1403 = vmatprep.subr.bf16.mxu0 0
    %1404 = vmatpush1.bf16.msra.mxu0 0
    %1405 = vmatprep.subr.bf16.mxu0 0
    %1406 = vmatpush1.bf16.msra.mxu0 0
    %1407 = vmatprep.subr.bf16.mxu0 0
    %1408 = vmatpush1.bf16.msra.mxu0 0
    %1409 = vmatprep.subr.bf16.mxu0 0
    %1410 = vmatpush1.bf16.msra.mxu0 0
    %1411 = vmatprep.subr.bf16.mxu0 0
    %1412 = vmatpush1.bf16.msra.mxu0 0
    %1413 = vmatprep.subr.bf16.mxu0 0
    %1414 = vmatpush1.bf16.msra.mxu0 0
    %1415 = vmatprep.subr.bf16.mxu0 0
    %1416 = vmatpush1.bf16.msra.mxu0 0
    %1417 = vmatprep.subr.bf16.mxu0 0
    %1418 = vmatpush1.bf16.msra.mxu0 0
    %1419 = vmatprep.subr.bf16.mxu0 0
    %1420 = vmatpush1.bf16.msra.mxu0 0
    %1421 = vmatprep.subr.bf16.mxu0 0
    %1422 = vmatpush1.bf16.msra.mxu0 0
    %1423 = vmatprep.subr.bf16.mxu0 0
    %1424 = vmatpush1.bf16.msra.mxu0 0
    %1425 = vmatprep.subr.bf16.mxu0 0
    %1426 = vmatpush1.bf16.msra.mxu0 0
    %1427 = vmatprep.subr.bf16.mxu0 0
    %1428 = vmatpush1.bf16.msra.mxu0 0
    %1429 = vmatprep.subr.bf16.mxu0 0
    %1430 = vmatpush1.bf16.msra.mxu0 0
    %1431 = vmatprep.mubr.bf16.mxu0 0
    %1432 = vmatmul.mubr.bf16.gmra.mrb[0].mxu0 %v1397
    %v1433 = vpop.f32.mrb[0].mxu0
    %v1434 = vadd.f32 0.0, %v1433
    %v1435 = vpop.f32.mrb[0].mxu0
    %v1436 = vpop.f32.mrb[0].mxu0
    %v1437 = vadd.f32 0.0, %v1436
    %v1438 = vpop.f32.mrb[0].mxu0
    %1439 = vdwg.mxu0
    %v1440 = vadd.f32 %v1325, %v1434
    %v1441 = vadd.f32 %v1328, %v1437
    %v1442 = vpack.c.bf16 %v1087, %v1086
    %v1444 = vshrl.u32 %v1442, 16
    %v1446 = vrot.slane %v1444, 1
    %v1447 = vshll.u32 %v1442, 16
    %v1449 = vrot.slane %v1447, 2
    %v1450 = vor.u32 %v1446, %v1449
    %1451 = vrot.lane.b32.xlu0 %v1109, 32
    %v1452 = vpop.permute.xlu0 %1451
    %v1454 = vsel %vm992, %v1450, 0
    %v1457 = vand.u32 %v1452, %v1114
    %1459 = vmatprep.subr.bf16.mxu0 0
    %1460 = vmatpush1.bf16.msra.mxu0 %v1457
    %1461 = vmatprep.subr.bf16.mxu0 0
    %1462 = vmatpush1.bf16.msra.mxu0 0
    %1463 = vmatprep.subr.bf16.mxu0 0
    %1464 = vmatpush1.bf16.msra.mxu0 0
    %1465 = vmatprep.subr.bf16.mxu0 0
    %1466 = vmatpush1.bf16.msra.mxu0 0
    %1467 = vmatprep.subr.bf16.mxu0 0
    %1468 = vmatpush1.bf16.msra.mxu0 0
    %1469 = vmatprep.subr.bf16.mxu0 0
    %1470 = vmatpush1.bf16.msra.mxu0 0
    %1471 = vmatprep.subr.bf16.mxu0 0
    %1472 = vmatpush1.bf16.msra.mxu0 0
    %1473 = vmatprep.subr.bf16.mxu0 0
    %1474 = vmatpush1.bf16.msra.mxu0 0
    %1475 = vmatprep.subr.bf16.mxu0 0
    %1476 = vmatpush1.bf16.msra.mxu0 0
    %1477 = vmatprep.subr.bf16.mxu0 0
    %1478 = vmatpush1.bf16.msra.mxu0 0
    %1479 = vmatprep.subr.bf16.mxu0 0
    %1480 = vmatpush1.bf16.msra.mxu0 0
    %1481 = vmatprep.subr.bf16.mxu0 0
    %1482 = vmatpush1.bf16.msra.mxu0 0
    %1483 = vmatprep.subr.bf16.mxu0 0
    %1484 = vmatpush1.bf16.msra.mxu0 0
    %1485 = vmatprep.subr.bf16.mxu0 0
    %1486 = vmatpush1.bf16.msra.mxu0 0
    %1487 = vmatprep.subr.bf16.mxu0 0
    %1488 = vmatpush1.bf16.msra.mxu0 0
    %1489 = vmatprep.subr.bf16.mxu0 0
    %1490 = vmatpush1.bf16.msra.mxu0 0
    %1491 = vmatprep.mubr.bf16.mxu0 0
    %1492 = vmatmul.mubr.bf16.gmra.mrb[0].mxu0 %v1454
    %v1493 = vpop.f32.mrb[0].mxu0
    %v1494 = vadd.f32 0.0, %v1493
    %v1495 = vpop.f32.mrb[0].mxu0
    %v1496 = vpop.f32.mrb[0].mxu0
    %v1497 = vadd.f32 0.0, %v1496
    %v1498 = vpop.f32.mrb[0].mxu0
    %1499 = vdwg.mxu0
    %v1500 = vpack.c.bf16 %v1497, %v1494
    %v1505 = vunpack.c.l.b16 %v1104
    %v1506 = vunpack.c.l.b16 %v1105
    %v1507 = vunpack.c.l.b16 %v1106
    %v1508 = vunpack.c.l.b16 %v1107
    %v1509 = vpack.c.b16 %v1506, %v1505
    %v1510 = vpack.c.b16 %v1508, %v1507
    %v1514 = vsel %vm512, %v1500, 0
    %1516 = vmatprep.subr.bf16.mxu0 0
    %1517 = vmatpush1.bf16.msra.mxu0 %v1509
    %1518 = vmatprep.subr.bf16.mxu0 0
    %1519 = vmatpush1.bf16.msra.mxu0 %v1510
    %1520 = vmatprep.subr.bf16.mxu0 0
    %1521 = vmatpush1.bf16.msra.mxu0 0
    %1522 = vmatprep.subr.bf16.mxu0 0
    %1523 = vmatpush1.bf16.msra.mxu0 0
    %1524 = vmatprep.subr.bf16.mxu0 0
    %1525 = vmatpush1.bf16.msra.mxu0 0
    %1526 = vmatprep.subr.bf16.mxu0 0
    %1527 = vmatpush1.bf16.msra.mxu0 0
    %1528 = vmatprep.subr.bf16.mxu0 0
    %1529 = vmatpush1.bf16.msra.mxu0 0
    %1530 = vmatprep.subr.bf16.mxu0 0
    %1531 = vmatpush1.bf16.msra.mxu0 0
    %1532 = vmatprep.subr.bf16.mxu0 0
    %1533 = vmatpush1.bf16.msra.mxu0 0
    %1534 = vmatprep.subr.bf16.mxu0 0
    %1535 = vmatpush1.bf16.msra.mxu0 0
    %1536 = vmatprep.subr.bf16.mxu0 0
    %1537 = vmatpush1.bf16.msra.mxu0 0
    %1538 = vmatprep.subr.bf16.mxu0 0
    %1539 = vmatpush1.bf16.msra.mxu0 0
    %1540 = vmatprep.subr.bf16.mxu0 0
    %1541 = vmatpush1.bf16.msra.mxu0 0
    %1542 = vmatprep.subr.bf16.mxu0 0
    %1543 = vmatpush1.bf16.msra.mxu0 0
    %1544 = vmatprep.subr.bf16.mxu0 0
    %1545 = vmatpush1.bf16.msra.mxu0 0
    %1546 = vmatprep.subr.bf16.mxu0 0
    %1547 = vmatpush1.bf16.msra.mxu0 0
    %1548 = vmatprep.mubr.bf16.mxu0 0
    %1549 = vmatmul.mubr.bf16.gmra.mrb[0].mxu0 %v1514
    %v1550 = vpop.f32.mrb[0].mxu0
    %v1551 = vadd.f32 0.0, %v1550
    %v1552 = vpop.f32.mrb[0].mxu0
    %v1553 = vpop.f32.mrb[0].mxu0
    %v1554 = vadd.f32 0.0, %v1553
    %v1555 = vpop.f32.mrb[0].mxu0
    %1556 = vdwg.mxu0
    %v1557 = vadd.f32 %v1440, %v1551
    %v1558 = vadd.f32 %v1441, %v1554
    %v1559 = vpack.c.bf16 %v1088, %v1087
    %v1560 = vpack.c.bf16 %v505, %v500
    %v1562 = vrot.slane %v1559, 2
    %v1564 = vshrl.u32 %v1560, 16
    %v1566 = vshll.u32 %v1560, 16
    %v1568 = vrot.slane %v1566, 1
    %v1569 = vor.u32 %v1564, %v1568
    %v1571 = vsel %vm992, %v1562, 0
    %v1574 = vand.u32 %v1569, %v1114
    %1576 = vmatprep.subr.bf16.mxu0 0
    %1577 = vmatpush1.bf16.msra.mxu0 %v1574
    %1578 = vmatprep.subr.bf16.mxu0 0
    %1579 = vmatpush1.bf16.msra.mxu0 0
    %1580 = vmatprep.subr.bf16.mxu0 0
    %1581 = vmatpush1.bf16.msra.mxu0 0
    %1582 = vmatprep.subr.bf16.mxu0 0
    %1583 = vmatpush1.bf16.msra.mxu0 0
    %1584 = vmatprep.subr.bf16.mxu0 0
    %1585 = vmatpush1.bf16.msra.mxu0 0
    %1586 = vmatprep.subr.bf16.mxu0 0
    %1587 = vmatpush1.bf16.msra.mxu0 0
    %1588 = vmatprep.subr.bf16.mxu0 0
    %1589 = vmatpush1.bf16.msra.mxu0 0
    %1590 = vmatprep.subr.bf16.mxu0 0
    %1591 = vmatpush1.bf16.msra.mxu0 0
    %1592 = vmatprep.subr.bf16.mxu0 0
    %1593 = vmatpush1.bf16.msra.mxu0 0
    %1594 = vmatprep.subr.bf16.mxu0 0
    %1595 = vmatpush1.bf16.msra.mxu0 0
    %1596 = vmatprep.subr.bf16.mxu0 0
    %1597 = vmatpush1.bf16.msra.mxu0 0
    %1598 = vmatprep.subr.bf16.mxu0 0
    %1599 = vmatpush1.bf16.msra.mxu0 0
    %1600 = vmatprep.subr.bf16.mxu0 0
    %1601 = vmatpush1.bf16.msra.mxu0 0
    %1602 = vmatprep.subr.bf16.mxu0 0
    %1603 = vmatpush1.bf16.msra.mxu0 0
    %1604 = vmatprep.subr.bf16.mxu0 0
    %1605 = vmatpush1.bf16.msra.mxu0 0
    %1606 = vmatprep.subr.bf16.mxu0 0
    %1607 = vmatpush1.bf16.msra.mxu0 0
    %1608 = vmatprep.mubr.bf16.mxu0 0
    %1609 = vmatmul.mubr.bf16.gmra.mrb[0].mxu0 %v1571
    %v1610 = vpop.f32.mrb[0].mxu0
    %v1611 = vadd.f32 0.0, %v1610
    %v1612 = vpop.f32.mrb[0].mxu0
    %v1613 = vpop.f32.mrb[0].mxu0
    %v1614 = vadd.f32 0.0, %v1613
    %v1615 = vpop.f32.mrb[0].mxu0
    %1616 = vdwg.mxu0
    %v1617 = vpack.c.bf16 %v1614, %v1611
    %v1618 = vpack.c.bf16 %v1089, %v1088
    %v1620 = vshrl.u32 %v1618, 16
    %v1622 = vrot.slane %v1620, 2
    %v1623 = vshll.u32 %v1618, 16
    %v1625 = vrot.slane %v1623, 3
    %v1626 = vor.u32 %v1622, %v1625
    %1627 = vrot.lane.b32.xlu0 %v1569, 96
    %v1628 = vpop.permute.xlu0 %1627
    %v1630 = vsel %vm992, %v1626, 0
    %v1633 = vand.u32 %v1628, %v1114
    %1635 = vmatprep.subr.bf16.mxu0 0
    %1636 = vmatpush1.bf16.msra.mxu0 %v1633
    %1637 = vmatprep.subr.bf16.mxu0 0
    %1638 = vmatpush1.bf16.msra.mxu0 0
    %1639 = vmatprep.subr.bf16.mxu0 0
    %1640 = vmatpush1.bf16.msra.mxu0 0
    %1641 = vmatprep.subr.bf16.mxu0 0
    %1642 = vmatpush1.bf16.msra.mxu0 0
    %1643 = vmatprep.subr.bf16.mxu0 0
    %1644 = vmatpush1.bf16.msra.mxu0 0
    %1645 = vmatprep.subr.bf16.mxu0 0
    %1646 = vmatpush1.bf16.msra.mxu0 0
    %1647 = vmatprep.subr.bf16.mxu0 0
    %1648 = vmatpush1.bf16.msra.mxu0 0
    %1649 = vmatprep.subr.bf16.mxu0 0
    %1650 = vmatpush1.bf16.msra.mxu0 0
    %1651 = vmatprep.subr.bf16.mxu0 0
    %1652 = vmatpush1.bf16.msra.mxu0 0
    %1653 = vmatprep.subr.bf16.mxu0 0
    %1654 = vmatpush1.bf16.msra.mxu0 0
    %1655 = vmatprep.subr.bf16.mxu0 0
    %1656 = vmatpush1.bf16.msra.mxu0 0
    %1657 = vmatprep.subr.bf16.mxu0 0
    %1658 = vmatpush1.bf16.msra.mxu0 0
    %1659 = vmatprep.subr.bf16.mxu0 0
    %1660 = vmatpush1.bf16.msra.mxu0 0
    %1661 = vmatprep.subr.bf16.mxu0 0
    %1662 = vmatpush1.bf16.msra.mxu0 0
    %1663 = vmatprep.subr.bf16.mxu0 0
    %1664 = vmatpush1.bf16.msra.mxu0 0
    %1665 = vmatprep.subr.bf16.mxu0 0
    %1666 = vmatpush1.bf16.msra.mxu0 0
    %1667 = vmatprep.mubr.bf16.mxu0 0
    %1668 = vmatmul.mubr.bf16.gmra.mrb[0].mxu0 %v1630
    %v1669 = vpop.f32.mrb[0].mxu0
    %v1670 = vadd.f32 0.0, %v1669
    %v1671 = vpop.f32.mrb[0].mxu0
    %v1672 = vpop.f32.mrb[0].mxu0
    %v1673 = vadd.f32 0.0, %v1672
    %v1674 = vpop.f32.mrb[0].mxu0
    %1675 = vdwg.mxu0
    %v1676 = vpack.c.bf16 %v1673, %v1670
    %v1678 = vsel %vm512, %v1676, 0
    %1680 = vmatprep.subr.bf16.mxu0 0
    %1681 = vmatpush1.bf16.msra.mxu0 %v1227
    %1682 = vmatprep.subr.bf16.mxu0 0
    %1683 = vmatpush1.bf16.msra.mxu0 %v1228
    %1684 = vmatprep.subr.bf16.mxu0 0
    %1685 = vmatpush1.bf16.msra.mxu0 0
    %1686 = vmatprep.subr.bf16.mxu0 0
    %1687 = vmatpush1.bf16.msra.mxu0 0
    %1688 = vmatprep.subr.bf16.mxu0 0
    %1689 = vmatpush1.bf16.msra.mxu0 0
    %1690 = vmatprep.subr.bf16.mxu0 0
    %1691 = vmatpush1.bf16.msra.mxu0 0
    %1692 = vmatprep.subr.bf16.mxu0 0
    %1693 = vmatpush1.bf16.msra.mxu0 0
    %1694 = vmatprep.subr.bf16.mxu0 0
    %1695 = vmatpush1.bf16.msra.mxu0 0
    %1696 = vmatprep.subr.bf16.mxu0 0
    %1697 = vmatpush1.bf16.msra.mxu0 0
    %1698 = vmatprep.subr.bf16.mxu0 0
    %1699 = vmatpush1.bf16.msra.mxu0 0
    %1700 = vmatprep.subr.bf16.mxu0 0
    %1701 = vmatpush1.bf16.msra.mxu0 0
    %1702 = vmatprep.subr.bf16.mxu0 0
    %1703 = vmatpush1.bf16.msra.mxu0 0
    %1704 = vmatprep.subr.bf16.mxu0 0
    %1705 = vmatpush1.bf16.msra.mxu0 0
    %1706 = vmatprep.subr.bf16.mxu0 0
    %1707 = vmatpush1.bf16.msra.mxu0 0
    %1708 = vmatprep.subr.bf16.mxu0 0
    %1709 = vmatpush1.bf16.msra.mxu0 0
    %1710 = vmatprep.subr.bf16.mxu0 0
    %1711 = vmatpush1.bf16.msra.mxu0 0
    %1712 = vmatprep.mubr.bf16.mxu0 0
    %1713 = vmatmul.mubr.bf16.gmra.mrb[0].mxu0 %v1678
    %v1714 = vpop.f32.mrb[0].mxu0
    %v1715 = vadd.f32 0.0, %v1714
    %v1716 = vpop.f32.mrb[0].mxu0
    %v1717 = vpop.f32.mrb[0].mxu0
    %v1718 = vadd.f32 0.0, %v1717
    %v1719 = vpop.f32.mrb[0].mxu0
    %1720 = vdwg.mxu0
    %v1722 = vsel %vm512, %v1617, 0
    %1724 = vmatprep.subr.bf16.mxu0 0
    %1725 = vmatpush1.bf16.msra.mxu0 %v1283
    %1726 = vmatprep.subr.bf16.mxu0 0
    %1727 = vmatpush1.bf16.msra.mxu0 %v1284
    %1728 = vmatprep.subr.bf16.mxu0 0
    %1729 = vmatpush1.bf16.msra.mxu0 0
    %1730 = vmatprep.subr.bf16.mxu0 0
    %1731 = vmatpush1.bf16.msra.mxu0 0
    %1732 = vmatprep.subr.bf16.mxu0 0
    %1733 = vmatpush1.bf16.msra.mxu0 0
    %1734 = vmatprep.subr.bf16.mxu0 0
    %1735 = vmatpush1.bf16.msra.mxu0 0
    %1736 = vmatprep.subr.bf16.mxu0 0
    %1737 = vmatpush1.bf16.msra.mxu0 0
    %1738 = vmatprep.subr.bf16.mxu0 0
    %1739 = vmatpush1.bf16.msra.mxu0 0
    %1740 = vmatprep.subr.bf16.mxu0 0
    %1741 = vmatpush1.bf16.msra.mxu0 0
    %1742 = vmatprep.subr.bf16.mxu0 0
    %1743 = vmatpush1.bf16.msra.mxu0 0
    %1744 = vmatprep.subr.bf16.mxu0 0
    %1745 = vmatpush1.bf16.msra.mxu0 0
    %1746 = vmatprep.subr.bf16.mxu0 0
    %1747 = vmatpush1.bf16.msra.mxu0 0
    %1748 = vmatprep.subr.bf16.mxu0 0
    %1749 = vmatpush1.bf16.msra.mxu0 0
    %1750 = vmatprep.subr.bf16.mxu0 0
    %1751 = vmatpush1.bf16.msra.mxu0 0
    %1752 = vmatprep.subr.bf16.mxu0 0
    %1753 = vmatpush1.bf16.msra.mxu0 0
    %1754 = vmatprep.subr.bf16.mxu0 0
    %1755 = vmatpush1.bf16.msra.mxu0 0
    %1756 = vmatprep.mubr.bf16.mxu0 0
    %1757 = vmatmul.mubr.bf16.gmra.mrb[0].mxu0 %v1722
    %v1758 = vpop.f32.mrb[0].mxu0
    %v1759 = vadd.f32 %v1715, %v1758
    %v1760 = vpop.f32.mrb[0].mxu0
    %v1761 = vpop.f32.mrb[0].mxu0
    %v1762 = vadd.f32 %v1718, %v1761
    %v1763 = vpop.f32.mrb[0].mxu0
    %1764 = vdwg.mxu0
    %v1765 = vpack.c.bf16 %v1090, %v1089
    %v1767 = vrot.slane %v1765, 3
    %1768 = vrot.lane.b32.xlu0 %v1569, 64
    %v1769 = vpop.permute.xlu0 %1768
    %v1771 = vsel %vm992, %v1767, 0
    %v1774 = vand.u32 %v1769, %v1114
    %1776 = vmatprep.subr.bf16.mxu0 0
    %1777 = vmatpush1.bf16.msra.mxu0 %v1774
    %1778 = vmatprep.subr.bf16.mxu0 0
    %1779 = vmatpush1.bf16.msra.mxu0 0
    %1780 = vmatprep.subr.bf16.mxu0 0
    %1781 = vmatpush1.bf16.msra.mxu0 0
    %1782 = vmatprep.subr.bf16.mxu0 0
    %1783 = vmatpush1.bf16.msra.mxu0 0
    %1784 = vmatprep.subr.bf16.mxu0 0
    %1785 = vmatpush1.bf16.msra.mxu0 0
    %1786 = vmatprep.subr.bf16.mxu0 0
    %1787 = vmatpush1.bf16.msra.mxu0 0
    %1788 = vmatprep.subr.bf16.mxu0 0
    %1789 = vmatpush1.bf16.msra.mxu0 0
    %1790 = vmatprep.subr.bf16.mxu0 0
    %1791 = vmatpush1.bf16.msra.mxu0 0
    %1792 = vmatprep.subr.bf16.mxu0 0
    %1793 = vmatpush1.bf16.msra.mxu0 0
    %1794 = vmatprep.subr.bf16.mxu0 0
    %1795 = vmatpush1.bf16.msra.mxu0 0
    %1796 = vmatprep.subr.bf16.mxu0 0
    %1797 = vmatpush1.bf16.msra.mxu0 0
    %1798 = vmatprep.subr.bf16.mxu0 0
    %1799 = vmatpush1.bf16.msra.mxu0 0
    %1800 = vmatprep.subr.bf16.mxu0 0
    %1801 = vmatpush1.bf16.msra.mxu0 0
    %1802 = vmatprep.subr.bf16.mxu0 0
    %1803 = vmatpush1.bf16.msra.mxu0 0
    %1804 = vmatprep.subr.bf16.mxu0 0
    %1805 = vmatpush1.bf16.msra.mxu0 0
    %1806 = vmatprep.subr.bf16.mxu0 0
    %1807 = vmatpush1.bf16.msra.mxu0 0
    %1808 = vmatprep.mubr.bf16.mxu0 0
    %1809 = vmatmul.mubr.bf16.gmra.mrb[0].mxu0 %v1771
    %v1810 = vpop.f32.mrb[0].mxu0
    %v1811 = vadd.f32 0.0, %v1810
    %v1812 = vpop.f32.mrb[0].mxu0
    %v1813 = vpop.f32.mrb[0].mxu0
    %v1814 = vadd.f32 0.0, %v1813
    %v1815 = vpop.f32.mrb[0].mxu0
    %1816 = vdwg.mxu0
    %v1817 = vpack.c.bf16 %v1814, %v1811
    %v1819 = vsel %vm512, %v1817, 0
    %1821 = vmatprep.subr.bf16.mxu0 0
    %1822 = vmatpush1.bf16.msra.mxu0 %v1392
    %1823 = vmatprep.subr.bf16.mxu0 0
    %1824 = vmatpush1.bf16.msra.mxu0 %v1393
    %1825 = vmatprep.subr.bf16.mxu0 0
    %1826 = vmatpush1.bf16.msra.mxu0 0
    %1827 = vmatprep.subr.bf16.mxu0 0
    %1828 = vmatpush1.bf16.msra.mxu0 0
    %1829 = vmatprep.subr.bf16.mxu0 0
    %1830 = vmatpush1.bf16.msra.mxu0 0
    %1831 = vmatprep.subr.bf16.mxu0 0
    %1832 = vmatpush1.bf16.msra.mxu0 0
    %1833 = vmatprep.subr.bf16.mxu0 0
    %1834 = vmatpush1.bf16.msra.mxu0 0
    %1835 = vmatprep.subr.bf16.mxu0 0
    %1836 = vmatpush1.bf16.msra.mxu0 0
    %1837 = vmatprep.subr.bf16.mxu0 0
    %1838 = vmatpush1.bf16.msra.mxu0 0
    %1839 = vmatprep.subr.bf16.mxu0 0
    %1840 = vmatpush1.bf16.msra.mxu0 0
    %1841 = vmatprep.subr.bf16.mxu0 0
    %1842 = vmatpush1.bf16.msra.mxu0 0
    %1843 = vmatprep.subr.bf16.mxu0 0
    %1844 = vmatpush1.bf16.msra.mxu0 0
    %1845 = vmatprep.subr.bf16.mxu0 0
    %1846 = vmatpush1.bf16.msra.mxu0 0
    %1847 = vmatprep.subr.bf16.mxu0 0
    %1848 = vmatpush1.bf16.msra.mxu0 0
    %1849 = vmatprep.subr.bf16.mxu0 0
    %1850 = vmatpush1.bf16.msra.mxu0 0
    %1851 = vmatprep.subr.bf16.mxu0 0
    %1852 = vmatpush1.bf16.msra.mxu0 0
    %1853 = vmatprep.mubr.bf16.mxu0 0
    %1854 = vmatmul.mubr.bf16.gmra.mrb[0].mxu0 %v1819
    %v1855 = vpop.f32.mrb[0].mxu0
    %v1856 = vadd.f32 0.0, %v1855
    %v1857 = vpop.f32.mrb[0].mxu0
    %v1858 = vpop.f32.mrb[0].mxu0
    %v1859 = vadd.f32 0.0, %v1858
    %v1860 = vpop.f32.mrb[0].mxu0
    %1861 = vdwg.mxu0
    %v1862 = vadd.f32 %v1759, %v1856
    %v1863 = vadd.f32 %v1762, %v1859
    %v1864 = vpack.c.bf16 %v1091, %v1090
    %v1866 = vshrl.u32 %v1864, 16
    %v1868 = vrot.slane %v1866, 3
    %v1869 = vshll.u32 %v1864, 16
    %v1871 = vrot.slane %v1869, 4
    %v1872 = vor.u32 %v1868, %v1871
    %1873 = vrot.lane.b32.xlu0 %v1569, 32
    %v1874 = vpop.permute.xlu0 %1873
    %v1876 = vsel %vm992, %v1872, 0
    %v1879 = vand.u32 %v1874, %v1114
    %1881 = vmatprep.subr.bf16.mxu0 0
    %1882 = vmatpush1.bf16.msra.mxu0 %v1879
    %1883 = vmatprep.subr.bf16.mxu0 0
    %1884 = vmatpush1.bf16.msra.mxu0 0
    %1885 = vmatprep.subr.bf16.mxu0 0
    %1886 = vmatpush1.bf16.msra.mxu0 0
    %1887 = vmatprep.subr.bf16.mxu0 0
    %1888 = vmatpush1.bf16.msra.mxu0 0
    %1889 = vmatprep.subr.bf16.mxu0 0
    %1890 = vmatpush1.bf16.msra.mxu0 0
    %1891 = vmatprep.subr.bf16.mxu0 0
    %1892 = vmatpush1.bf16.msra.mxu0 0
    %1893 = vmatprep.subr.bf16.mxu0 0
    %1894 = vmatpush1.bf16.msra.mxu0 0
    %1895 = vmatprep.subr.bf16.mxu0 0
    %1896 = vmatpush1.bf16.msra.mxu0 0
    %1897 = vmatprep.subr.bf16.mxu0 0
    %1898 = vmatpush1.bf16.msra.mxu0 0
    %1899 = vmatprep.subr.bf16.mxu0 0
    %1900 = vmatpush1.bf16.msra.mxu0 0
    %1901 = vmatprep.subr.bf16.mxu0 0
    %1902 = vmatpush1.bf16.msra.mxu0 0
    %1903 = vmatprep.subr.bf16.mxu0 0
    %1904 = vmatpush1.bf16.msra.mxu0 0
    %1905 = vmatprep.subr.bf16.mxu0 0
    %1906 = vmatpush1.bf16.msra.mxu0 0
    %1907 = vmatprep.subr.bf16.mxu0 0
    %1908 = vmatpush1.bf16.msra.mxu0 0
    %1909 = vmatprep.subr.bf16.mxu0 0
    %1910 = vmatpush1.bf16.msra.mxu0 0
    %1911 = vmatprep.subr.bf16.mxu0 0
    %1912 = vmatpush1.bf16.msra.mxu0 0
    %1913 = vmatprep.mubr.bf16.mxu0 0
    %1914 = vmatmul.mubr.bf16.gmra.mrb[0].mxu0 %v1876
    %v1915 = vpop.f32.mrb[0].mxu0
    %v1916 = vadd.f32 0.0, %v1915
    %v1917 = vpop.f32.mrb[0].mxu0
    %v1918 = vpop.f32.mrb[0].mxu0
    %v1919 = vadd.f32 0.0, %v1918
    %v1920 = vpop.f32.mrb[0].mxu0
    %1921 = vdwg.mxu0
    %v1922 = vpack.c.bf16 %v1919, %v1916
    %v1924 = vsel %vm512, %v1922, 0
    %1926 = vmatprep.subr.bf16.mxu0 0
    %1927 = vmatpush1.bf16.msra.mxu0 %v1509
    %1928 = vmatprep.subr.bf16.mxu0 0
    %1929 = vmatpush1.bf16.msra.mxu0 %v1510
    %1930 = vmatprep.subr.bf16.mxu0 0
    %1931 = vmatpush1.bf16.msra.mxu0 0
    %1932 = vmatprep.subr.bf16.mxu0 0
    %1933 = vmatpush1.bf16.msra.mxu0 0
    %1934 = vmatprep.subr.bf16.mxu0 0
    %1935 = vmatpush1.bf16.msra.mxu0 0
    %1936 = vmatprep.subr.bf16.mxu0 0
    %1937 = vmatpush1.bf16.msra.mxu0 0
    %1938 = vmatprep.subr.bf16.mxu0 0
    %1939 = vmatpush1.bf16.msra.mxu0 0
    %1940 = vmatprep.subr.bf16.mxu0 0
    %1941 = vmatpush1.bf16.msra.mxu0 0
    %1942 = vmatprep.subr.bf16.mxu0 0
    %1943 = vmatpush1.bf16.msra.mxu0 0
    %1944 = vmatprep.subr.bf16.mxu0 0
    %1945 = vmatpush1.bf16.msra.mxu0 0
    %1946 = vmatprep.subr.bf16.mxu0 0
    %1947 = vmatpush1.bf16.msra.mxu0 0
    %1948 = vmatprep.subr.bf16.mxu0 0
    %1949 = vmatpush1.bf16.msra.mxu0 0
    %1950 = vmatprep.subr.bf16.mxu0 0
    %1951 = vmatpush1.bf16.msra.mxu0 0
    %1952 = vmatprep.subr.bf16.mxu0 0
    %1953 = vmatpush1.bf16.msra.mxu0 0
    %1954 = vmatprep.subr.bf16.mxu0 0
    %1955 = vmatpush1.bf16.msra.mxu0 0
    %1956 = vmatprep.subr.bf16.mxu0 0
    %1957 = vmatpush1.bf16.msra.mxu0 0
    %1958 = vmatprep.mubr.bf16.mxu0 0
    %1959 = vmatmul.mubr.bf16.gmra.mrb[0].mxu0 %v1924
    %v1960 = vpop.f32.mrb[0].mxu0
    %v1961 = vadd.f32 0.0, %v1960
    %v1962 = vpop.f32.mrb[0].mxu0
    %v1963 = vpop.f32.mrb[0].mxu0
    %v1964 = vadd.f32 0.0, %v1963
    %v1965 = vpop.f32.mrb[0].mxu0
    %1966 = vdwg.mxu0
    %v1967 = vadd.f32 %v1862, %v1961
    %v1968 = vadd.f32 %v1863, %v1964
    %v1971 = vrot.slane %v1967, 7
    %v1972 = vrot.slane %v1968, 7
    %v1973 = vsel %vm227, %v1971, %v1972
    %v1976 = vsel %vm227, %v1558, %v1971
    %v1977 = vld [vmem:[%s13] sm:$0x1]
    %v1979 = vlaneseq
    %v1980 = vshrl.u32 %v1979, 7
    %v1981 = vsub.s32 0, %v1980
    %v1982 = vrot.slane %v1977, %v1981
    %v1984 = vadd.f32 %v1557, %v1982
    %v1985 = vadd.f32 %v1976, %v1982
    %v1986 = vadd.f32 %v1973, %v1982
    %v1987 = vadd.f32 %v228, %v1984
    %v1988 = vadd.f32 %v231, %v1985
    %v1989 = vadd.f32 %v225, %v1986
    %v1990 = vld [vmem:[%s14] sm:$0x1]
    %v1991 = vld [vmem:[%s15] sm:$0x1]
    %1992 = vadd.xlane.f32.xlu0 %v1987
    %v1993 = vpop.xlane.xlu0 %1992
    %1994 = vadd.xlane.f32.xlu0 %v1988
    %v1995 = vpop.xlane.xlu0 %1994
    %v1996 = vsel %vm230, %v1989, 0.0
    %1997 = vadd.xlane.f32.xlu0 %v1996
    %v1998 = vpop.xlane.xlu0 %1997
    %v1999 = vrcp.pop 128.0
    %v2000 = vmul.f32 %v1993, %v1999
    %v2001 = vmul.f32 %v1995, %v1999
    %v2002 = vmul.f32 %v1998, %v1999
    %v2003 = vsub.f32 %v1987, %v2000
    %v2004 = vsub.f32 %v1988, %v2001
    %v2005 = vsub.f32 %v1989, %v2002
    %v2006 = vmul.f32 %v2003, %v2003
    %v2007 = vmul.f32 %v2004, %v2004
    %v2008 = vmul.f32 %v2005, %v2005
    %2009 = vadd.xlane.f32.xlu0 %v2006
    %v2010 = vpop.xlane.xlu0 %2009
    %2011 = vadd.xlane.f32.xlu0 %v2007
    %v2012 = vpop.xlane.xlu0 %2011
    %v2013 = vsel %vm230, %v2008, 0.0
    %2014 = vadd.xlane.f32.xlu0 %v2013
    %v2015 = vpop.xlane.xlu0 %2014
    %v2016 = vmul.f32 %v2010, %v1999
    %v2017 = vmul.f32 %v2012, %v1999
    %v2018 = vmul.f32 %v2015, %v1999
    %v2019 = vadd.f32 %v2016, 1e-05
    %v2020 = vadd.f32 %v2017, 1e-05
    %v2021 = vadd.f32 %v2018, 1e-05
    %v2022 = vrsqrt.pop %v2019
    %v2023 = vrsqrt.pop %v2020
    %v2024 = vrsqrt.pop %v2021
    %v2025 = vmul.f32 %v2003, %v2022
    %v2026 = vmul.f32 %v2004, %v2023
    %v2027 = vmul.f32 %v2005, %v2024
    %v2029 = vlaneseq
    %v2030 = vshrl.u32 %v2029, 7
    %v2031 = vsub.s32 0, %v2030
    %v2032 = vrot.slane %v1990, %v2031
    %v2034 = vmul.f32 %v2025, %v2032
    %v2035 = vmul.f32 %v2026, %v2032
    %v2036 = vmul.f32 %v2027, %v2032
    %v2038 = vlaneseq
    %v2039 = vshrl.u32 %v2038, 7
    %v2040 = vsub.s32 0, %v2039
    %v2041 = vrot.slane %v1991, %v2040
    %v2043 = vadd.f32 %v2034, %v2041
    %v2044 = vadd.f32 %v2035, %v2041
    %v2045 = vadd.f32 %v2036, %v2041
    %v2046 = vld [vmem:[#allocation15] sm:$0xff]
    %v2047 = vld [vmem:[#allocation15 + $0x8] sm:$0xff]
    %v2048 = vld [vmem:[#allocation15 + $0x10] sm:$0xff]
    %v2049 = vld [vmem:[#allocation15 + $0x18] sm:$0xff]
    %v2050 = vld [vmem:[#allocation15 + $0x20] sm:$0xff]
    %v2051 = vld [vmem:[#allocation15 + $0x28] sm:$0xff]
    %v2052 = vld [vmem:[#allocation15 + $0x30] sm:$0xff]
    %v2053 = vld [vmem:[#allocation15 + $0x38] sm:$0xff]
    %v2054 = vld [vmem:[#allocation15 + $0x40] sm:$0xff]
    %v2055 = vld [vmem:[#allocation15 + $0x48] sm:$0xff]
    %v2056 = vld [vmem:[#allocation15 + $0x50] sm:$0xff]
    %v2057 = vld [vmem:[#allocation15 + $0x58] sm:$0xff]
    %v2058 = vld [vmem:[#allocation15 + $0x60] sm:$0xff]
    %v2059 = vld [vmem:[#allocation15 + $0x68] sm:$0xff]
    %v2060 = vld [vmem:[#allocation15 + $0x70] sm:$0xff]
    %v2061 = vld [vmem:[#allocation15 + $0x78] sm:$0xff]
    %v2062 = vpack.c.bf16 %v2044, %v2043
    %v2063 = vpack.c.bf16 %v2045, %v2045
    %v2064 = vld [vmem:[%s17] sm:$0x3]
    %v2066 = vlaneseq
    %v2067 = vshrl.u32 %v2066, 7
    %v2068 = vsub.s32 0, %v2067
    %v2069 = vrot.slane %v2064, %v2068
    %v2070 = vlaneseq
    %v2071 = vshrl.u32 %v2070, 7
    %v2072 = vsub.s32 1, %v2071
    %v2073 = vrot.slane %v2064, %v2072
    %v2092 = vunpack.c.l.b16 %v2046
    %v2093 = vunpack.c.h.b16 %v2046
    %v2094 = vunpack.c.l.b16 %v2047
    %v2095 = vunpack.c.h.b16 %v2047
    %v2096 = vunpack.c.l.b16 %v2048
    %v2097 = vunpack.c.h.b16 %v2048
    %v2098 = vunpack.c.l.b16 %v2049
    %v2099 = vunpack.c.h.b16 %v2049
    %v2100 = vunpack.c.l.b16 %v2050
    %v2101 = vunpack.c.h.b16 %v2050
    %v2102 = vunpack.c.l.b16 %v2051
    %v2103 = vunpack.c.h.b16 %v2051
    %v2104 = vunpack.c.l.b16 %v2052
    %v2105 = vunpack.c.h.b16 %v2052
    %v2106 = vunpack.c.l.b16 %v2053
    %v2107 = vunpack.c.h.b16 %v2053
    %v2108 = vunpack.c.l.b16 %v2054
    %v2109 = vunpack.c.h.b16 %v2054
    %v2110 = vunpack.c.l.b16 %v2055
    %v2111 = vunpack.c.h.b16 %v2055
    %v2112 = vunpack.c.l.b16 %v2056
    %v2113 = vunpack.c.h.b16 %v2056
    %v2114 = vunpack.c.l.b16 %v2057
    %v2115 = vunpack.c.h.b16 %v2057
    %v2116 = vunpack.c.l.b16 %v2058
    %v2117 = vunpack.c.h.b16 %v2058
    %v2118 = vunpack.c.l.b16 %v2059
    %v2119 = vunpack.c.h.b16 %v2059
    %v2120 = vunpack.c.l.b16 %v2060
    %v2121 = vunpack.c.h.b16 %v2060
    %v2122 = vunpack.c.l.b16 %v2061
    %v2123 = vunpack.c.h.b16 %v2061
    %v2124 = vpack.c.b16 %v2094, %v2092
    %v2125 = vpack.c.b16 %v2095, %v2093
    %v2126 = vpack.c.b16 %v2098, %v2096
    %v2127 = vpack.c.b16 %v2099, %v2097
    %v2128 = vpack.c.b16 %v2102, %v2100
    %v2129 = vpack.c.b16 %v2103, %v2101
    %v2130 = vpack.c.b16 %v2106, %v2104
    %v2131 = vpack.c.b16 %v2107, %v2105
    %v2132 = vpack.c.b16 %v2110, %v2108
    %v2133 = vpack.c.b16 %v2111, %v2109
    %v2134 = vpack.c.b16 %v2114, %v2112
    %v2135 = vpack.c.b16 %v2115, %v2113
    %v2136 = vpack.c.b16 %v2118, %v2116
    %v2137 = vpack.c.b16 %v2119, %v2117
    %v2138 = vpack.c.b16 %v2122, %v2120
    %v2139 = vpack.c.b16 %v2123, %v2121
    %2156 = vmatprep.subr.bf16.mxu0 %v2125
    %2157 = vmatpush1.bf16.msra.mxu0 %v2124
    %2158 = vmatprep.subr.bf16.mxu0 %v2127
    %2159 = vmatpush1.bf16.msra.mxu0 %v2126
    %2160 = vmatprep.subr.bf16.mxu0 %v2129
    %2161 = vmatpush1.bf16.msra.mxu0 %v2128
    %2162 = vmatprep.subr.bf16.mxu0 %v2131
    %2163 = vmatpush1.bf16.msra.mxu0 %v2130
    %2164 = vmatprep.subr.bf16.mxu0 %v2133
    %2165 = vmatpush1.bf16.msra.mxu0 %v2132
    %2166 = vmatprep.subr.bf16.mxu0 %v2135
    %2167 = vmatpush1.bf16.msra.mxu0 %v2134
    %2168 = vmatprep.subr.bf16.mxu0 %v2137
    %2169 = vmatpush1.bf16.msra.mxu0 %v2136
    %2170 = vmatprep.subr.bf16.mxu0 %v2139
    %2171 = vmatpush1.bf16.msra.mxu0 %v2138
    %2172 = vmatprep.subr.bf16.mxu0 0
    %2173 = vmatpush1.bf16.msra.mxu0 0
    %2174 = vmatprep.subr.bf16.mxu0 0
    %2175 = vmatpush1.bf16.msra.mxu0 0
    %2176 = vmatprep.subr.bf16.mxu0 0
    %2177 = vmatpush1.bf16.msra.mxu0 0
    %2178 = vmatprep.subr.bf16.mxu0 0
    %2179 = vmatpush1.bf16.msra.mxu0 0
    %2180 = vmatprep.subr.bf16.mxu0 0
    %2181 = vmatpush1.bf16.msra.mxu0 0
    %2182 = vmatprep.subr.bf16.mxu0 0
    %2183 = vmatpush1.bf16.msra.mxu0 0
    %2184 = vmatprep.subr.bf16.mxu0 0
    %2185 = vmatpush1.bf16.msra.mxu0 0
    %2186 = vmatprep.subr.bf16.mxu0 0
    %2187 = vmatpush1.bf16.msra.mxu0 0
    %2188 = vmatprep.mubr.bf16.mxu0 0
    %2189 = vmatmul.mubr.bf16.gmra.mrb[0].mxu0 %v2062
    %v2190 = vpop.f32.mrb[0].mxu0
    %v2191 = vadd.f32 %v2069, %v2190
    %v2192 = vpop.f32.mrb[0].mxu0
    %v2193 = vadd.f32 %v2073, %v2192
    %v2194 = vpop.f32.mrb[0].mxu0
    %v2195 = vadd.f32 %v2069, %v2194
    %v2196 = vpop.f32.mrb[0].mxu0
    %v2197 = vadd.f32 %v2073, %v2196
    %2198 = vmatprep.mubr.bf16.mxu0 0
    %2199 = vmatmul.mubr.bf16.gmra.mrb[0].mxu0 %v2063
    %v2200 = vpop.f32.mrb[0].mxu0
    %v2201 = vadd.f32 %v2069, %v2200
    %v2202 = vpop.f32.mrb[0].mxu0
    %v2203 = vadd.f32 %v2073, %v2202
    %v2204 = vpop.f32.mrb[0].mxu0
    %v2205 = vpop.f32.mrb[0].mxu0
    %2206 = vdwg.mxu0
    %v2207 = vmul.f32 %v2191, 0.5
    %v2208 = vmul.f32 %v2193, 0.5
    %v2209 = vmul.f32 %v2195, 0.5
    %v2210 = vmul.f32 %v2197, 0.5
    %v2211 = vmul.f32 %v2201, 0.5
    %v2212 = vmul.f32 %v2203, 0.5
    %v2213 = vmul.f32 %v2191, 0.70710677
    %v2214 = vmul.f32 %v2193, 0.70710677
    %v2215 = vmul.f32 %v2195, 0.70710677
    %v2216 = vmul.f32 %v2197, 0.70710677
    %v2217 = vmul.f32 %v2201, 0.70710677
    %v2218 = vmul.f32 %v2203, 0.70710677
    %v2219 = verf.f32.pop %v2213
    %v2220 = verf.f32.pop %v2214
    %v2221 = verf.f32.pop %v2215
    %v2222 = verf.f32.pop %v2216
    %v2223 = verf.f32.pop %v2217
    %v2224 = verf.f32.pop %v2218
    %v2225 = vadd.f32 %v2219, 1.0
    %v2226 = vadd.f32 %v2220, 1.0
    %v2227 = vadd.f32 %v2221, 1.0
    %v2228 = vadd.f32 %v2222, 1.0
    %v2229 = vadd.f32 %v2223, 1.0
    %v2230 = vadd.f32 %v2224, 1.0
    %v2231 = vmul.f32 %v2207, %v2225
    %v2232 = vmul.f32 %v2208, %v2226
    %v2233 = vmul.f32 %v2209, %v2227
    %v2234 = vmul.f32 %v2210, %v2228
    %v2235 = vmul.f32 %v2211, %v2229
    %v2236 = vmul.f32 %v2212, %v2230
    %v2237 = vld [vmem:[#allocation17] sm:$0xf]
    %v2238 = vld [vmem:[#allocation17 + $0x4] sm:$0xf]
    %v2239 = vld [vmem:[#allocation17 + $0x8] sm:$0xf]
    %v2240 = vld [vmem:[#allocation17 + $0xc] sm:$0xf]
    %v2241 = vld [vmem:[#allocation17 + $0x10] sm:$0xf]
    %v2242 = vld [vmem:[#allocation17 + $0x14] sm:$0xf]
    %v2243 = vld [vmem:[#allocation17 + $0x18] sm:$0xf]
    %v2244 = vld [vmem:[#allocation17 + $0x1c] sm:$0xf]
    %v2245 = vld [vmem:[#allocation17 + $0x20] sm:$0xf]
    %v2246 = vld [vmem:[#allocation17 + $0x24] sm:$0xf]
    %v2247 = vld [vmem:[#allocation17 + $0x28] sm:$0xf]
    %v2248 = vld [vmem:[#allocation17 + $0x2c] sm:$0xf]
    %v2249 = vld [vmem:[#allocation17 + $0x30] sm:$0xf]
    %v2250 = vld [vmem:[#allocation17 + $0x34] sm:$0xf]
    %v2251 = vld [vmem:[#allocation17 + $0x38] sm:$0xf]
    %v2252 = vld [vmem:[#allocation17 + $0x3c] sm:$0xf]
    %v2253 = vld [vmem:[#allocation17 + $0x40] sm:$0xf]
    %v2254 = vld [vmem:[#allocation17 + $0x44] sm:$0xf]
    %v2255 = vld [vmem:[#allocation17 + $0x48] sm:$0xf]
    %v2256 = vld [vmem:[#allocation17 + $0x4c] sm:$0xf]
    %v2257 = vld [vmem:[#allocation17 + $0x50] sm:$0xf]
    %v2258 = vld [vmem:[#allocation17 + $0x54] sm:$0xf]
    %v2259 = vld [vmem:[#allocation17 + $0x58] sm:$0xf]
    %v2260 = vld [vmem:[#allocation17 + $0x5c] sm:$0xf]
    %v2261 = vld [vmem:[#allocation17 + $0x60] sm:$0xf]
    %v2262 = vld [vmem:[#allocation17 + $0x64] sm:$0xf]
    %v2263 = vld [vmem:[#allocation17 + $0x68] sm:$0xf]
    %v2264 = vld [vmem:[#allocation17 + $0x6c] sm:$0xf]
    %v2265 = vld [vmem:[#allocation17 + $0x70] sm:$0xf]
    %v2266 = vld [vmem:[#allocation17 + $0x74] sm:$0xf]
    %v2267 = vld [vmem:[#allocation17 + $0x78] sm:$0xf]
    %v2268 = vld [vmem:[#allocation17 + $0x7c] sm:$0xf]
    %v2269 = vpack.c.bf16 %v2233, %v2231
    %v2270 = vpack.c.bf16 %v2234, %v2232
    %v2271 = vpack.c.bf16 %v2235, %v2235
    %v2272 = vpack.c.bf16 %v2236, %v2236
    %v2273 = vld [vmem:[%s19] sm:$0x1]
    %v2275 = vlaneseq
    %v2276 = vshrl.u32 %v2275, 7
    %v2277 = vsub.s32 0, %v2276
    %v2278 = vrot.slane %v2273, %v2277
    %v2312 = vunpack.c.l.b16 %v2237
    %v2313 = vunpack.c.l.b16 %v2238
    %v2314 = vunpack.c.l.b16 %v2239
    %v2315 = vunpack.c.l.b16 %v2240
    %v2316 = vunpack.c.l.b16 %v2241
    %v2317 = vunpack.c.l.b16 %v2242
    %v2318 = vunpack.c.l.b16 %v2243
    %v2319 = vunpack.c.l.b16 %v2244
    %v2320 = vunpack.c.l.b16 %v2245
    %v2321 = vunpack.c.l.b16 %v2246
    %v2322 = vunpack.c.l.b16 %v2247
    %v2323 = vunpack.c.l.b16 %v2248
    %v2324 = vunpack.c.l.b16 %v2249
    %v2325 = vunpack.c.l.b16 %v2250
    %v2326 = vunpack.c.l.b16 %v2251
    %v2327 = vunpack.c.l.b16 %v2252
    %v2328 = vunpack.c.l.b16 %v2253
    %v2329 = vunpack.c.l.b16 %v2254
    %v2330 = vunpack.c.l.b16 %v2255
    %v2331 = vunpack.c.l.b16 %v2256
    %v2332 = vunpack.c.l.b16 %v2257
    %v2333 = vunpack.c.l.b16 %v2258
    %v2334 = vunpack.c.l.b16 %v2259
    %v2335 = vunpack.c.l.b16 %v2260
    %v2336 = vunpack.c.l.b16 %v2261
    %v2337 = vunpack.c.l.b16 %v2262
    %v2338 = vunpack.c.l.b16 %v2263
    %v2339 = vunpack.c.l.b16 %v2264
    %v2340 = vunpack.c.l.b16 %v2265
    %v2341 = vunpack.c.l.b16 %v2266
    %v2342 = vunpack.c.l.b16 %v2267
    %v2343 = vunpack.c.l.b16 %v2268
    %v2344 = vpack.c.b16 %v2313, %v2312
    %v2345 = vpack.c.b16 %v2315, %v2314
    %v2346 = vpack.c.b16 %v2317, %v2316
    %v2347 = vpack.c.b16 %v2319, %v2318
    %v2348 = vpack.c.b16 %v2321, %v2320
    %v2349 = vpack.c.b16 %v2323, %v2322
    %v2350 = vpack.c.b16 %v2325, %v2324
    %v2351 = vpack.c.b16 %v2327, %v2326
    %v2352 = vpack.c.b16 %v2329, %v2328
    %v2353 = vpack.c.b16 %v2331, %v2330
    %v2354 = vpack.c.b16 %v2333, %v2332
    %v2355 = vpack.c.b16 %v2335, %v2334
    %v2356 = vpack.c.b16 %v2337, %v2336
    %v2357 = vpack.c.b16 %v2339, %v2338
    %v2358 = vpack.c.b16 %v2341, %v2340
    %v2359 = vpack.c.b16 %v2343, %v2342
    %2376 = vmatprep.subr.bf16.mxu0 0
    %2377 = vmatpush1.bf16.msra.mxu0 %v2344
    %2378 = vmatprep.subr.bf16.mxu0 0
    %2379 = vmatpush1.bf16.msra.mxu0 %v2345
    %2380 = vmatprep.subr.bf16.mxu0 0
    %2381 = vmatpush1.bf16.msra.mxu0 %v2346
    %2382 = vmatprep.subr.bf16.mxu0 0
    %2383 = vmatpush1.bf16.msra.mxu0 %v2347
    %2384 = vmatprep.subr.bf16.mxu0 0
    %2385 = vmatpush1.bf16.msra.mxu0 %v2348
    %2386 = vmatprep.subr.bf16.mxu0 0
    %2387 = vmatpush1.bf16.msra.mxu0 %v2349
    %2388 = vmatprep.subr.bf16.mxu0 0
    %2389 = vmatpush1.bf16.msra.mxu0 %v2350
    %2390 = vmatprep.subr.bf16.mxu0 0
    %2391 = vmatpush1.bf16.msra.mxu0 %v2351
    %2392 = vmatprep.subr.bf16.mxu0 0
    %2393 = vmatpush1.bf16.msra.mxu0 %v2352
    %2394 = vmatprep.subr.bf16.mxu0 0
    %2395 = vmatpush1.bf16.msra.mxu0 %v2353
    %2396 = vmatprep.subr.bf16.mxu0 0
    %2397 = vmatpush1.bf16.msra.mxu0 %v2354
    %2398 = vmatprep.subr.bf16.mxu0 0
    %2399 = vmatpush1.bf16.msra.mxu0 %v2355
    %2400 = vmatprep.subr.bf16.mxu0 0
    %2401 = vmatpush1.bf16.msra.mxu0 %v2356
    %2402 = vmatprep.subr.bf16.mxu0 0
    %2403 = vmatpush1.bf16.msra.mxu0 %v2357
    %2404 = vmatprep.subr.bf16.mxu0 0
    %2405 = vmatpush1.bf16.msra.mxu0 %v2358
    %2406 = vmatprep.subr.bf16.mxu0 0
    %2407 = vmatpush1.bf16.msra.mxu0 %v2359
    %2408 = vmatprep.mubr.bf16.mxu0 %v2270
    %2409 = vmatmul.mubr.bf16.gmra.mrb[0].mxu0 %v2269
    %v2410 = vpop.f32.mrb[0].mxu0
    %v2411 = vadd.f32 %v2278, %v2410
    %v2412 = vpop.f32.mrb[0].mxu0
    %v2413 = vpop.f32.mrb[0].mxu0
    %v2414 = vadd.f32 %v2278, %v2413
    %v2415 = vpop.f32.mrb[0].mxu0
    %2416 = vmatprep.mubr.bf16.mxu0 %v2272
    %2417 = vmatmul.mubr.bf16.gmra.mrb[0].mxu0 %v2271
    %v2418 = vpop.f32.mrb[0].mxu0
    %v2419 = vpop.f32.mrb[0].mxu0
    %v2420 = vpop.f32.mrb[0].mxu0
    %v2421 = vpop.f32.mrb[0].mxu0
    %2422 = vdwg.mxu0
    %v2423 = vadd.f32 %v2043, %v2411
    %v2424 = vadd.f32 %v2044, %v2414
    %v2425 = vld [vmem:[%s20] sm:$0x1]
    %v2426 = vld [vmem:[%s21] sm:$0x1]
    %2427 = vadd.xlane.f32.xlu0 %v2423
    %v2428 = vpop.xlane.xlu0 %2427
    %2429 = vadd.xlane.f32.xlu0 %v2424
    %v2430 = vpop.xlane.xlu0 %2429
    %v2431 = vmul.f32 %v2428, %v1999
    %v2432 = vmul.f32 %v2430, %v1999
    %v2433 = vsub.f32 %v2423, %v2431
    %v2434 = vsub.f32 %v2424, %v2432
    %v2435 = vmul.f32 %v2433, %v2433
    %v2436 = vmul.f32 %v2434, %v2434
    %2437 = vadd.xlane.f32.xlu0 %v2435
    %v2438 = vpop.xlane.xlu0 %2437
    %2439 = vadd.xlane.f32.xlu0 %v2436
    %v2440 = vpop.xlane.xlu0 %2439
    %v2441 = vmul.f32 %v2438, %v1999
    %v2442 = vmul.f32 %v2440, %v1999
    %v2443 = vadd.f32 %v2441, 1e-05
    %v2444 = vadd.f32 %v2442, 1e-05
    %v2445 = vrsqrt.pop %v2443
    %v2446 = vrsqrt.pop %v2444
    %v2447 = vmul.f32 %v2433, %v2445
    %v2448 = vmul.f32 %v2434, %v2446
    %v2450 = vlaneseq
    %v2451 = vshrl.u32 %v2450, 7
    %v2452 = vsub.s32 0, %v2451
    %v2453 = vrot.slane %v2425, %v2452
    %v2455 = vmul.f32 %v2447, %v2453
    %v2456 = vmul.f32 %v2448, %v2453
    %v2458 = vlaneseq
    %v2459 = vshrl.u32 %v2458, 7
    %v2460 = vsub.s32 0, %v2459
    %v2461 = vrot.slane %v2426, %v2460
    %v2463 = vadd.f32 %v2455, %v2461
    %v2464 = vadd.f32 %v2456, %v2461
    %v2465 = vsel %vm227, %v2463, %v2464
    %v2466 = vld [vmem:[%s3] sm:$0xf]
    %v2467 = vld [vmem:[#allocation8] sm:$0xf]
    %v2468 = vld [vmem:[#allocation8 + $0x4] sm:$0xf]
    %v2469 = vld [vmem:[#allocation8 + $0x8] sm:$0xf]
    %v2470 = vld [vmem:[#allocation8 + $0xc] sm:$0xf]
    %v2471 = vld [vmem:[#allocation8 + $0x10] sm:$0xf]
    %v2472 = vld [vmem:[#allocation8 + $0x14] sm:$0xf]
    %v2473 = vld [vmem:[#allocation8 + $0x18] sm:$0xf]
    %v2474 = vld [vmem:[#allocation8 + $0x1c] sm:$0xf]
    %v2475 = vld [vmem:[#allocation8 + $0x20] sm:$0xf]
    %v2476 = vld [vmem:[#allocation8 + $0x24] sm:$0xf]
    %v2477 = vld [vmem:[#allocation8 + $0x28] sm:$0xf]
    %v2478 = vld [vmem:[#allocation8 + $0x2c] sm:$0xf]
    %v2479 = vld [vmem:[#allocation8 + $0x30] sm:$0xf]
    %v2480 = vld [vmem:[#allocation8 + $0x34] sm:$0xf]
    %v2481 = vld [vmem:[#allocation8 + $0x38] sm:$0xf]
    %v2482 = vld [vmem:[#allocation8 + $0x3c] sm:$0xf]
    %v2483 = vld [vmem:[#allocation8 + $0x40] sm:$0xf]
    %v2484 = vld [vmem:[#allocation8 + $0x44] sm:$0xf]
    %v2485 = vld [vmem:[#allocation8 + $0x48] sm:$0xf]
    %v2486 = vld [vmem:[#allocation8 + $0x4c] sm:$0xf]
    %v2487 = vld [vmem:[#allocation8 + $0x50] sm:$0xf]
    %v2488 = vld [vmem:[#allocation8 + $0x54] sm:$0xf]
    %v2489 = vld [vmem:[#allocation8 + $0x58] sm:$0xf]
    %v2490 = vld [vmem:[#allocation8 + $0x5c] sm:$0xf]
    %v2491 = vld [vmem:[#allocation8 + $0x60] sm:$0xf]
    %v2492 = vld [vmem:[#allocation8 + $0x64] sm:$0xf]
    %v2493 = vld [vmem:[#allocation8 + $0x68] sm:$0xf]
    %v2494 = vld [vmem:[#allocation8 + $0x6c] sm:$0xf]
    %v2495 = vld [vmem:[#allocation8 + $0x70] sm:$0xf]
    %v2496 = vld [vmem:[#allocation8 + $0x74] sm:$0xf]
    %v2497 = vld [vmem:[#allocation8 + $0x78] sm:$0xf]
    %v2498 = vld [vmem:[#allocation8 + $0x7c] sm:$0xf]
    %v2501 = vunpack.c.l.s4 1983009808
    %v2502 = vunpack.c.0.s8 %v2501
    %v2503 = vlaneseq
    %v2504 = vshrl.u32 %v2503, 7
    %v2505 = vsub.s32 %v2502, %v2504
    %v2506 = vrot.slane %v2466, %v2505
    %v2507 = vcombine.high %v2506, %v2506
    %v2510 = vpack.c.bf16 %v2506, %v2506
    %v2511 = vpack.c.bf16 %v2507, %v2507
    %v2512 = vld [vmem:[%s5] sm:$0x1]
    %v2514 = vlaneseq
    %v2515 = vshrl.u32 %v2514, 7
    %v2516 = vsub.s32 0, %v2515
    %v2517 = vrot.slane %v2512, %v2516
    %v2551 = vunpack.c.l.b16 %v2467
    %v2552 = vunpack.c.l.b16 %v2468
    %v2553 = vunpack.c.l.b16 %v2469
    %v2554 = vunpack.c.l.b16 %v2470
    %v2555 = vunpack.c.l.b16 %v2471
    %v2556 = vunpack.c.l.b16 %v2472
    %v2557 = vunpack.c.l.b16 %v2473
    %v2558 = vunpack.c.l.b16 %v2474
    %v2559 = vunpack.c.l.b16 %v2475
    %v2560 = vunpack.c.l.b16 %v2476
    %v2561 = vunpack.c.l.b16 %v2477
    %v2562 = vunpack.c.l.b16 %v2478
    %v2563 = vunpack.c.l.b16 %v2479
    %v2564 = vunpack.c.l.b16 %v2480
    %v2565 = vunpack.c.l.b16 %v2481
    %v2566 = vunpack.c.l.b16 %v2482
    %v2567 = vunpack.c.l.b16 %v2483
    %v2568 = vunpack.c.l.b16 %v2484
    %v2569 = vunpack.c.l.b16 %v2485
    %v2570 = vunpack.c.l.b16 %v2486
    %v2571 = vunpack.c.l.b16 %v2487
    %v2572 = vunpack.c.l.b16 %v2488
    %v2573 = vunpack.c.l.b16 %v2489
    %v2574 = vunpack.c.l.b16 %v2490
    %v2575 = vunpack.c.l.b16 %v2491
    %v2576 = vunpack.c.l.b16 %v2492
    %v2577 = vunpack.c.l.b16 %v2493
    %v2578 = vunpack.c.l.b16 %v2494
    %v2579 = vunpack.c.l.b16 %v2495
    %v2580 = vunpack.c.l.b16 %v2496
    %v2581 = vunpack.c.l.b16 %v2497
    %v2582 = vunpack.c.l.b16 %v2498
    %v2583 = vpack.c.b16 %v2552, %v2551
    %v2584 = vpack.c.b16 %v2554, %v2553
    %v2585 = vpack.c.b16 %v2556, %v2555
    %v2586 = vpack.c.b16 %v2558, %v2557
    %v2587 = vpack.c.b16 %v2560, %v2559
    %v2588 = vpack.c.b16 %v2562, %v2561
    %v2589 = vpack.c.b16 %v2564, %v2563
    %v2590 = vpack.c.b16 %v2566, %v2565
    %v2591 = vpack.c.b16 %v2568, %v2567
    %v2592 = vpack.c.b16 %v2570, %v2569
    %v2593 = vpack.c.b16 %v2572, %v2571
    %v2594 = vpack.c.b16 %v2574, %v2573
    %v2595 = vpack.c.b16 %v2576, %v2575
    %v2596 = vpack.c.b16 %v2578, %v2577
    %v2597 = vpack.c.b16 %v2580, %v2579
    %v2598 = vpack.c.b16 %v2582, %v2581
    %2615 = vmatprep.subr.bf16.mxu0 0
    %2616 = vmatpush1.bf16.msra.mxu0 %v2583
    %2617 = vmatprep.subr.bf16.mxu0 0
    %2618 = vmatpush1.bf16.msra.mxu0 %v2584
    %2619 = vmatprep.subr.bf16.mxu0 0
    %2620 = vmatpush1.bf16.msra.mxu0 %v2585
    %2621 = vmatprep.subr.bf16.mxu0 0
    %2622 = vmatpush1.bf16.msra.mxu0 %v2586
    %2623 = vmatprep.subr.bf16.mxu0 0
    %2624 = vmatpush1.bf16.msra.mxu0 %v2587
    %2625 = vmatprep.subr.bf16.mxu0 0
    %2626 = vmatpush1.bf16.msra.mxu0 %v2588
    %2627 = vmatprep.subr.bf16.mxu0 0
    %2628 = vmatpush1.bf16.msra.mxu0 %v2589
    %2629 = vmatprep.subr.bf16.mxu0 0
    %2630 = vmatpush1.bf16.msra.mxu0 %v2590
    %2631 = vmatprep.subr.bf16.mxu0 0
    %2632 = vmatpush1.bf16.msra.mxu0 %v2591
    %2633 = vmatprep.subr.bf16.mxu0 0
    %2634 = vmatpush1.bf16.msra.mxu0 %v2592
    %2635 = vmatprep.subr.bf16.mxu0 0
    %2636 = vmatpush1.bf16.msra.mxu0 %v2593
    %2637 = vmatprep.subr.bf16.mxu0 0
    %2638 = vmatpush1.bf16.msra.mxu0 %v2594
    %2639 = vmatprep.subr.bf16.mxu0 0
    %2640 = vmatpush1.bf16.msra.mxu0 %v2595
    %2641 = vmatprep.subr.bf16.mxu0 0
    %2642 = vmatpush1.bf16.msra.mxu0 %v2596
    %2643 = vmatprep.subr.bf16.mxu0 0
    %2644 = vmatpush1.bf16.msra.mxu0 %v2597
    %2645 = vmatprep.subr.bf16.mxu0 0
    %2646 = vmatpush1.bf16.msra.mxu0 %v2598
    %2647 = vmatprep.mubr.bf16.mxu0 %v2511
    %2648 = vmatmul.mubr.bf16.gmra.mrb[0].mxu0 %v2510
    %v2649 = vpop.f32.mrb[0].mxu0
    %v2650 = vadd.f32 %v2517, %v2649
    %v2651 = vpop.f32.mrb[0].mxu0
    %v2652 = vpop.f32.mrb[0].mxu0
    %v2653 = vpop.f32.mrb[0].mxu0
    %2654 = vdwg.mxu0
    %v2655 = vmul.f32 %v2650, 0.5
    %v2656 = vmul.f32 %v2650, 0.70710677
    %v2657 = verf.f32.pop %v2656
    %v2658 = vadd.f32 %v2657, 1.0
    %v2659 = vmul.f32 %v2655, %v2658
    %v2660 = vld [vmem:[#allocation9] sm:$0xf]
    %v2661 = vld [vmem:[#allocation9 + $0x4] sm:$0xf]
    %v2662 = vld [vmem:[#allocation9 + $0x8] sm:$0xf]
    %v2663 = vld [vmem:[#allocation9 + $0xc] sm:$0xf]
    %v2664 = vld [vmem:[#allocation9 + $0x10] sm:$0xf]
    %v2665 = vld [vmem:[#allocation9 + $0x14] sm:$0xf]
    %v2666 = vld [vmem:[#allocation9 + $0x18] sm:$0xf]
    %v2667 = vld [vmem:[#allocation9 + $0x1c] sm:$0xf]
    %v2668 = vld [vmem:[#allocation9 + $0x20] sm:$0xf]
    %v2669 = vld [vmem:[#allocation9 + $0x24] sm:$0xf]
    %v2670 = vld [vmem:[#allocation9 + $0x28] sm:$0xf]
    %v2671 = vld [vmem:[#allocation9 + $0x2c] sm:$0xf]
    %v2672 = vld [vmem:[#allocation9 + $0x30] sm:$0xf]
    %v2673 = vld [vmem:[#allocation9 + $0x34] sm:$0xf]
    %v2674 = vld [vmem:[#allocation9 + $0x38] sm:$0xf]
    %v2675 = vld [vmem:[#allocation9 + $0x3c] sm:$0xf]
    %v2676 = vpack.c.bf16 %v2659, %v2659
    %v2677 = vld [vmem:[%s7] sm:$0x1]
    %v2679 = vlaneseq
    %v2680 = vshrl.u32 %v2679, 7
    %v2681 = vsub.s32 0, %v2680
    %v2682 = vrot.slane %v2677, %v2681
    %v2700 = vunpack.c.l.b16 %v2660
    %v2701 = vunpack.c.l.b16 %v2661
    %v2702 = vunpack.c.l.b16 %v2662
    %v2703 = vunpack.c.l.b16 %v2663
    %v2704 = vunpack.c.l.b16 %v2664
    %v2705 = vunpack.c.l.b16 %v2665
    %v2706 = vunpack.c.l.b16 %v2666
    %v2707 = vunpack.c.l.b16 %v2667
    %v2708 = vunpack.c.l.b16 %v2668
    %v2709 = vunpack.c.l.b16 %v2669
    %v2710 = vunpack.c.l.b16 %v2670
    %v2711 = vunpack.c.l.b16 %v2671
    %v2712 = vunpack.c.l.b16 %v2672
    %v2713 = vunpack.c.l.b16 %v2673
    %v2714 = vunpack.c.l.b16 %v2674
    %v2715 = vunpack.c.l.b16 %v2675
    %v2716 = vpack.c.b16 %v2701, %v2700
    %v2717 = vpack.c.b16 %v2703, %v2702
    %v2718 = vpack.c.b16 %v2705, %v2704
    %v2719 = vpack.c.b16 %v2707, %v2706
    %v2720 = vpack.c.b16 %v2709, %v2708
    %v2721 = vpack.c.b16 %v2711, %v2710
    %v2722 = vpack.c.b16 %v2713, %v2712
    %v2723 = vpack.c.b16 %v2715, %v2714
    %2732 = vmatprep.subr.bf16.mxu0 0
    %2733 = vmatpush1.bf16.msra.mxu0 %v2716
    %2734 = vmatprep.subr.bf16.mxu0 0
    %2735 = vmatpush1.bf16.msra.mxu0 %v2717
    %2736 = vmatprep.subr.bf16.mxu0 0
    %2737 = vmatpush1.bf16.msra.mxu0 %v2718
    %2738 = vmatprep.subr.bf16.mxu0 0
    %2739 = vmatpush1.bf16.msra.mxu0 %v2719
    %2740 = vmatprep.subr.bf16.mxu0 0
    %2741 = vmatpush1.bf16.msra.mxu0 %v2720
    %2742 = vmatprep.subr.bf16.mxu0 0
    %2743 = vmatpush1.bf16.msra.mxu0 %v2721
    %2744 = vmatprep.subr.bf16.mxu0 0
    %2745 = vmatpush1.bf16.msra.mxu0 %v2722
    %2746 = vmatprep.subr.bf16.mxu0 0
    %2747 = vmatpush1.bf16.msra.mxu0 %v2723
    %2748 = vmatprep.subr.bf16.mxu0 0
    %2749 = vmatpush1.bf16.msra.mxu0 0
    %2750 = vmatprep.subr.bf16.mxu0 0
    %2751 = vmatpush1.bf16.msra.mxu0 0
    %2752 = vmatprep.subr.bf16.mxu0 0
    %2753 = vmatpush1.bf16.msra.mxu0 0
    %2754 = vmatprep.subr.bf16.mxu0 0
    %2755 = vmatpush1.bf16.msra.mxu0 0
    %2756 = vmatprep.subr.bf16.mxu0 0
    %2757 = vmatpush1.bf16.msra.mxu0 0
    %2758 = vmatprep.subr.bf16.mxu0 0
    %2759 = vmatpush1.bf16.msra.mxu0 0
    %2760 = vmatprep.subr.bf16.mxu0 0
    %2761 = vmatpush1.bf16.msra.mxu0 0
    %2762 = vmatprep.subr.bf16.mxu0 0
    %2763 = vmatpush1.bf16.msra.mxu0 0
    %2764 = vmatprep.mubr.bf16.mxu0 0
    %2765 = vmatmul.mubr.bf16.gmra.mrb[0].mxu0 %v2676
    %v2766 = vpop.f32.mrb[0].mxu0
    %v2767 = vadd.f32 %v2682, %v2766
    %v2768 = vpop.f32.mrb[0].mxu0
    %v2769 = vpop.f32.mrb[0].mxu0
    %v2770 = vpop.f32.mrb[0].mxu0
    %2771 = vdwg.mxu0
    %v2772 = vmul.f32 %v2767, 0.5
    %v2773 = vmul.f32 %v2767, 0.70710677
    %v2774 = verf.f32.pop %v2773
    %v2775 = vadd.f32 %v2774, 1.0
    %v2776 = vmul.f32 %v2772, %v2775
    %v2777 = vld [vmem:[#allocation11] sm:$0xf]
    %v2778 = vld [vmem:[#allocation11 + $0x4] sm:$0xf]
    %v2779 = vld [vmem:[#allocation11 + $0x8] sm:$0xf]
    %v2780 = vld [vmem:[#allocation11 + $0xc] sm:$0xf]
    %v2781 = vld [vmem:[#allocation11 + $0x10] sm:$0xf]
    %v2782 = vld [vmem:[#allocation11 + $0x14] sm:$0xf]
    %v2783 = vld [vmem:[#allocation11 + $0x18] sm:$0xf]
    %v2784 = vld [vmem:[#allocation11 + $0x1c] sm:$0xf]
    %v2785 = vld [vmem:[#allocation11 + $0x20] sm:$0xf]
    %v2786 = vld [vmem:[#allocation11 + $0x24] sm:$0xf]
    %v2787 = vld [vmem:[#allocation11 + $0x28] sm:$0xf]
    %v2788 = vld [vmem:[#allocation11 + $0x2c] sm:$0xf]
    %v2789 = vld [vmem:[#allocation11 + $0x30] sm:$0xf]
    %v2790 = vld [vmem:[#allocation11 + $0x34] sm:$0xf]
    %v2791 = vld [vmem:[#allocation11 + $0x38] sm:$0xf]
    %v2792 = vld [vmem:[#allocation11 + $0x3c] sm:$0xf]
    %v2793 = vpack.c.bf16 %v2776, %v2776
    %v2794 = vld [vmem:[%s9] sm:$0x1]
    %v2796 = vlaneseq
    %v2797 = vshrl.u32 %v2796, 7
    %v2798 = vsub.s32 0, %v2797
    %v2799 = vrot.slane %v2794, %v2798
    %v2817 = vunpack.c.l.b16 %v2777
    %v2818 = vunpack.c.l.b16 %v2778
    %v2819 = vunpack.c.l.b16 %v2779
    %v2820 = vunpack.c.l.b16 %v2780
    %v2821 = vunpack.c.l.b16 %v2781
    %v2822 = vunpack.c.l.b16 %v2782
    %v2823 = vunpack.c.l.b16 %v2783
    %v2824 = vunpack.c.l.b16 %v2784
    %v2825 = vunpack.c.l.b16 %v2785
    %v2826 = vunpack.c.l.b16 %v2786
    %v2827 = vunpack.c.l.b16 %v2787
    %v2828 = vunpack.c.l.b16 %v2788
    %v2829 = vunpack.c.l.b16 %v2789
    %v2830 = vunpack.c.l.b16 %v2790
    %v2831 = vunpack.c.l.b16 %v2791
    %v2832 = vunpack.c.l.b16 %v2792
    %v2833 = vpack.c.b16 %v2818, %v2817
    %v2834 = vpack.c.b16 %v2820, %v2819
    %v2835 = vpack.c.b16 %v2822, %v2821
    %v2836 = vpack.c.b16 %v2824, %v2823
    %v2837 = vpack.c.b16 %v2826, %v2825
    %v2838 = vpack.c.b16 %v2828, %v2827
    %v2839 = vpack.c.b16 %v2830, %v2829
    %v2840 = vpack.c.b16 %v2832, %v2831
    %2849 = vmatprep.subr.bf16.mxu0 0
    %2850 = vmatpush1.bf16.msra.mxu0 %v2833
    %2851 = vmatprep.subr.bf16.mxu0 0
    %2852 = vmatpush1.bf16.msra.mxu0 %v2834
    %2853 = vmatprep.subr.bf16.mxu0 0
    %2854 = vmatpush1.bf16.msra.mxu0 %v2835
    %2855 = vmatprep.subr.bf16.mxu0 0
    %2856 = vmatpush1.bf16.msra.mxu0 %v2836
    %2857 = vmatprep.subr.bf16.mxu0 0
    %2858 = vmatpush1.bf16.msra.mxu0 %v2837
    %2859 = vmatprep.subr.bf16.mxu0 0
    %2860 = vmatpush1.bf16.msra.mxu0 %v2838
    %2861 = vmatprep.subr.bf16.mxu0 0
    %2862 = vmatpush1.bf16.msra.mxu0 %v2839
    %2863 = vmatprep.subr.bf16.mxu0 0
    %2864 = vmatpush1.bf16.msra.mxu0 %v2840
    %2865 = vmatprep.subr.bf16.mxu0 0
    %2866 = vmatpush1.bf16.msra.mxu0 0
    %2867 = vmatprep.subr.bf16.mxu0 0
    %2868 = vmatpush1.bf16.msra.mxu0 0
    %2869 = vmatprep.subr.bf16.mxu0 0
    %2870 = vmatpush1.bf16.msra.mxu0 0
    %2871 = vmatprep.subr.bf16.mxu0 0
    %2872 = vmatpush1.bf16.msra.mxu0 0
    %2873 = vmatprep.subr.bf16.mxu0 0
    %2874 = vmatpush1.bf16.msra.mxu0 0
    %2875 = vmatprep.subr.bf16.mxu0 0
    %2876 = vmatpush1.bf16.msra.mxu0 0
    %2877 = vmatprep.subr.bf16.mxu0 0
    %2878 = vmatpush1.bf16.msra.mxu0 0
    %2879 = vmatprep.subr.bf16.mxu0 0
    %2880 = vmatpush1.bf16.msra.mxu0 0
    %2881 = vmatprep.mubr.bf16.mxu0 0
    %2882 = vmatmul.mubr.bf16.gmra.mrb[0].mxu0 %v2793
    %v2883 = vpop.f32.mrb[0].mxu0
    %v2884 = vadd.f32 %v2799, %v2883
    %v2885 = vpop.f32.mrb[0].mxu0
    %v2886 = vpop.f32.mrb[0].mxu0
    %v2887 = vpop.f32.mrb[0].mxu0
    %2888 = vdwg.mxu0
    %v2889 = vmul.f32 %v2884, 0.5
    %v2890 = vmul.f32 %v2884, 0.70710677
    %v2891 = verf.f32.pop %v2890
    %v2892 = vadd.f32 %v2891, 1.0
    %v2893 = vmul.f32 %v2889, %v2892
    %v2894 = vmul.f32 %v2465, %v2893
    %v2895 = vsel %vm230, %v2894, 0.0
    %2896 = vadd.xlane.f32.xlu0 %v2895
    %v2897 = vpop.xlane.xlu0 %2896
    %v2898 = vmul.f32 %v2465, %v2465
    %v2899 = vsel %vm230, %v2898, 0.0
    %2900 = vadd.xlane.f32.xlu0 %v2899
    %v2901 = vpop.xlane.xlu0 %2900
    %v2902 = vrsqrt.pop %v2901
    %v2903 = vmul.f32 %v2901, %v2902
    %vm2904 = vcmp.eq.f32.partialorder %v2901, inf
    %v2905 = vsel %vm2904, %v2901, %v2903
    %vm2906 = vcmp.eq.f32.partialorder %v2901, 0.0
    %v2907 = vand.u32 %v2901, 2147483648
    %v2908 = vsel %vm2906, %v2907, %v2905
    %v2909 = vmax.f32 %v2908, 1e-08
    %v2910 = vmul.f32 %v2893, %v2893
    %v2911 = vsel %vm230, %v2910, 0.0
    %2912 = vadd.xlane.f32.xlu0 %v2911
    %v2913 = vpop.xlane.xlu0 %2912
    %v2914 = vrsqrt.pop %v2913
    %v2915 = vmul.f32 %v2913, %v2914
    %vm2916 = vcmp.eq.f32.partialorder %v2913, inf
    %v2917 = vsel %vm2916, %v2913, %v2915
    %vm2918 = vcmp.eq.f32.partialorder %v2913, 0.0
    %v2919 = vand.u32 %v2913, 2147483648
    %v2920 = vsel %vm2918, %v2919, %v2917
    %v2921 = vmax.f32 %v2920, 1e-08
    %v2922 = vmul.f32 %v2909, %v2921
    %v2923 = vrcp.pop %v2922
    %v2924 = vmul.f32 %v2897, %v2923
    %v2925 = vsel %vm230, %v2924, 0.0
    %v2926 = vrot.slane %v2925, 4
    %v2927 = vadd.f32 %v2925, %v2926
    %v2928 = vrot.slane %v2927, 2
    %v2929 = vadd.f32 %v2927, %v2928
    %v2930 = vrot.slane %v2929, 1
    %v2931 = vadd.f32 %v2929, %v2930
    %v2932 = vrcp.pop 2.0
    %v2933 = vmul.f32 %v2931, %v2932
    %vm2934 = vcmask 0
    %2935 = vst.msk [vmem:[#allocation18] sm:$0x1] %vm2934, %v2933
    %v2936 = vld [vmem:[%s22] sm:$0xf]
    %v2937 = vld [vmem:[%s22 + $0x4] sm:$0xf]
    %v2938 = vld [vmem:[%s22 + $0x8] sm:$0xf]
    %v2939 = vld [vmem:[%s22 + $0xc] sm:$0xf]
    %v2940 = vld [vmem:[%s22 + $0x10] sm:$0xf]
    %v2941 = vld [vmem:[%s22 + $0x14] sm:$0xf]
    %v2942 = vld [vmem:[%s22 + $0x18] sm:$0xf]
    %v2943 = vld [vmem:[%s22 + $0x1c] sm:$0xf]
    %v2944 = vld [vmem:[%s22 + $0x20] sm:$0xf]
    %v2945 = vld [vmem:[%s22 + $0x24] sm:$0xf]
    %v2946 = vld [vmem:[%s22 + $0x28] sm:$0xf]
    %v2947 = vld [vmem:[%s22 + $0x2c] sm:$0xf]
    %v2948 = vld [vmem:[%s22 + $0x30] sm:$0xf]
    %v2949 = vld [vmem:[%s22 + $0x34] sm:$0xf]
    %v2950 = vld [vmem:[%s22 + $0x38] sm:$0xf]
    %v2951 = vld [vmem:[%s22 + $0x3c] sm:$0xf]
    %v2952 = vpack.c.bf16 %v2465, %v2465
    %v2953 = vld [vmem:[%s23] sm:$0x1]
    %v2955 = vlaneseq
    %v2956 = vshrl.u32 %v2955, 7
    %v2957 = vsub.s32 0, %v2956
    %v2958 = vrot.slane %v2953, %v2957
    %v2976 = vunpack.c.l.b16 %v2936
    %v2977 = vunpack.c.l.b16 %v2937
    %v2978 = vunpack.c.l.b16 %v2938
    %v2979 = vunpack.c.l.b16 %v2939
    %v2980 = vunpack.c.l.b16 %v2940
    %v2981 = vunpack.c.l.b16 %v2941
    %v2982 = vunpack.c.l.b16 %v2942
    %v2983 = vunpack.c.l.b16 %v2943
    %v2984 = vunpack.c.l.b16 %v2944
    %v2985 = vunpack.c.l.b16 %v2945
    %v2986 = vunpack.c.l.b16 %v2946
    %v2987 = vunpack.c.l.b16 %v2947
    %v2988 = vunpack.c.l.b16 %v2948
    %v2989 = vunpack.c.l.b16 %v2949
    %v2990 = vunpack.c.l.b16 %v2950
    %v2991 = vunpack.c.l.b16 %v2951
    %v2992 = vpack.c.b16 %v2977, %v2976
    %v2993 = vpack.c.b16 %v2979, %v2978
    %v2994 = vpack.c.b16 %v2981, %v2980
    %v2995 = vpack.c.b16 %v2983, %v2982
    %v2996 = vpack.c.b16 %v2985, %v2984
    %v2997 = vpack.c.b16 %v2987, %v2986
    %v2998 = vpack.c.b16 %v2989, %v2988
    %v2999 = vpack.c.b16 %v2991, %v2990
    %3008 = vmatprep.subr.bf16.mxu0 0
    %3009 = vmatpush1.bf16.msra.mxu0 %v2992
    %3010 = vmatprep.subr.bf16.mxu0 0
    %3011 = vmatpush1.bf16.msra.mxu0 %v2993
    %3012 = vmatprep.subr.bf16.mxu0 0
    %3013 = vmatpush1.bf16.msra.mxu0 %v2994
    %3014 = vmatprep.subr.bf16.mxu0 0
    %3015 = vmatpush1.bf16.msra.mxu0 %v2995
    %3016 = vmatprep.subr.bf16.mxu0 0
    %3017 = vmatpush1.bf16.msra.mxu0 %v2996
    %3018 = vmatprep.subr.bf16.mxu0 0
    %3019 = vmatpush1.bf16.msra.mxu0 %v2997
    %3020 = vmatprep.subr.bf16.mxu0 0
    %3021 = vmatpush1.bf16.msra.mxu0 %v2998
    %3022 = vmatprep.subr.bf16.mxu0 0
    %3023 = vmatpush1.bf16.msra.mxu0 %v2999
    %3024 = vmatprep.subr.bf16.mxu0 0
    %3025 = vmatpush1.bf16.msra.mxu0 0
    %3026 = vmatprep.subr.bf16.mxu0 0
    %3027 = vmatpush1.bf16.msra.mxu0 0
    %3028 = vmatprep.subr.bf16.mxu0 0
    %3029 = vmatpush1.bf16.msra.mxu0 0
    %3030 = vmatprep.subr.bf16.mxu0 0
    %3031 = vmatpush1.bf16.msra.mxu0 0
    %3032 = vmatprep.subr.bf16.mxu0 0
    %3033 = vmatpush1.bf16.msra.mxu0 0
    %3034 = vmatprep.subr.bf16.mxu0 0
    %3035 = vmatpush1.bf16.msra.mxu0 0
    %3036 = vmatprep.subr.bf16.mxu0 0
    %3037 = vmatpush1.bf16.msra.mxu0 0
    %3038 = vmatprep.subr.bf16.mxu0 0
    %3039 = vmatpush1.bf16.msra.mxu0 0
    %3040 = vmatprep.mubr.bf16.mxu0 0
    %3041 = vmatmul.mubr.bf16.gmra.mrb[0].mxu0 %v2952
    %v3042 = vpop.f32.mrb[0].mxu0
    %v3043 = vadd.f32 %v2958, %v3042
    %v3044 = vpop.f32.mrb[0].mxu0
    %v3045 = vpop.f32.mrb[0].mxu0
    %v3046 = vpop.f32.mrb[0].mxu0
    %3047 = vdwg.mxu0
    %v3048 = vmul.f32 %v3043, 0.999995
    %v3049 = vmul.f32 %v3048, 0.5
    %v3050 = vmul.f32 %v3048, 0.70710677
    %v3051 = verf.f32.pop %v3050
    %v3052 = vadd.f32 %v3051, 1.0
    %v3053 = vmul.f32 %v3049, %v3052
    %v3054 = vld [vmem:[%s24] sm:$0x1]
    %v3056 = vlaneseq
    %v3057 = vshrl.u32 %v3056, 7
    %v3058 = vsub.s32 0, %v3057
    %v3059 = vrot.slane %v3054, %v3058
    %v3061 = vmul.f32 %v3053, %v3059
    %v3062 = vsel %vm230, %v3061, 0.0
    %3063 = vadd.xlane.f32.xlu0 %v3062
    %v3064 = vpop.xlane.xlu0 %3063
    %v3065 = vld [vmem:[#allocation2] sm:$0x1]
    %v3067 = vlaneseq
    %v3068 = vshrl.u32 %v3067, 7
    %v3069 = vsub.s32 0, %v3068
    %v3070 = vrot.slane %v3065, %v3069
    %v3072 = vadd.f32 %v3064, %v3070
    %v3073 = vmul.f32 %v3072, 0.999995
    %v3074 = vxor.u32 %v3073, 2147483648
    %v3075 = vmul.f32 %v3074, 1.442695
    %v3076 = vpow.pop %v3075
    %v3077 = vadd.f32 %v3076, 1.0
    %v3078 = vrcp.pop %v3077
    %v3079 = vmul.f32 1.0, %v3078
    %vm3080 = vcmask 1024
    %3081 = vst.msk [vmem:[%s26] sm:$0x3] %vm3080, %v3079
    // Predicated region
    $region142: #{tpu_custom_call.1} parent=1 // pred_check
      _
    $region143: #{tpu_custom_call.1} parent=1 // pred_check_branch
      %3083 = sbr.rel (0) target = $region145
    $region144: #{tpu_custom_call.1} parent=1 // pred_region
      _
    $region145: #{tpu_custom_call.1} parent=1 // pred_fallthru
      _
    // Predicated region
    $region146: #{tpu_custom_call.1} parent=1 // pred_check
      _
    $region147: #{tpu_custom_call.1} parent=1 // pred_check_branch
      %3085 = sbr.rel (0) target = $region149
    $region148: #{tpu_custom_call.1} parent=1 // pred_region
      %s3087 = ssub.s32 16, 16
      %3088 = vsyncadd [#allocation5], %s3087
      %s3090 = sshll.u32 [#allocation18], 4
      %s3091 = int_to_ptr.vmem [resolvable:$true] %s3090
      %3093 = dma.vmem_to_hbm [thread:$0]  %s3091, 16, %s27, [#allocation5]
    $region149: #{tpu_custom_call.1} parent=1 // pred_fallthru
      _
    // Predicated region
    $region150: #{tpu_custom_call.1} parent=1 // pred_check
      _
    $region151: #{tpu_custom_call.1} parent=1 // pred_check_branch
      %3095 = sbr.rel (0) target = $region153
    $region152: #{tpu_custom_call.1} parent=1 // pred_region
      _
    $region153: #{tpu_custom_call.1} parent=1 // pred_fallthru
      _
    // Predicated region
    $region154: #{tpu_custom_call.1} parent=1 // pred_check
      _
    $region155: #{tpu_custom_call.1} parent=1 // pred_check_branch
      %3097 = sbr.rel (0) target = $region157
    $region156: #{tpu_custom_call.1} parent=1 // pred_region
      %3098 = dma.done [#allocation5], 16
    $region157: #{tpu_custom_call.1} parent=1 // pred_fallthru
      _
    %3099 = vsyncpa [#allocation4], 1
    %3100 = vsyncpa [#allocation7], 1
    %3101 = vsyncpa [#allocation10], 1
    %3102 = vsyncpa [#allocation13], 1
    %3103 = vsyncpa [#allocation16], 1
    %3104 = vsyncpa [#allocation5], 1

</llo_original>
